<compile_context>
chip_gen: v7x
topology: tpu7x:2x2x1
jax: 0.10.0
libtpu: 0.0.40
codegen_flags: <defaults>
</compile_context>

<pallas_src>
import functools

import jax
import jax.numpy as jnp
from jax.experimental import pallas as pl
from jax.experimental.pallas import tpu as pltpu

EPS = 1e-5
LANE = 128


# --------------------------- hardware-aware constants ---------------------------

def _tpu_vmem_capacity():
    try:
        info = pltpu.get_tpu_info()
        cap = int(getattr(info, "vmem_capacity_bytes", 0) or 0)
        if cap > 0:
            return cap
    except Exception:
        pass
    return 64 * 1024 * 1024  # conservative fallback (v7x-sized)


_VMEM_CAP = _tpu_vmem_capacity()
_VMEM_LIMIT = min(int(_VMEM_CAP * 0.75), 64 * 1024 * 1024)   # v7x: 48 MiB, v5e/v6e: 64 MiB
_VMEM_BUDGET = min(int(_VMEM_CAP * 0.40), 40 * 1024 * 1024)  # pipelined working-set target


# --------------------------- small helpers ---------------------------

def _round_up(x, m):
    return (x + m - 1) // m * m


def _pick_tile(dim, candidates):
    for c in candidates:
        if dim % c == 0:
            return c
    return candidates[-1]


def _pad_rows(x, mp):
    m = x.shape[0]
    return x if mp == m else jnp.pad(x, ((0, mp - m), (0, 0)))


def _choose_tm(M, cap, fits):
    """Pick a row tile: prefer one dividing M exactly (no row-pad copy)."""
    hi = max(8, min(cap, _round_up(M, 8)))
    hi -= hi % 8
    d = hi
    while d >= 8:
        if M % d == 0 and fits(d):
            return d, M
        d -= 8
    d = hi
    while d > 8 and not fits(d):
        d -= 8
    return d, _round_up(M, d)


# --------------------------- tiled matmul (conv-as-matmul) ---------------------------

def _make_matmul_kernel(has_res, has_stats):
    def kernel(*refs):
        a_ref, b_ref, bias_ref = refs[:3]
        pos = 3
        r_ref = None
        if has_res:
            r_ref = refs[pos]
            pos += 1
        o_ref = refs[pos]
        pos += 1
        if has_stats:
            sum_ref, sq_ref = refs[pos], refs[pos + 1]
            pos += 2
        acc_ref = refs[pos]

        k = pl.program_id(2)

        @pl.when(k == 0)
        def _():
            acc_ref[...] = jnp.zeros_like(acc_ref)

        acc_ref[...] += jnp.dot(a_ref[...], b_ref[...],
                                preferred_element_type=jnp.float32)

        @pl.when(k == pl.num_programs(2) - 1)
        def _():
            acc = acc_ref[...]
            if has_stats:
                # Per-channel partials of the PRE-bias conv output (padded LHS
                # rows are exact zeros, so they contribute nothing).  The
                # constant bias shift is folded into the mean analytically in
                # glue.  Each of the 8 sublane rows carries partial/8 so the
                # glue can reduce with a plain sum.
                s = jnp.sum(acc, axis=0, keepdims=True) * 0.125
                q = jnp.sum(acc * acc, axis=0, keepdims=True) * 0.125
                sum_ref[...] = jnp.broadcast_to(s, sum_ref.shape)
                sq_ref[...] = jnp.broadcast_to(q, sq_ref.shape)
            out = acc + bias_ref[...]
            if has_res:
                out = out + r_ref[...].astype(jnp.float32)
            o_ref[...] = out.astype(o_ref.dtype)

    return kernel


def matmul_bias(lhs, w, bias, *, residual=None, out_dtype=jnp.float32,
                with_stats=False):
    """(M,K) @ (K,N) + bias [+ residual], bf16 MXU inputs, f32 accumulation.

    K and N must be multiples of 128 (the caller pads K AFTER im2col).
    If with_stats, also returns per-column sum and sum-of-squares of the
    pre-bias product (f32), fused into the epilogue.
    """
    M, K = lhs.shape
    K2, Np = w.shape
    assert K == K2 and K % LANE == 0 and Np % LANE == 0
    has_res = residual is not None

    out_bytes = jnp.dtype(out_dtype).itemsize
    res_bytes = jnp.dtype(residual.dtype).itemsize if has_res else 0

    tn = _pick_tile(Np, (256, 128))
    tk = _pick_tile(K, (512, 384, 256, 128))

    def fits(tm):
        in_b = tm * tk * 2 + tk * tn * 2 + tn * 4
        if has_res:
            in_b += tm * tn * res_bytes
        out_b = tm * tn * out_bytes + (2 * 8 * tn * 4 if with_stats else 0)
        return 2 * (in_b + out_b) + tm * tn * 4 <= _VMEM_BUDGET

    tm, Mp = _choose_tm(M, 1024, fits)
    Gi = Mp // tm
    grid = (Gi, Np // tn, K // tk)

    operands = [_pad_rows(lhs, Mp).astype(jnp.bfloat16),
                w.astype(jnp.bfloat16),
                bias.reshape(1, Np).astype(jnp.float32)]
    in_specs = [pl.BlockSpec((tm, tk), lambda i, j, k: (i, k)),
                pl.BlockSpec((tk, tn), lambda i, j, k: (k, j)),
                pl.BlockSpec((1, tn), lambda i, j, k: (0, j))]
    if has_res:
        operands.append(_pad_rows(residual, Mp))
        in_specs.append(pl.BlockSpec((tm, tn), lambda i, j, k: (i, j)))

    if with_stats:
        out_shape = (jax.ShapeDtypeStruct((Mp, Np), out_dtype),
                     jax.ShapeDtypeStruct((Gi * 8, Np), jnp.float32),
                     jax.ShapeDtypeStruct((Gi * 8, Np), jnp.float32))
        out_specs = (pl.BlockSpec((tm, tn), lambda i, j, k: (i, j)),
                     pl.BlockSpec((8, tn), lambda i, j, k: (i, j)),
                     pl.BlockSpec((8, tn), lambda i, j, k: (i, j)))
    else:
        out_shape = jax.ShapeDtypeStruct((Mp, Np), out_dtype)
        out_specs = pl.BlockSpec((tm, tn), lambda i, j, k: (i, j))

    bytes_accessed = (Mp * K * 2 * (Np // tn)      # LHS re-read per j block
                      + K * Np * 2 * Gi            # RHS re-read per i block
                      + Mp * Np * out_bytes
                      + (Mp * Np * res_bytes if has_res else 0)
                      + (2 * Gi * 8 * Np * 4 if with_stats else 0))

    result = pl.pallas_call(
        _make_matmul_kernel(has_res, with_stats),
        out_shape=out_shape,
        grid=grid,
        in_specs=in_specs,
        out_specs=out_specs,
        scratch_shapes=[pltpu.VMEM((tm, tn), jnp.float32)],
        compiler_params=pltpu.CompilerParams(
            dimension_semantics=("parallel", "parallel", "arbitrary"),
            vmem_limit_bytes=_VMEM_LIMIT),
        cost_estimate=pl.CostEstimate(
            flops=2 * Mp * Np * K,
            transcendentals=0,
            bytes_accessed=int(bytes_accessed)),
    )(*operands)

    if with_stats:
        out, s_part, q_part = result
        out = out if Mp == M else out[:M]
        return out, s_part.sum(axis=0), q_part.sum(axis=0)
    return result if Mp == M else result[:M]


# --------------------------- BatchNorm (+ReLU) kernels ---------------------------

def _bn_stats_kernel(x_ref, sum_ref, sq_ref):
    # Accumulate per-channel sum / sum-of-squares across the inner grid axis.
    @pl.when(pl.program_id(1) == 0)
    def _():
        sum_ref[...] = jnp.zeros_like(sum_ref)
        sq_ref[...] = jnp.zeros_like(sq_ref)

    x = x_ref[...].astype(jnp.float32)
    s = jnp.sum(x, axis=0, keepdims=True) * 0.125
    q = jnp.sum(x * x, axis=0, keepdims=True) * 0.125
    sum_ref[...] += jnp.broadcast_to(s, sum_ref.shape)
    sq_ref[...] += jnp.broadcast_to(q, sq_ref.shape)


def bn_batch_stats(x2d):
    """Per-channel (sum, sum_sq) over rows of x2d, on the native channel width."""
    M, C = x2d.shape
    itemsize = jnp.dtype(x2d.dtype).itemsize

    def fits(tm):
        return 2 * tm * C * itemsize + 4 * 8 * C * 4 <= _VMEM_BUDGET

    # Prefer a clean 2-way split of the row blocks: the leading 'parallel'
    # axis shards the stats pass across both TensorCores on v7x (harmless on
    # single-core v5e/v6e).
    tm = None
    ncores = 1
    Mp = M
    hi = max(8, min(1024, _round_up(M, 8)))
    hi -= hi % 8
    d = hi
    while d >= 8:
        if M % (2 * d) == 0 and fits(d):
            tm, ncores, Mp = d, 2, M
            break
        d -= 8
    if tm is None:
        tm, Mp = _choose_tm(M, hi, fits)
    nb = Mp // (ncores * tm)
    xp = x2d if Mp == M else _pad_rows(x2d, Mp)   # zero rows add nothing

    s, q = pl.pallas_call(
        _bn_stats_kernel,
        out_shape=(jax.ShapeDtypeStruct((ncores * 8, C), jnp.float32),
                   jax.ShapeDtypeStruct((ncores * 8, C), jnp.float32)),
        grid=(ncores, nb),
        in_specs=[pl.BlockSpec((tm, C), lambda c, i: (c * nb + i, 0))],
        out_specs=(pl.BlockSpec((8, C), lambda c, i: (c, 0)),
                   pl.BlockSpec((8, C), lambda c, i: (c, 0))),
        compiler_params=pltpu.CompilerParams(
            dimension_semantics=("parallel", "arbitrary"),
            vmem_limit_bytes=_VMEM_LIMIT),
    )(xp)
    return s.sum(axis=0), q.sum(axis=0)


def _bn_apply_relu_kernel(x_ref, scale_ref, shift_ref, o_ref):
    # Single FMA + ReLU per element (scale/shift precomputed per channel).
    y = x_ref[...].astype(jnp.float32) * scale_ref[...] + shift_ref[...]
    o_ref[...] = jnp.maximum(y, 0.0).astype(o_ref.dtype)


def bn_apply_relu(x2d, scale, shift, out_dtype=jnp.bfloat16):
    M, C = x2d.shape
    in_b = jnp.dtype(x2d.dtype).itemsize
    out_b = jnp.dtype(out_dtype).itemsize

    def fits(tm):
        return 2 * (tm * C * (in_b + out_b) + 2 * C * 4) <= _VMEM_BUDGET

    tm, Mp = _choose_tm(M, 1024, fits)
    xp = x2d if Mp == M else _pad_rows(x2d, Mp)
    y = pl.pallas_call(
        _bn_apply_relu_kernel,
        out_shape=jax.ShapeDtypeStruct((Mp, C), out_dtype),
        grid=(Mp // tm,),
        in_specs=[pl.BlockSpec((tm, C), lambda i: (i, 0)),
                  pl.BlockSpec((1, C), lambda i: (0, 0)),
                  pl.BlockSpec((1, C), lambda i: (0, 0))],
        out_specs=pl.BlockSpec((tm, C), lambda i: (i, 0)),
        compiler_params=pltpu.CompilerParams(
            dimension_semantics=("parallel",),
            vmem_limit_bytes=_VMEM_LIMIT),
    )(xp, scale.reshape(1, C).astype(jnp.float32),
      shift.reshape(1, C).astype(jnp.float32))
    return y if Mp == M else y[:M]


def batchnorm_relu(x2d, gamma, beta, out_dtype=jnp.bfloat16):
    """Training-mode BatchNorm (biased var) + ReLU on the native channel width."""
    M, _ = x2d.shape
    s, q = bn_batch_stats(x2d)
    mean = s / M
    # TODO(synk): single-pass E[x^2]-mean^2 in f32 can cancel for very large M;
    # a Welford/two-pass variant would be more robust at production scale.
    var = jnp.maximum(q / M - mean * mean, 0.0)
    scale = gamma.astype(jnp.float32) * jax.lax.rsqrt(var + EPS)
    shift = beta.astype(jnp.float32) - mean * scale
    return bn_apply_relu(x2d, scale, shift, out_dtype)


# --------------------------- conv glue (im2col / strided slice) ---------------------------

def conv2d(x_nhwc, w_hwio, bias, stride, *, residual2d=None,
           out_dtype=jnp.bfloat16, with_stats=False):
    """kxk conv (padding=k//2) as a tiled matmul.

    Only the first Ci = w.shape[2] channels of x are used (extra padded
    channels are sliced off before im2col so K stays 9*Ci, padded to 128
    only afterwards).  Returns (out2d[(N*Ho*Wo, Cout_p)], stats|None, spatial).
    """
    KH, KW, Ci, Co = w_hwio.shape
    N, H, W, Cx = x_nhwc.shape
    x = x_nhwc[..., :Ci] if Cx != Ci else x_nhwc
    pad = KH // 2
    Ho = (H + 2 * pad - KH) // stride + 1
    Wo = (W + 2 * pad - KW) // stride + 1
    M_out = N * Ho * Wo

    if KH == 1 and KW == 1:
        # 1x1 conv: no im2col, just the strided activation as the matmul LHS.
        lhs = x[:, ::stride, ::stride, :].reshape(M_out, Ci)
    else:
        # TODO(synk): read the 9 shifted windows straight from HBM inside the
        # matmul kernel (element-offset index_maps / manual DMA) instead of
        # materializing bf16 patches with XLA glue.
        xp = jnp.pad(x, ((0, 0), (pad, pad), (pad, pad), (0, 0)))
        cols = [xp[:, dh:dh + (Ho - 1) * stride + 1:stride,
                    dw:dw + (Wo - 1) * stride + 1:stride, :]
                for dh in range(KH) for dw in range(KW)]
        lhs = jnp.stack(cols, axis=3).reshape(M_out, KH * KW * Ci)

    K = KH * KW * Ci
    Kp = _round_up(K, LANE)
    Cop = _round_up(Co, LANE)
    if Kp != K:
        lhs = jnp.pad(lhs, ((0, 0), (0, Kp - K)))
    lhs = lhs.astype(jnp.bfloat16)
    w2d = jnp.pad(w_hwio.reshape(K, Co).astype(jnp.float32),
                  ((0, Kp - K), (0, Cop - Co)))
    bias_p = jnp.pad(bias.astype(jnp.float32), (0, Cop - Co))

    if with_stats:
        out2d, ssum, ssq = matmul_bias(lhs, w2d, bias_p, residual=residual2d,
                                       out_dtype=out_dtype, with_stats=True)
        m = ssum / M_out
        mean = m + bias_p                 # bias only shifts the mean
        var = jnp.maximum(ssq / M_out - m * m, 0.0)
        return out2d, (mean, var), (N, Ho, Wo)

    out2d = matmul_bias(lhs, w2d, bias_p, residual=residual2d,
                        out_dtype=out_dtype, with_stats=False)
    return out2d, None, (N, Ho, Wo)


# --------------------------- WideBlock forward ---------------------------

def wide_block_forward(x_nhwc, params, *, stride, downsample):
    N, H, W, Cin = x_nhwc.shape
    Cout = params["conv1_w"].shape[-1]
    Cout_p = _round_up(Cout, LANE)
    if not downsample:
        assert stride == 1 and Cin == Cout, \
            "identity residual requires stride == 1 and Cin == Cout"

    x2d = x_nhwc.reshape(N * H * W, Cin).astype(jnp.float32)

    # block1: BN (training batch stats) + ReLU on the unpadded channel width.
    out1_2d = batchnorm_relu(x2d, params["bn1_g"], params["bn1_b"])   # bf16
    out1 = out1_2d.reshape(N, H, W, Cin)

    # residual branch (bf16 operand; cast to f32 inside the fused epilogue add)
    if downsample:
        res2d, _, _ = conv2d(out1, params["ds_w"], params["ds_b"], stride,
                             out_dtype=jnp.bfloat16)
    else:
        res2d = jnp.pad(x2d, ((0, 0), (0, Cout_p - Cout))).astype(jnp.bfloat16)

    # block2: conv3x3(stride) with fused bn2 stats -> BN apply + ReLU
    #         -> conv3x3(1) with fused residual add.
    h2d, (mean2, var2), (N_, Ho, Wo) = conv2d(
        out1, params["conv1_w"], params["conv1_b"], stride,
        out_dtype=jnp.bfloat16, with_stats=True)

    gamma2 = jnp.pad(params["bn2_g"].astype(jnp.float32), (0, Cout_p - Cout))
    beta2 = jnp.pad(params["bn2_b"].astype(jnp.float32), (0, Cout_p - Cout))
    scale2 = gamma2 * jax.lax.rsqrt(var2 + EPS)
    shift2 = beta2 - mean2 * scale2
    h2d = bn_apply_relu(h2d, scale2, shift2, out_dtype=jnp.bfloat16)
    h = h2d.reshape(N_, Ho, Wo, Cout_p)

    out2d, _, _ = conv2d(h, params["conv2_w"], params["conv2_b"], 1,
                         residual2d=res2d, out_dtype=jnp.float32)
    return out2d.reshape(N_, Ho, Wo, Cout_p)[..., :Cout]


# --------------------------- pure-JAX reference (f32, for verification) ---------------------------

def _ref_forward(x, p, stride, downsample):
    def bnr(x, g, b):
        m = x.mean(axis=(0, 1, 2), keepdims=True)
        v = jnp.square(x - m).mean(axis=(0, 1, 2), keepdims=True)
        return jnp.maximum((x - m) / jnp.sqrt(v + EPS) * g.reshape(1, 1, 1, -1)
                           + b.reshape(1, 1, 1, -1), 0.0)

    def conv(x, w, b, s):
        pad = w.shape[0] // 2
        y = jax.lax.conv_general_dilated(
            x, w, window_strides=(s, s), padding=((pad, pad), (pad, pad)),
            dimension_numbers=("NHWC", "HWIO", "NHWC"))
        return y + b.reshape(1, 1, 1, -1)

    out1 = bnr(x, p["bn1_g"], p["bn1_b"])
    res = conv(out1, p["ds_w"], p["ds_b"], stride) if downsample else x
    h = conv(out1, p["conv1_w"], p["conv1_b"], stride)
    h = bnr(h, p["bn2_g"], p["bn2_b"])
    return conv(h, p["conv2_w"], p["conv2_b"], 1) + res


# --------------------------- main ---------------------------

if __name__ == "__main__":
    def make_params(key, Cin, Cout):
        ks = jax.random.split(key, 10)
        return dict(
            bn1_g=1.0 + 0.1 * jax.random.normal(ks[0], (Cin,), jnp.float32),
            bn1_b=0.1 * jax.random.normal(ks[1], (Cin,), jnp.float32),
            conv1_w=0.1 * jax.random.normal(ks[2], (3, 3, Cin, Cout), jnp.float32),
            conv1_b=0.1 * jax.random.normal(ks[3], (Cout,), jnp.float32),
            bn2_g=1.0 + 0.1 * jax.random.normal(ks[4], (Cout,), jnp.float32),
            bn2_b=0.1 * jax.random.normal(ks[5], (Cout,), jnp.float32),
            conv2_w=0.1 * jax.random.normal(ks[6], (3, 3, Cout, Cout), jnp.float32),
            conv2_b=0.1 * jax.random.normal(ks[7], (Cout,), jnp.float32),
            ds_w=0.1 * jax.random.normal(ks[8], (1, 1, Cin, Cout), jnp.float32),
            ds_b=jnp.zeros((Cout,), jnp.float32),
        )

    key = jax.random.PRNGKey(0)
    k_x, k_p1, k_p2 = jax.random.split(key, 3)

    # Case 1: downsample branch (1x1 strided conv residual).
    N, Cin, Cout, H, W = 2, 4, 8, 16, 16
    stride, downsample = 2, True
    params = make_params(k_p1, Cin, Cout)
    x_nchw = jax.random.normal(k_x, (N, Cin, H, W), jnp.float32)  # PyTorch layout
    x_nhwc = jnp.transpose(x_nchw, (0, 2, 3, 1))

    fwd = jax.jit(functools.partial(wide_block_forward, stride=stride,
                                    downsample=downsample))
    out = fwd(x_nhwc, params)
    jax.block_until_ready(out)
    ref = _ref_forward(x_nhwc, params, stride, downsample)
    assert out.shape == (N, H // stride, W // stride, Cout), out.shape
    err = float(jnp.max(jnp.abs(out - ref)))
    assert err < 8e-2, err   # bf16 MXU / bf16 intermediates vs f32 reference

    # Case 2: identity residual (stride=1, Cin == Cout).
    C2 = 8
    params2 = make_params(k_p2, C2, C2)
    x2_nchw = jax.random.normal(k_x, (N, C2, H, W), jnp.float32)
    x2_nhwc = jnp.transpose(x2_nchw, (0, 2, 3, 1))
    fwd2 = jax.jit(functools.partial(wide_block_forward, stride=1,
                                     downsample=False))
    out2 = fwd2(x2_nhwc, params2)
    jax.block_until_ready(out2)
    ref2 = _ref_forward(x2_nhwc, params2, 1, False)
    assert out2.shape == (N, H, W, C2), out2.shape
    err2 = float(jnp.max(jnp.abs(out2 - ref2)))
    assert err2 < 8e-2, err2

    print("KERNEL_OK")
</pallas_src>

<mosaic_0001>
module attributes {stable_mosaic.version = 11 : i64} {
  func.func @_bn_stats_kernel(%arg0: i32, %arg1: i32, %arg2: memref<256x4xf32, #tpu.memory_space<vmem>>, %arg3: memref<8x4xf32, #tpu.memory_space<vmem>>, %arg4: memref<8x4xf32, #tpu.memory_space<vmem>>) attributes {dimension_semantics = [#tpu.dimension_semantics<parallel>, #tpu.dimension_semantics<arbitrary>], iteration_bounds = array<i64: 2, 1>, scalar_prefetch = 0 : i64, scratch_operands = 0 : i64, tpu.core_type = #tpu.core_type<tc>, window_params = [{transform_indices = @transform_0, window_bounds = array<i64: 256, 4>}, {transform_indices = @transform_1, window_bounds = array<i64: 8, 4>}, {transform_indices = @transform_2, window_bounds = array<i64: 8, 4>}]} {
    %c0_i32 = arith.constant 0 : i32
    %0 = arith.cmpi eq, %arg1, %c0_i32 : i32
    %1 = arith.extui %0 : i1 to i32
    %c0_i32_0 = arith.constant 0 : i32
    %2 = arith.cmpi ne, %1, %c0_i32_0 : i32
    scf.if %2 {
      %cst_13 = arith.constant 0.000000e+00 : f32
      %23 = vector.broadcast %cst_13 : f32 to vector<8x4xf32>
      %c0_14 = arith.constant 0 : index
      %c0_15 = arith.constant 0 : index
      %24 = vector.load %arg3[%c0_14, %c0_15] : memref<8x4xf32, #tpu.memory_space<vmem>>, vector<8x4xf32>
      tpu.vector_store %arg3[%c0_14, %c0_15], %23 {strides = array<i32>} : memref<8x4xf32, #tpu.memory_space<vmem>>, vector<8x4xf32>,
      %cst_16 = arith.constant 0.000000e+00 : f32
      %25 = vector.broadcast %cst_16 : f32 to vector<8x4xf32>
      %c0_17 = arith.constant 0 : index
      %c0_18 = arith.constant 0 : index
      %26 = vector.load %arg4[%c0_17, %c0_18] : memref<8x4xf32, #tpu.memory_space<vmem>>, vector<8x4xf32>
      tpu.vector_store %arg4[%c0_17, %c0_18], %25 {strides = array<i32>} : memref<8x4xf32, #tpu.memory_space<vmem>>, vector<8x4xf32>,
    } else {
    }
    %c0 = arith.constant 0 : index
    %c0_1 = arith.constant 0 : index
    %3 = vector.load %arg2[%c0, %c0_1] : memref<256x4xf32, #tpu.memory_space<vmem>>, vector<256x4xf32>
    %cst = arith.constant dense<0.000000e+00> : vector<4xf32>
    %4 = vector.multi_reduction <add>, %3, %cst [0] : vector<256x4xf32> to vector<4xf32>
    %5 = vector.shape_cast %4 : vector<4xf32> to vector<1x4xf32>
    %cst_2 = arith.constant 1.250000e-01 : f32
    %6 = vector.broadcast %cst_2 : f32 to vector<1x4xf32>
    %7 = arith.mulf %5, %6 : vector<1x4xf32>
    %8 = arith.mulf %3, %3 : vector<256x4xf32>
    %cst_3 = arith.constant dense<0.000000e+00> : vector<4xf32>
    %9 = vector.multi_reduction <add>, %8, %cst_3 [0] : vector<256x4xf32> to vector<4xf32>
    %10 = vector.shape_cast %9 : vector<4xf32> to vector<1x4xf32>
    %cst_4 = arith.constant 1.250000e-01 : f32
    %11 = vector.broadcast %cst_4 : f32 to vector<1x4xf32>
    %12 = arith.mulf %10, %11 : vector<1x4xf32>
    %c0_5 = arith.constant 0 : index
    %c0_6 = arith.constant 0 : index
    %13 = vector.load %arg3[%c0_5, %c0_6] : memref<8x4xf32, #tpu.memory_space<vmem>>, vector<8x4xf32>
    %14 = vector.shape_cast %7 : vector<1x4xf32> to vector<1x4xf32>
    %15 = vector.broadcast %14 : vector<1x4xf32> to vector<8x4xf32>
    %16 = arith.addf %13, %15 : vector<8x4xf32>
    %c0_7 = arith.constant 0 : index
    %c0_8 = arith.constant 0 : index
    %17 = vector.load %arg3[%c0_7, %c0_8] : memref<8x4xf32, #tpu.memory_space<vmem>>, vector<8x4xf32>
    tpu.vector_store %arg3[%c0_7, %c0_8], %16 {strides = array<i32>} : memref<8x4xf32, #tpu.memory_space<vmem>>, vector<8x4xf32>,
    %c0_9 = arith.constant 0 : index
    %c0_10 = arith.constant 0 : index
    %18 = vector.load %arg4[%c0_9, %c0_10] : memref<8x4xf32, #tpu.memory_space<vmem>>, vector<8x4xf32>
    %19 = vector.shape_cast %12 : vector<1x4xf32> to vector<1x4xf32>
    %20 = vector.broadcast %19 : vector<1x4xf32> to vector<8x4xf32>
    %21 = arith.addf %18, %20 : vector<8x4xf32>
    %c0_11 = arith.constant 0 : index
    %c0_12 = arith.constant 0 : index
    %22 = vector.load %arg4[%c0_11, %c0_12] : memref<8x4xf32, #tpu.memory_space<vmem>>, vector<8x4xf32>
    tpu.vector_store %arg4[%c0_11, %c0_12], %21 {strides = array<i32>} : memref<8x4xf32, #tpu.memory_space<vmem>>, vector<8x4xf32>,
    return
  }
  func.func @transform_0(%arg0: i32, %arg1: i32) -> (i32, i32) {
    %c1_i32 = arith.constant 1 : i32
    %0 = arith.muli %arg0, %c1_i32 : i32
    %1 = arith.addi %0, %arg1 : i32
    %c0_i32 = arith.constant 0 : i32
    %c0_i32_0 = arith.constant 0 : i32
    return %1, %c0_i32 : i32, i32
  }
  func.func @transform_1(%arg0: i32, %arg1: i32) -> (i32, i32) {
    %c0_i32 = arith.constant 0 : i32
    %c0_i32_0 = arith.constant 0 : i32
    return %arg0, %c0_i32 : i32, i32
  }
  func.func @transform_2(%arg0: i32, %arg1: i32) -> (i32, i32) {
    %c0_i32 = arith.constant 0 : i32
    %c0_i32_0 = arith.constant 0 : i32
    return %arg0, %c0_i32 : i32, i32
  }
}

module attributes {stable_mosaic.version = 11 : i64} {
  func.func @_bn_apply_relu_kernel(%arg0: i32, %arg1: memref<512x4xf32, #tpu.memory_space<vmem>>, %arg2: memref<1x4xf32, #tpu.memory_space<vmem>>, %arg3: memref<1x4xf32, #tpu.memory_space<vmem>>, %arg4: memref<512x4xbf16, #tpu.memory_space<vmem>>) attributes {dimension_semantics = [#tpu.dimension_semantics<parallel>], iteration_bounds = array<i64: 1>, scalar_prefetch = 0 : i64, scratch_operands = 0 : i64, tpu.core_type = #tpu.core_type<tc>, window_params = [{transform_indices = @transform_0, window_bounds = array<i64: 512, 4>}, {pipeline_mode = #tpu.pipeline_mode<synchronous>, transform_indices = @transform_1, window_bounds = array<i64: 1, 4>}, {pipeline_mode = #tpu.pipeline_mode<synchronous>, transform_indices = @transform_2, window_bounds = array<i64: 1, 4>}, {transform_indices = @transform_3, window_bounds = array<i64: 512, 4>}]} {
    %c0 = arith.constant 0 : index
    %c0_0 = arith.constant 0 : index
    %0 = vector.load %arg1[%c0, %c0_0] : memref<512x4xf32, #tpu.memory_space<vmem>>, vector<512x4xf32>
    %c0_1 = arith.constant 0 : index
    %c0_2 = arith.constant 0 : index
    %1 = vector.load %arg2[%c0_1, %c0_2] : memref<1x4xf32, #tpu.memory_space<vmem>>, vector<1x4xf32>
    %2 = vector.broadcast %1 : vector<1x4xf32> to vector<512x4xf32>
    %3 = arith.mulf %0, %2 : vector<512x4xf32>
    %c0_3 = arith.constant 0 : index
    %c0_4 = arith.constant 0 : index
    %4 = vector.load %arg3[%c0_3, %c0_4] : memref<1x4xf32, #tpu.memory_space<vmem>>, vector<1x4xf32>
    %5 = vector.broadcast %4 : vector<1x4xf32> to vector<512x4xf32>
    %6 = arith.addf %3, %5 : vector<512x4xf32>
    %cst = arith.constant 0.000000e+00 : f32
    %7 = vector.broadcast %cst : f32 to vector<512x4xf32>
    %8 = arith.maximumf %6, %7 : vector<512x4xf32>
    %9 = arith.truncf %8 : vector<512x4xf32> to vector<512x4xbf16>
    %c0_5 = arith.constant 0 : index
    %c0_6 = arith.constant 0 : index
    %10 = vector.load %arg4[%c0_5, %c0_6] : memref<512x4xbf16, #tpu.memory_space<vmem>>, vector<512x4xbf16>
    tpu.vector_store %arg4[%c0_5, %c0_6], %9 {strides = array<i32>} : memref<512x4xbf16, #tpu.memory_space<vmem>>, vector<512x4xbf16>,
    return
  }
  func.func @transform_0(%arg0: i32) -> (i32, i32) {
    %c0_i32 = arith.constant 0 : i32
    %c0_i32_0 = arith.constant 0 : i32
    return %arg0, %c0_i32 : i32, i32
  }
  func.func @transform_1(%arg0: i32) -> (i32, i32) {
    %c0_i32 = arith.constant 0 : i32
    %c0_i32_0 = arith.constant 0 : i32
    %c0_i32_1 = arith.constant 0 : i32
    return %c0_i32, %c0_i32_0 : i32, i32
  }
  func.func @transform_2(%arg0: i32) -> (i32, i32) {
    %c0_i32 = arith.constant 0 : i32
    %c0_i32_0 = arith.constant 0 : i32
    %c0_i32_1 = arith.constant 0 : i32
    return %c0_i32, %c0_i32_0 : i32, i32
  }
  func.func @transform_3(%arg0: i32) -> (i32, i32) {
    %c0_i32 = arith.constant 0 : i32
    %c0_i32_0 = arith.constant 0 : i32
    return %arg0, %c0_i32 : i32, i32
  }
}

module attributes {stable_mosaic.version = 11 : i64} {
  func.func @kernel(%arg0: i32, %arg1: i32, %arg2: i32, %arg3: memref<128x128xbf16, #tpu.memory_space<vmem>>, %arg4: memref<128x128xbf16, #tpu.memory_space<vmem>>, %arg5: memref<1x128xf32, #tpu.memory_space<vmem>>, %arg6: memref<128x128xbf16, #tpu.memory_space<vmem>>, %arg7: memref<128x128xf32, #tpu.memory_space<vmem>>) attributes {dimension_semantics = [#tpu.dimension_semantics<parallel>, #tpu.dimension_semantics<parallel>, #tpu.dimension_semantics<arbitrary>], iteration_bounds = array<i64: 1, 1, 1>, scalar_prefetch = 0 : i64, scratch_operands = 1 : i64, tpu.core_type = #tpu.core_type<tc>, window_params = [{transform_indices = @transform_0, window_bounds = array<i64: 128, 128>}, {transform_indices = @transform_1, window_bounds = array<i64: 128, 128>}, {transform_indices = @transform_2, window_bounds = array<i64: 1, 128>}, {transform_indices = @transform_3, window_bounds = array<i64: 128, 128>}]} {
    %c0_i32 = arith.constant 0 : i32
    %0 = arith.cmpi eq, %arg2, %c0_i32 : i32
    %1 = arith.extui %0 : i1 to i32
    %c0_i32_0 = arith.constant 0 : i32
    %2 = arith.cmpi ne, %1, %c0_i32_0 : i32
    scf.if %2 {
      %cst_10 = arith.constant 0.000000e+00 : f32
      %12 = vector.broadcast %cst_10 : f32 to vector<128x128xf32>
      %c0_11 = arith.constant 0 : index
      %c0_12 = arith.constant 0 : index
      %13 = vector.load %arg7[%c0_11, %c0_12] : memref<128x128xf32, #tpu.memory_space<vmem>>, vector<128x128xf32>
      tpu.vector_store %arg7[%c0_11, %c0_12], %12 {strides = array<i32>} : memref<128x128xf32, #tpu.memory_space<vmem>>, vector<128x128xf32>,
    } else {
    }
    %c0 = arith.constant 0 : index
    %c0_1 = arith.constant 0 : index
    %3 = vector.load %arg7[%c0, %c0_1] : memref<128x128xf32, #tpu.memory_space<vmem>>, vector<128x128xf32>
    %c0_2 = arith.constant 0 : index
    %c0_3 = arith.constant 0 : index
    %4 = vector.load %arg3[%c0_2, %c0_3] : memref<128x128xbf16, #tpu.memory_space<vmem>>, vector<128x128xbf16>
    %c0_4 = arith.constant 0 : index
    %c0_5 = arith.constant 0 : index
    %5 = vector.load %arg4[%c0_4, %c0_5] : memref<128x128xbf16, #tpu.memory_space<vmem>>, vector<128x128xbf16>
    %cst = arith.constant dense<0.000000e+00> : vector<128x128xf32>
    %6 = tpu.matmul %4, %5, %cst {dimension_numbers = #tpu.dot_dimension_numbers<[1], [0], [0], [1], [0, 0, 1, 1], [], []>} : vector<128x128xbf16>, vector<128x128xbf16>, vector<128x128xf32> -> vector<128x128xf32>
    %7 = arith.addf %3, %6 : vector<128x128xf32>
    %c0_6 = arith.constant 0 : index
    %c0_7 = arith.constant 0 : index
    %8 = vector.load %arg7[%c0_6, %c0_7] : memref<128x128xf32, #tpu.memory_space<vmem>>, vector<128x128xf32>
    tpu.vector_store %arg7[%c0_6, %c0_7], %7 {strides = array<i32>} : memref<128x128xf32, #tpu.memory_space<vmem>>, vector<128x128xf32>,
    %c0_i32_8 = arith.constant 0 : i32
    %9 = arith.cmpi eq, %arg2, %c0_i32_8 : i32
    %10 = arith.extui %9 : i1 to i32
    %c0_i32_9 = arith.constant 0 : i32
    %11 = arith.cmpi ne, %10, %c0_i32_9 : i32
    scf.if %11 {
      %c0_10 = arith.constant 0 : index
      %c0_11 = arith.constant 0 : index
      %12 = vector.load %arg7[%c0_10, %c0_11] : memref<128x128xf32, #tpu.memory_space<vmem>>, vector<128x128xf32>
      %c0_12 = arith.constant 0 : index
      %c0_13 = arith.constant 0 : index
      %13 = vector.load %arg5[%c0_12, %c0_13] : memref<1x128xf32, #tpu.memory_space<vmem>>, vector<1x128xf32>
      %14 = vector.broadcast %13 : vector<1x128xf32> to vector<128x128xf32>
      %15 = arith.addf %12, %14 : vector<128x128xf32>
      %16 = arith.truncf %15 : vector<128x128xf32> to vector<128x128xbf16>
      %c0_14 = arith.constant 0 : index
      %c0_15 = arith.constant 0 : index
      %17 = vector.load %arg6[%c0_14, %c0_15] : memref<128x128xbf16, #tpu.memory_space<vmem>>, vector<128x128xbf16>
      tpu.vector_store %arg6[%c0_14, %c0_15], %16 {strides = array<i32>} : memref<128x128xbf16, #tpu.memory_space<vmem>>, vector<128x128xbf16>,
    } else {
    }
    return
  }
  func.func @transform_0(%arg0: i32, %arg1: i32, %arg2: i32) -> (i32, i32) {
    %c0_i32 = arith.constant 0 : i32
    return %arg0, %arg2 : i32, i32
  }
  func.func @transform_1(%arg0: i32, %arg1: i32, %arg2: i32) -> (i32, i32) {
    %c0_i32 = arith.constant 0 : i32
    return %arg2, %arg1 : i32, i32
  }
  func.func @transform_2(%arg0: i32, %arg1: i32, %arg2: i32) -> (i32, i32) {
    %c0_i32 = arith.constant 0 : i32
    %c0_i32_0 = arith.constant 0 : i32
    return %c0_i32, %arg1 : i32, i32
  }
  func.func @transform_3(%arg0: i32, %arg1: i32, %arg2: i32) -> (i32, i32) {
    %c0_i32 = arith.constant 0 : i32
    return %arg0, %arg1 : i32, i32
  }
}

module attributes {stable_mosaic.version = 11 : i64} {
  func.func @kernel(%arg0: i32, %arg1: i32, %arg2: i32, %arg3: memref<128x128xbf16, #tpu.memory_space<vmem>>, %arg4: memref<128x128xbf16, #tpu.memory_space<vmem>>, %arg5: memref<1x128xf32, #tpu.memory_space<vmem>>, %arg6: memref<128x128xbf16, #tpu.memory_space<vmem>>, %arg7: memref<8x128xf32, #tpu.memory_space<vmem>>, %arg8: memref<8x128xf32, #tpu.memory_space<vmem>>, %arg9: memref<128x128xf32, #tpu.memory_space<vmem>>) attributes {dimension_semantics = [#tpu.dimension_semantics<parallel>, #tpu.dimension_semantics<parallel>, #tpu.dimension_semantics<arbitrary>], iteration_bounds = array<i64: 1, 1, 1>, scalar_prefetch = 0 : i64, scratch_operands = 1 : i64, tpu.core_type = #tpu.core_type<tc>, window_params = [{transform_indices = @transform_0, window_bounds = array<i64: 128, 128>}, {transform_indices = @transform_1, window_bounds = array<i64: 128, 128>}, {transform_indices = @transform_2, window_bounds = array<i64: 1, 128>}, {transform_indices = @transform_3, window_bounds = array<i64: 128, 128>}, {transform_indices = @transform_4, window_bounds = array<i64: 8, 128>}, {transform_indices = @transform_5, window_bounds = array<i64: 8, 128>}]} {
    %c0_i32 = arith.constant 0 : i32
    %0 = arith.cmpi eq, %arg2, %c0_i32 : i32
    %1 = arith.extui %0 : i1 to i32
    %c0_i32_0 = arith.constant 0 : i32
    %2 = arith.cmpi ne, %1, %c0_i32_0 : i32
    scf.if %2 {
      %cst_10 = arith.constant 0.000000e+00 : f32
      %12 = vector.broadcast %cst_10 : f32 to vector<128x128xf32>
      %c0_11 = arith.constant 0 : index
      %c0_12 = arith.constant 0 : index
      %13 = vector.load %arg9[%c0_11, %c0_12] : memref<128x128xf32, #tpu.memory_space<vmem>>, vector<128x128xf32>
      tpu.vector_store %arg9[%c0_11, %c0_12], %12 {strides = array<i32>} : memref<128x128xf32, #tpu.memory_space<vmem>>, vector<128x128xf32>,
    } else {
    }
    %c0 = arith.constant 0 : index
    %c0_1 = arith.constant 0 : index
    %3 = vector.load %arg9[%c0, %c0_1] : memref<128x128xf32, #tpu.memory_space<vmem>>, vector<128x128xf32>
    %c0_2 = arith.constant 0 : index
    %c0_3 = arith.constant 0 : index
    %4 = vector.load %arg3[%c0_2, %c0_3] : memref<128x128xbf16, #tpu.memory_space<vmem>>, vector<128x128xbf16>
    %c0_4 = arith.constant 0 : index
    %c0_5 = arith.constant 0 : index
    %5 = vector.load %arg4[%c0_4, %c0_5] : memref<128x128xbf16, #tpu.memory_space<vmem>>, vector<128x128xbf16>
    %cst = arith.constant dense<0.000000e+00> : vector<128x128xf32>
    %6 = tpu.matmul %4, %5, %cst {dimension_numbers = #tpu.dot_dimension_numbers<[1], [0], [0], [1], [0, 0, 1, 1], [], []>} : vector<128x128xbf16>, vector<128x128xbf16>, vector<128x128xf32> -> vector<128x128xf32>
    %7 = arith.addf %3, %6 : vector<128x128xf32>
    %c0_6 = arith.constant 0 : index
    %c0_7 = arith.constant 0 : index
    %8 = vector.load %arg9[%c0_6, %c0_7] : memref<128x128xf32, #tpu.memory_space<vmem>>, vector<128x128xf32>
    tpu.vector_store %arg9[%c0_6, %c0_7], %7 {strides = array<i32>} : memref<128x128xf32, #tpu.memory_space<vmem>>, vector<128x128xf32>,
    %c0_i32_8 = arith.constant 0 : i32
    %9 = arith.cmpi eq, %arg2, %c0_i32_8 : i32
    %10 = arith.extui %9 : i1 to i32
    %c0_i32_9 = arith.constant 0 : i32
    %11 = arith.cmpi ne, %10, %c0_i32_9 : i32
    scf.if %11 {
      %c0_10 = arith.constant 0 : index
      %c0_11 = arith.constant 0 : index
      %12 = vector.load %arg9[%c0_10, %c0_11] : memref<128x128xf32, #tpu.memory_space<vmem>>, vector<128x128xf32>
      %cst_12 = arith.constant dense<0.000000e+00> : vector<128xf32>
      %13 = vector.multi_reduction <add>, %12, %cst_12 [0] : vector<128x128xf32> to vector<128xf32>
      %14 = vector.shape_cast %13 : vector<128xf32> to vector<1x128xf32>
      %cst_13 = arith.constant 1.250000e-01 : f32
      %15 = vector.broadcast %cst_13 : f32 to vector<1x128xf32>
      %16 = arith.mulf %14, %15 : vector<1x128xf32>
      %17 = arith.mulf %12, %12 : vector<128x128xf32>
      %cst_14 = arith.constant dense<0.000000e+00> : vector<128xf32>
      %18 = vector.multi_reduction <add>, %17, %cst_14 [0] : vector<128x128xf32> to vector<128xf32>
      %19 = vector.shape_cast %18 : vector<128xf32> to vector<1x128xf32>
      %cst_15 = arith.constant 1.250000e-01 : f32
      %20 = vector.broadcast %cst_15 : f32 to vector<1x128xf32>
      %21 = arith.mulf %19, %20 : vector<1x128xf32>
      %22 = vector.shape_cast %16 : vector<1x128xf32> to vector<1x128xf32>
      %23 = vector.broadcast %22 : vector<1x128xf32> to vector<8x128xf32>
      %c0_16 = arith.constant 0 : index
      %c0_17 = arith.constant 0 : index
      %24 = vector.load %arg7[%c0_16, %c0_17] : memref<8x128xf32, #tpu.memory_space<vmem>>, vector<8x128xf32>
      tpu.vector_store %arg7[%c0_16, %c0_17], %23 {strides = array<i32>} : memref<8x128xf32, #tpu.memory_space<vmem>>, vector<8x128xf32>,
      %25 = vector.shape_cast %21 : vector<1x128xf32> to vector<1x128xf32>
      %26 = vector.broadcast %25 : vector<1x128xf32> to vector<8x128xf32>
      %c0_18 = arith.constant 0 : index
      %c0_19 = arith.constant 0 : index
      %27 = vector.load %arg8[%c0_18, %c0_19] : memref<8x128xf32, #tpu.memory_space<vmem>>, vector<8x128xf32>
      tpu.vector_store %arg8[%c0_18, %c0_19], %26 {strides = array<i32>} : memref<8x128xf32, #tpu.memory_space<vmem>>, vector<8x128xf32>,
      %c0_20 = arith.constant 0 : index
      %c0_21 = arith.constant 0 : index
      %28 = vector.load %arg5[%c0_20, %c0_21] : memref<1x128xf32, #tpu.memory_space<vmem>>, vector<1x128xf32>
      %29 = vector.broadcast %28 : vector<1x128xf32> to vector<128x128xf32>
      %30 = arith.addf %12, %29 : vector<128x128xf32>
      %31 = arith.truncf %30 : vector<128x128xf32> to vector<128x128xbf16>
      %c0_22 = arith.constant 0 : index
      %c0_23 = arith.constant 0 : index
      %32 = vector.load %arg6[%c0_22, %c0_23] : memref<128x128xbf16, #tpu.memory_space<vmem>>, vector<128x128xbf16>
      tpu.vector_store %arg6[%c0_22, %c0_23], %31 {strides = array<i32>} : memref<128x128xbf16, #tpu.memory_space<vmem>>, vector<128x128xbf16>,
    } else {
    }
    return
  }
  func.func @transform_0(%arg0: i32, %arg1: i32, %arg2: i32) -> (i32, i32) {
    %c0_i32 = arith.constant 0 : i32
    return %arg0, %arg2 : i32, i32
  }
  func.func @transform_1(%arg0: i32, %arg1: i32, %arg2: i32) -> (i32, i32) {
    %c0_i32 = arith.constant 0 : i32
    return %arg2, %arg1 : i32, i32
  }
  func.func @transform_2(%arg0: i32, %arg1: i32, %arg2: i32) -> (i32, i32) {
    %c0_i32 = arith.constant 0 : i32
    %c0_i32_0 = arith.constant 0 : i32
    return %c0_i32, %arg1 : i32, i32
  }
  func.func @transform_3(%arg0: i32, %arg1: i32, %arg2: i32) -> (i32, i32) {
    %c0_i32 = arith.constant 0 : i32
    return %arg0, %arg1 : i32, i32
  }
  func.func @transform_4(%arg0: i32, %arg1: i32, %arg2: i32) -> (i32, i32) {
    %c0_i32 = arith.constant 0 : i32
    return %arg0, %arg1 : i32, i32
  }
  func.func @transform_5(%arg0: i32, %arg1: i32, %arg2: i32) -> (i32, i32) {
    %c0_i32 = arith.constant 0 : i32
    return %arg0, %arg1 : i32, i32
  }
}

module attributes {stable_mosaic.version = 11 : i64} {
  func.func @_bn_apply_relu_kernel(%arg0: i32, %arg1: memref<128x128xbf16, #tpu.memory_space<vmem>>, %arg2: memref<1x128xf32, #tpu.memory_space<vmem>>, %arg3: memref<1x128xf32, #tpu.memory_space<vmem>>, %arg4: memref<128x128xbf16, #tpu.memory_space<vmem>>) attributes {dimension_semantics = [#tpu.dimension_semantics<parallel>], iteration_bounds = array<i64: 1>, scalar_prefetch = 0 : i64, scratch_operands = 0 : i64, tpu.core_type = #tpu.core_type<tc>, window_params = [{transform_indices = @transform_0, window_bounds = array<i64: 128, 128>}, {pipeline_mode = #tpu.pipeline_mode<synchronous>, transform_indices = @transform_1, window_bounds = array<i64: 1, 128>}, {pipeline_mode = #tpu.pipeline_mode<synchronous>, transform_indices = @transform_2, window_bounds = array<i64: 1, 128>}, {transform_indices = @transform_3, window_bounds = array<i64: 128, 128>}]} {
    %c0 = arith.constant 0 : index
    %c0_0 = arith.constant 0 : index
    %0 = vector.load %arg1[%c0, %c0_0] : memref<128x128xbf16, #tpu.memory_space<vmem>>, vector<128x128xbf16>
    %1 = arith.extf %0 : vector<128x128xbf16> to vector<128x128xf32>
    %c0_1 = arith.constant 0 : index
    %c0_2 = arith.constant 0 : index
    %2 = vector.load %arg2[%c0_1, %c0_2] : memref<1x128xf32, #tpu.memory_space<vmem>>, vector<1x128xf32>
    %3 = vector.broadcast %2 : vector<1x128xf32> to vector<128x128xf32>
    %4 = arith.mulf %1, %3 : vector<128x128xf32>
    %c0_3 = arith.constant 0 : index
    %c0_4 = arith.constant 0 : index
    %5 = vector.load %arg3[%c0_3, %c0_4] : memref<1x128xf32, #tpu.memory_space<vmem>>, vector<1x128xf32>
    %6 = vector.broadcast %5 : vector<1x128xf32> to vector<128x128xf32>
    %7 = arith.addf %4, %6 : vector<128x128xf32>
    %cst = arith.constant 0.000000e+00 : f32
    %8 = vector.broadcast %cst : f32 to vector<128x128xf32>
    %9 = arith.maximumf %7, %8 : vector<128x128xf32>
    %10 = arith.truncf %9 : vector<128x128xf32> to vector<128x128xbf16>
    %c0_5 = arith.constant 0 : index
    %c0_6 = arith.constant 0 : index
    %11 = vector.load %arg4[%c0_5, %c0_6] : memref<128x128xbf16, #tpu.memory_space<vmem>>, vector<128x128xbf16>
    tpu.vector_store %arg4[%c0_5, %c0_6], %10 {strides = array<i32>} : memref<128x128xbf16, #tpu.memory_space<vmem>>, vector<128x128xbf16>,
    return
  }
  func.func @transform_0(%arg0: i32) -> (i32, i32) {
    %c0_i32 = arith.constant 0 : i32
    %c0_i32_0 = arith.constant 0 : i32
    return %arg0, %c0_i32 : i32, i32
  }
  func.func @transform_1(%arg0: i32) -> (i32, i32) {
    %c0_i32 = arith.constant 0 : i32
    %c0_i32_0 = arith.constant 0 : i32
    %c0_i32_1 = arith.constant 0 : i32
    return %c0_i32, %c0_i32_0 : i32, i32
  }
  func.func @transform_2(%arg0: i32) -> (i32, i32) {
    %c0_i32 = arith.constant 0 : i32
    %c0_i32_0 = arith.constant 0 : i32
    %c0_i32_1 = arith.constant 0 : i32
    return %c0_i32, %c0_i32_0 : i32, i32
  }
  func.func @transform_3(%arg0: i32) -> (i32, i32) {
    %c0_i32 = arith.constant 0 : i32
    %c0_i32_0 = arith.constant 0 : i32
    return %arg0, %c0_i32 : i32, i32
  }
}

module attributes {stable_mosaic.version = 11 : i64} {
  func.func @kernel(%arg0: i32, %arg1: i32, %arg2: i32, %arg3: memref<128x128xbf16, #tpu.memory_space<vmem>>, %arg4: memref<128x128xbf16, #tpu.memory_space<vmem>>, %arg5: memref<1x128xf32, #tpu.memory_space<vmem>>, %arg6: memref<128x128xbf16, #tpu.memory_space<vmem>>, %arg7: memref<128x128xf32, #tpu.memory_space<vmem>>, %arg8: memref<128x128xf32, #tpu.memory_space<vmem>>) attributes {dimension_semantics = [#tpu.dimension_semantics<parallel>, #tpu.dimension_semantics<parallel>, #tpu.dimension_semantics<arbitrary>], iteration_bounds = array<i64: 1, 1, 1>, scalar_prefetch = 0 : i64, scratch_operands = 1 : i64, tpu.core_type = #tpu.core_type<tc>, window_params = [{transform_indices = @transform_0, window_bounds = array<i64: 128, 128>}, {transform_indices = @transform_1, window_bounds = array<i64: 128, 128>}, {transform_indices = @transform_2, window_bounds = array<i64: 1, 128>}, {transform_indices = @transform_3, window_bounds = array<i64: 128, 128>}, {transform_indices = @transform_4, window_bounds = array<i64: 128, 128>}]} {
    %c0_i32 = arith.constant 0 : i32
    %0 = arith.cmpi eq, %arg2, %c0_i32 : i32
    %1 = arith.extui %0 : i1 to i32
    %c0_i32_0 = arith.constant 0 : i32
    %2 = arith.cmpi ne, %1, %c0_i32_0 : i32
    scf.if %2 {
      %cst_10 = arith.constant 0.000000e+00 : f32
      %12 = vector.broadcast %cst_10 : f32 to vector<128x128xf32>
      %c0_11 = arith.constant 0 : index
      %c0_12 = arith.constant 0 : index
      %13 = vector.load %arg8[%c0_11, %c0_12] : memref<128x128xf32, #tpu.memory_space<vmem>>, vector<128x128xf32>
      tpu.vector_store %arg8[%c0_11, %c0_12], %12 {strides = array<i32>} : memref<128x128xf32, #tpu.memory_space<vmem>>, vector<128x128xf32>,
    } else {
    }
    %c0 = arith.constant 0 : index
    %c0_1 = arith.constant 0 : index
    %3 = vector.load %arg8[%c0, %c0_1] : memref<128x128xf32, #tpu.memory_space<vmem>>, vector<128x128xf32>
    %c0_2 = arith.constant 0 : index
    %c0_3 = arith.constant 0 : index
    %4 = vector.load %arg3[%c0_2, %c0_3] : memref<128x128xbf16, #tpu.memory_space<vmem>>, vector<128x128xbf16>
    %c0_4 = arith.constant 0 : index
    %c0_5 = arith.constant 0 : index
    %5 = vector.load %arg4[%c0_4, %c0_5] : memref<128x128xbf16, #tpu.memory_space<vmem>>, vector<128x128xbf16>
    %cst = arith.constant dense<0.000000e+00> : vector<128x128xf32>
    %6 = tpu.matmul %4, %5, %cst {dimension_numbers = #tpu.dot_dimension_numbers<[1], [0], [0], [1], [0, 0, 1, 1], [], []>} : vector<128x128xbf16>, vector<128x128xbf16>, vector<128x128xf32> -> vector<128x128xf32>
    %7 = arith.addf %3, %6 : vector<128x128xf32>
    %c0_6 = arith.constant 0 : index
    %c0_7 = arith.constant 0 : index
    %8 = vector.load %arg8[%c0_6, %c0_7] : memref<128x128xf32, #tpu.memory_space<vmem>>, vector<128x128xf32>
    tpu.vector_store %arg8[%c0_6, %c0_7], %7 {strides = array<i32>} : memref<128x128xf32, #tpu.memory_space<vmem>>, vector<128x128xf32>,
    %c0_i32_8 = arith.constant 0 : i32
    %9 = arith.cmpi eq, %arg2, %c0_i32_8 : i32
    %10 = arith.extui %9 : i1 to i32
    %c0_i32_9 = arith.constant 0 : i32
    %11 = arith.cmpi ne, %10, %c0_i32_9 : i32
    scf.if %11 {
      %c0_10 = arith.constant 0 : index
      %c0_11 = arith.constant 0 : index
      %12 = vector.load %arg8[%c0_10, %c0_11] : memref<128x128xf32, #tpu.memory_space<vmem>>, vector<128x128xf32>
      %c0_12 = arith.constant 0 : index
      %c0_13 = arith.constant 0 : index
      %13 = vector.load %arg5[%c0_12, %c0_13] : memref<1x128xf32, #tpu.memory_space<vmem>>, vector<1x128xf32>
      %14 = vector.broadcast %13 : vector<1x128xf32> to vector<128x128xf32>
      %15 = arith.addf %12, %14 : vector<128x128xf32>
      %c0_14 = arith.constant 0 : index
      %c0_15 = arith.constant 0 : index
      %16 = vector.load %arg6[%c0_14, %c0_15] : memref<128x128xbf16, #tpu.memory_space<vmem>>, vector<128x128xbf16>
      %17 = arith.extf %16 : vector<128x128xbf16> to vector<128x128xf32>
      %18 = arith.addf %15, %17 : vector<128x128xf32>
      %c0_16 = arith.constant 0 : index
      %c0_17 = arith.constant 0 : index
      %19 = vector.load %arg7[%c0_16, %c0_17] : memref<128x128xf32, #tpu.memory_space<vmem>>, vector<128x128xf32>
      tpu.vector_store %arg7[%c0_16, %c0_17], %18 {strides = array<i32>} : memref<128x128xf32, #tpu.memory_space<vmem>>, vector<128x128xf32>,
    } else {
    }
    return
  }
  func.func @transform_0(%arg0: i32, %arg1: i32, %arg2: i32) -> (i32, i32) {
    %c0_i32 = arith.constant 0 : i32
    return %arg0, %arg2 : i32, i32
  }
  func.func @transform_1(%arg0: i32, %arg1: i32, %arg2: i32) -> (i32, i32) {
    %c0_i32 = arith.constant 0 : i32
    return %arg2, %arg1 : i32, i32
  }
  func.func @transform_2(%arg0: i32, %arg1: i32, %arg2: i32) -> (i32, i32) {
    %c0_i32 = arith.constant 0 : i32
    %c0_i32_0 = arith.constant 0 : i32
    return %c0_i32, %arg1 : i32, i32
  }
  func.func @transform_3(%arg0: i32, %arg1: i32, %arg2: i32) -> (i32, i32) {
    %c0_i32 = arith.constant 0 : i32
    return %arg0, %arg1 : i32, i32
  }
  func.func @transform_4(%arg0: i32, %arg1: i32, %arg2: i32) -> (i32, i32) {
    %c0_i32 = arith.constant 0 : i32
    return %arg0, %arg1 : i32, i32
  }
}

</mosaic_0001>

<llo_original>
// kernel: wide_block_forward.6
$region0: #{wide_block_forward.6}
  #allocation0 [shape = 'u32[]', space=smem, size = 0x4, offset = 0x4, fixed_abs, tag = 'smem constant byte address 0x4 - core index']
  #allocation1 [shape = 'u32[144,128]{1,0:T(1,128)}', space=vmem, size = 0x12000, scoped, tag = 'internal scratch']
  %s0 = inlined_call_operand.vmem [shape: f32[512,4], index: 0, kind: input, shape index: {}]
  %s1 = inlined_call_operand.vmem [shape: f32[16,4], index: 1, kind: output, shape index: {0}]
  %s2 = inlined_call_operand.vmem [shape: f32[16,4], index: 2, kind: output, shape index: {1}]
  %3 = xla_tuple %s1, %s2
  %s4 = sld [smem:[#allocation0]]
  $region49: #{wide_block_forward.6} parent=0
    _
  %s6 = ssub.s32 1, %s4
  %s7 = scalar_select 0, %s6, %s4
  loop: start=0, step=1, limit=4
  $region2: #{wide_block_forward.6} parent=0 // loop_pre_header
    _
  $region3: #{wide_block_forward.6} parent=0 // loop_header
    %s9 = sphi 0, %s13
    %p10 = scmp.ge.s32.totalorder %s9, 4
    %s16 = sphi 0, %s28
    %s17 = sphi 0, %s24
    %s18 = sphi 0, %s16
    %s19 = sphi 0, %s17
    %s20 = sphi 0, %s18
    %s21 = sphi 0, %s19
    %s33 = sphi 0, %s35
    %s36 = sphi 0, %s33
    %s37 = sphi 0, %s36
    %s53 = sphi 0, %s37
    %s59 = sphi 0, %s61
    %s62 = sphi 0, %s59
    %s63 = sphi 0, %s62
    %s79 = sphi 0, %s63
    %s85 = sphi 0, %s87
    %s88 = sphi 0, %s85
    %s89 = sphi 0, %s88
    %s105 = sphi 0, %s89
  $region4: #{wide_block_forward.6} parent=0 // loop_header_branch
    %12 = sbr.rel (%p10) target = $region8
  $region5: #{wide_block_forward.6} parent=0 // loop_body
    %s14 = ssub.s32 %s9, 1
    %s15 = ssub.s32 %s9, 2
    %s22 = sadd.s32 1, %s17
    %p23 = scmp.ge.s32.totalorder %s22, 1
    %s24 = scalar_select %p23, 0, %s22
    %s25 = sadd.s32 1, %s16
    %s26 = scalar_select %p23, %s25, %s16
    %p27 = scmp.ge.s32.totalorder %s26, 2
    %s28 = scalar_select %p27, 0, %s26
    %s29 = sadd.s32 %s16, %s17
    %s30 = sadd.s32 %s28, %s24
    %s31 = ssub.s32 %s29, %s30
    %p32 = scmp.eq.s32.totalorder %s31, 0
    %s34 = sadd.s32 %s33, 1
    %s35 = scalar_select %p32, %s33, %s34
    %p38 = pneg %p32
    %p39 = scmp.eq.s32.totalorder %s9, 1
    %p40 = por %p38, %p39
    %p41 = scmp.ne.s32.totalorder %s33, %s36
    %p42 = scmp.eq.s32.totalorder %s9, 0
    %p43 = por %p41, %p42
    %p44 = scmp.ne.s32.totalorder %s33, %s36
    %p45 = scmp.eq.s32.totalorder %s14, 1
    %p46 = por %p44, %p45
    %p47 = scmp.ne.s32.totalorder %s36, %s37
    %p48 = scmp.eq.s32.totalorder %s14, 0
    %p49 = por %p47, %p48
    %p50 = scmp.ne.s32.totalorder %s36, %s37
    %p51 = scmp.eq.s32.totalorder %s15, 1
    %p52 = por %p50, %p51
    %p54 = scmp.ne.s32.totalorder %s37, %s53
    %p55 = scmp.eq.s32.totalorder %s15, 0
    %p56 = por %p54, %p55
    %s57 = ssub.s32 %s16, %s28
    %p58 = scmp.eq.s32.totalorder %s57, 0
    %s60 = sadd.s32 %s59, 1
    %s61 = scalar_select %p58, %s59, %s60
    %p64 = pneg %p58
    %p65 = scmp.eq.s32.totalorder %s9, 1
    %p66 = por %p64, %p65
    %p67 = scmp.ne.s32.totalorder %s59, %s62
    %p68 = scmp.eq.s32.totalorder %s9, 0
    %p69 = por %p67, %p68
    %p70 = scmp.ne.s32.totalorder %s59, %s62
    %p71 = scmp.eq.s32.totalorder %s14, 1
    %p72 = por %p70, %p71
    %p73 = scmp.ne.s32.totalorder %s62, %s63
    %p74 = scmp.eq.s32.totalorder %s14, 0
    %p75 = por %p73, %p74
    %p76 = scmp.ne.s32.totalorder %s62, %s63
    %p77 = scmp.eq.s32.totalorder %s15, 1
    %p78 = por %p76, %p77
    %p80 = scmp.ne.s32.totalorder %s63, %s79
    %p81 = scmp.eq.s32.totalorder %s15, 0
    %p82 = por %p80, %p81
    %s83 = ssub.s32 %s16, %s28
    %p84 = scmp.eq.s32.totalorder %s83, 0
    %s86 = sadd.s32 %s85, 1
    %s87 = scalar_select %p84, %s85, %s86
    %p90 = pneg %p84
    %p91 = scmp.eq.s32.totalorder %s9, 1
    %p92 = por %p90, %p91
    %p93 = scmp.ne.s32.totalorder %s85, %s88
    %p94 = scmp.eq.s32.totalorder %s9, 0
    %p95 = por %p93, %p94
    %p96 = scmp.ne.s32.totalorder %s85, %s88
    %p97 = scmp.eq.s32.totalorder %s14, 1
    %p98 = por %p96, %p97
    %p99 = scmp.ne.s32.totalorder %s88, %s89
    %p100 = scmp.eq.s32.totalorder %s14, 0
    %p101 = por %p99, %p100
    %p102 = scmp.ne.s32.totalorder %s88, %s89
    %p103 = scmp.eq.s32.totalorder %s15, 1
    %p104 = por %p102, %p103
    %p106 = scmp.ne.s32.totalorder %s89, %s105
    %p107 = scmp.eq.s32.totalorder %s15, 0
    %p108 = por %p106, %p107
    %p109 = scmp.le.s32.totalorder 1, %s9
    %p110 = scmp.lt.s32.totalorder %s9, 3
    %p111 = pnand %p109, %p110
    %p112 = pneg %p111
    // Predicated region
    $region9: #{wide_block_forward.6} parent=5 // pred_check
      _
    $region10: #{wide_block_forward.6} parent=5 // pred_check_branch
      %114 = sbr.rel (%p111) target = $region12
    $region11: #{wide_block_forward.6} parent=5 // pred_region
      %s115 = ssub.s32 %s9, 1
    $region12: #{wide_block_forward.6} parent=5 // pred_fallthru
      _
    %p116 = scmp.lt.s32.totalorder %s9, 2
    // Predicated region
    $region13: #{wide_block_forward.6} parent=5 // pred_check
      %p117 = pneg %p116
    $region14: #{wide_block_forward.6} parent=5 // pred_check_branch
      %119 = sbr.rel (%p117) target = $region16
    $region15: #{wide_block_forward.6} parent=5 // pred_region
      // Predicated region
      $region17: #{wide_block_forward.6} parent=15 // pred_check
        %p120 = pneg %p43
      $region18: #{wide_block_forward.6} parent=15 // pred_check_branch
        %122 = sbr.rel (%p120) target = $region20
      $region19: #{wide_block_forward.6} parent=15 // pred_region
        %s123 = sadd.s32 %s16, %s17
        %s124 = smul.u32 32, %s123
        %p125 = scmp.lt.s32.totalorder %s124, 63
        %s126 = scalar_select %p125, %s124, 63
        %s127 = smul.addr %s126, 8
        %s128 = scalar_lea.vmem %s0, %s127
        %s129 = sadd.s32 %s16, %s17
        %s130 = smul.u32 32, %s129
      $region20: #{wide_block_forward.6} parent=15 // pred_fallthru
        _
    $region16: #{wide_block_forward.6} parent=5 // pred_fallthru
      _
    %p131 = scmp.le.s32.totalorder 1, %s9
    %p132 = scmp.lt.s32.totalorder %s9, 3
    %p133 = pnand %p131, %p132
    %p134 = pneg %p133
    // Predicated region
    $region21: #{wide_block_forward.6} parent=5 // pred_check
      _
    $region22: #{wide_block_forward.6} parent=5 // pred_check_branch
      %136 = sbr.rel (%p133) target = $region24
    $region23: #{wide_block_forward.6} parent=5 // pred_region
      %s137 = ssub.s32 %s9, 1
      %s138 = sadd.s32 %s18, %s19
      %s139 = smul.u32 32, %s138
      %p140 = scmp.lt.s32.totalorder %s139, 63
      %s141 = scalar_select %p140, %s139, 63
      %s142 = smul.addr %s141, 8
      %s143 = scalar_lea.vmem %s0, %s142
      %p144 = pneg %p49
      %p145 = pneg %p46
      %p146 = pneg %p75
      %p147 = pneg %p72
      %p148 = scmp.lt.s32.totalorder %s18, 1
      %s149 = scalar_select %p148, %s18, 1
      %s150 = smul.addr %s149, 8
      %s151 = scalar_lea.vmem %s1, %s150
      %p152 = pneg %p101
      %p153 = pneg %p98
      %p154 = scmp.lt.s32.totalorder %s18, 1
      %s155 = scalar_select %p154, %s18, 1
      %s156 = smul.addr %s155, 8
      %s157 = scalar_lea.vmem %s2, %s156
      %s158 = sadd.s32 %s18, %s19
      %s159 = smul.u32 32, %s158
      %p160 = scmp.lt.s32.totalorder %s159, 63
      %s161 = scalar_select %p160, %s159, 63
      %s162 = smul.addr %s161, 8
      %s163 = scalar_lea.vmem %s0, %s162
      %s164 = sadd.s32 %s18, %s19
      %s165 = smul.u32 32, %s164
      %p166 = scmp.lt.s32.totalorder %s18, 1
      %s167 = scalar_select %p166, %s18, 1
      %s168 = smul.addr %s167, 8
      %s169 = scalar_lea.vmem %s1, %s168
      %p170 = scmp.lt.s32.totalorder %s18, 1
      %s171 = scalar_select %p170, %s18, 1
      %s172 = smul.addr %s171, 8
      %s173 = scalar_lea.vmem %s2, %s172
      %p174 = scmp.eq.s32.totalorder %s19, 0
      // Predicated region
      $region25: #{wide_block_forward.6} parent=23 // pred_check
        %p175 = pneg %p174
      $region26: #{wide_block_forward.6} parent=23 // pred_check_branch
        %177 = sbr.rel (%p175) target = $region28
      $region27: #{wide_block_forward.6} parent=23 // pred_region
        %vm178 = vcmask 31744
        %179 = vst.msk [vmem:[%s169] sm:$0xff] %vm178, 0.0
        %180 = vst.msk [vmem:[%s173] sm:$0xff] %vm178, 0.0
      $region28: #{wide_block_forward.6} parent=23 // pred_fallthru
        _
      %v181 = vld [vmem:[%s163] sm:$0xff]
      %v182 = vld [vmem:[%s163 + $0x8] sm:$0xff]
      %v183 = vld [vmem:[%s163 + $0x10] sm:$0xff]
      %v184 = vld [vmem:[%s163 + $0x18] sm:$0xff]
      %v185 = vld [vmem:[%s163 + $0x20] sm:$0xff]
      %v186 = vld [vmem:[%s163 + $0x28] sm:$0xff]
      %v187 = vld [vmem:[%s163 + $0x30] sm:$0xff]
      %v188 = vld [vmem:[%s163 + $0x38] sm:$0xff]
      %v189 = vld [vmem:[%s163 + $0x40] sm:$0xff]
      %v190 = vld [vmem:[%s163 + $0x48] sm:$0xff]
      %v191 = vld [vmem:[%s163 + $0x50] sm:$0xff]
      %v192 = vld [vmem:[%s163 + $0x58] sm:$0xff]
      %v193 = vld [vmem:[%s163 + $0x60] sm:$0xff]
      %v194 = vld [vmem:[%s163 + $0x68] sm:$0xff]
      %v195 = vld [vmem:[%s163 + $0x70] sm:$0xff]
      %v196 = vld [vmem:[%s163 + $0x78] sm:$0xff]
      %v197 = vld [vmem:[%s163 + $0x80] sm:$0xff]
      %v198 = vld [vmem:[%s163 + $0x88] sm:$0xff]
      %v199 = vld [vmem:[%s163 + $0x90] sm:$0xff]
      %v200 = vld [vmem:[%s163 + $0x98] sm:$0xff]
      %v201 = vld [vmem:[%s163 + $0xa0] sm:$0xff]
      %v202 = vld [vmem:[%s163 + $0xa8] sm:$0xff]
      %v203 = vld [vmem:[%s163 + $0xb0] sm:$0xff]
      %v204 = vld [vmem:[%s163 + $0xb8] sm:$0xff]
      %v205 = vld [vmem:[%s163 + $0xc0] sm:$0xff]
      %v206 = vld [vmem:[%s163 + $0xc8] sm:$0xff]
      %v207 = vld [vmem:[%s163 + $0xd0] sm:$0xff]
      %v208 = vld [vmem:[%s163 + $0xd8] sm:$0xff]
      %v209 = vld [vmem:[%s163 + $0xe0] sm:$0xff]
      %v210 = vld [vmem:[%s163 + $0xe8] sm:$0xff]
      %v211 = vld [vmem:[%s163 + $0xf0] sm:$0xff]
      %v212 = vld [vmem:[%s163 + $0xf8] sm:$0xff]
      %vm213 = vcmask 31744
      %v214 = vsel %vm213, %v181, 0.0
      %v215 = vsel %vm213, %v182, 0.0
      %v216 = vadd.f32 %v214, %v215
      %v217 = vsel %vm213, %v183, 0.0
      %v218 = vadd.f32 %v216, %v217
      %v219 = vsel %vm213, %v184, 0.0
      %v220 = vadd.f32 %v218, %v219
      %v221 = vsel %vm213, %v185, 0.0
      %v222 = vadd.f32 %v220, %v221
      %v223 = vsel %vm213, %v186, 0.0
      %v224 = vadd.f32 %v222, %v223
      %v225 = vsel %vm213, %v187, 0.0
      %v226 = vadd.f32 %v224, %v225
      %v227 = vsel %vm213, %v188, 0.0
      %v228 = vadd.f32 %v226, %v227
      %v229 = vsel %vm213, %v189, 0.0
      %v230 = vadd.f32 %v228, %v229
      %v231 = vsel %vm213, %v190, 0.0
      %v232 = vadd.f32 %v230, %v231
      %v233 = vsel %vm213, %v191, 0.0
      %v234 = vadd.f32 %v232, %v233
      %v235 = vsel %vm213, %v192, 0.0
      %v236 = vadd.f32 %v234, %v235
      %v237 = vsel %vm213, %v193, 0.0
      %v238 = vadd.f32 %v236, %v237
      %v239 = vsel %vm213, %v194, 0.0
      %v240 = vadd.f32 %v238, %v239
      %v241 = vsel %vm213, %v195, 0.0
      %v242 = vadd.f32 %v240, %v241
      %v243 = vsel %vm213, %v196, 0.0
      %v244 = vadd.f32 %v242, %v243
      %v245 = vsel %vm213, %v197, 0.0
      %v246 = vadd.f32 %v244, %v245
      %v247 = vsel %vm213, %v198, 0.0
      %v248 = vadd.f32 %v246, %v247
      %v249 = vsel %vm213, %v199, 0.0
      %v250 = vadd.f32 %v248, %v249
      %v251 = vsel %vm213, %v200, 0.0
      %v252 = vadd.f32 %v250, %v251
      %v253 = vsel %vm213, %v201, 0.0
      %v254 = vadd.f32 %v252, %v253
      %v255 = vsel %vm213, %v202, 0.0
      %v256 = vadd.f32 %v254, %v255
      %v257 = vsel %vm213, %v203, 0.0
      %v258 = vadd.f32 %v256, %v257
      %v259 = vsel %vm213, %v204, 0.0
      %v260 = vadd.f32 %v258, %v259
      %v261 = vsel %vm213, %v205, 0.0
      %v262 = vadd.f32 %v260, %v261
      %v263 = vsel %vm213, %v206, 0.0
      %v264 = vadd.f32 %v262, %v263
      %v265 = vsel %vm213, %v207, 0.0
      %v266 = vadd.f32 %v264, %v265
      %v267 = vsel %vm213, %v208, 0.0
      %v268 = vadd.f32 %v266, %v267
      %v269 = vsel %vm213, %v209, 0.0
      %v270 = vadd.f32 %v268, %v269
      %v271 = vsel %vm213, %v210, 0.0
      %v272 = vadd.f32 %v270, %v271
      %v273 = vsel %vm213, %v211, 0.0
      %v274 = vadd.f32 %v272, %v273
      %v275 = vsel %vm213, %v212, 0.0
      %v276 = vadd.f32 %v274, %v275
      %v277 = vrot.slane %v276, 4
      %v278 = vadd.f32 %v276, %v277
      %v279 = vrot.slane %v278, 2
      %v280 = vadd.f32 %v278, %v279
      %v281 = vrot.slane %v280, 1
      %v282 = vadd.f32 %v280, %v281
      %v283 = vmul.f32 %v282, 0.125
      %v284 = vmul.f32 %v181, %v181
      %v285 = vmul.f32 %v182, %v182
      %v286 = vmul.f32 %v183, %v183
      %v287 = vmul.f32 %v184, %v184
      %v288 = vmul.f32 %v185, %v185
      %v289 = vmul.f32 %v186, %v186
      %v290 = vmul.f32 %v187, %v187
      %v291 = vmul.f32 %v188, %v188
      %v292 = vmul.f32 %v189, %v189
      %v293 = vmul.f32 %v190, %v190
      %v294 = vmul.f32 %v191, %v191
      %v295 = vmul.f32 %v192, %v192
      %v296 = vmul.f32 %v193, %v193
      %v297 = vmul.f32 %v194, %v194
      %v298 = vmul.f32 %v195, %v195
      %v299 = vmul.f32 %v196, %v196
      %v300 = vmul.f32 %v197, %v197
      %v301 = vmul.f32 %v198, %v198
      %v302 = vmul.f32 %v199, %v199
      %v303 = vmul.f32 %v200, %v200
      %v304 = vmul.f32 %v201, %v201
      %v305 = vmul.f32 %v202, %v202
      %v306 = vmul.f32 %v203, %v203
      %v307 = vmul.f32 %v204, %v204
      %v308 = vmul.f32 %v205, %v205
      %v309 = vmul.f32 %v206, %v206
      %v310 = vmul.f32 %v207, %v207
      %v311 = vmul.f32 %v208, %v208
      %v312 = vmul.f32 %v209, %v209
      %v313 = vmul.f32 %v210, %v210
      %v314 = vmul.f32 %v211, %v211
      %v315 = vmul.f32 %v212, %v212
      %v316 = vsel %vm213, %v284, 0.0
      %v317 = vsel %vm213, %v285, 0.0
      %v318 = vadd.f32 %v316, %v317
      %v319 = vsel %vm213, %v286, 0.0
      %v320 = vadd.f32 %v318, %v319
      %v321 = vsel %vm213, %v287, 0.0
      %v322 = vadd.f32 %v320, %v321
      %v323 = vsel %vm213, %v288, 0.0
      %v324 = vadd.f32 %v322, %v323
      %v325 = vsel %vm213, %v289, 0.0
      %v326 = vadd.f32 %v324, %v325
      %v327 = vsel %vm213, %v290, 0.0
      %v328 = vadd.f32 %v326, %v327
      %v329 = vsel %vm213, %v291, 0.0
      %v330 = vadd.f32 %v328, %v329
      %v331 = vsel %vm213, %v292, 0.0
      %v332 = vadd.f32 %v330, %v331
      %v333 = vsel %vm213, %v293, 0.0
      %v334 = vadd.f32 %v332, %v333
      %v335 = vsel %vm213, %v294, 0.0
      %v336 = vadd.f32 %v334, %v335
      %v337 = vsel %vm213, %v295, 0.0
      %v338 = vadd.f32 %v336, %v337
      %v339 = vsel %vm213, %v296, 0.0
      %v340 = vadd.f32 %v338, %v339
      %v341 = vsel %vm213, %v297, 0.0
      %v342 = vadd.f32 %v340, %v341
      %v343 = vsel %vm213, %v298, 0.0
      %v344 = vadd.f32 %v342, %v343
      %v345 = vsel %vm213, %v299, 0.0
      %v346 = vadd.f32 %v344, %v345
      %v347 = vsel %vm213, %v300, 0.0
      %v348 = vadd.f32 %v346, %v347
      %v349 = vsel %vm213, %v301, 0.0
      %v350 = vadd.f32 %v348, %v349
      %v351 = vsel %vm213, %v302, 0.0
      %v352 = vadd.f32 %v350, %v351
      %v353 = vsel %vm213, %v303, 0.0
      %v354 = vadd.f32 %v352, %v353
      %v355 = vsel %vm213, %v304, 0.0
      %v356 = vadd.f32 %v354, %v355
      %v357 = vsel %vm213, %v305, 0.0
      %v358 = vadd.f32 %v356, %v357
      %v359 = vsel %vm213, %v306, 0.0
      %v360 = vadd.f32 %v358, %v359
      %v361 = vsel %vm213, %v307, 0.0
      %v362 = vadd.f32 %v360, %v361
      %v363 = vsel %vm213, %v308, 0.0
      %v364 = vadd.f32 %v362, %v363
      %v365 = vsel %vm213, %v309, 0.0
      %v366 = vadd.f32 %v364, %v365
      %v367 = vsel %vm213, %v310, 0.0
      %v368 = vadd.f32 %v366, %v367
      %v369 = vsel %vm213, %v311, 0.0
      %v370 = vadd.f32 %v368, %v369
      %v371 = vsel %vm213, %v312, 0.0
      %v372 = vadd.f32 %v370, %v371
      %v373 = vsel %vm213, %v313, 0.0
      %v374 = vadd.f32 %v372, %v373
      %v375 = vsel %vm213, %v314, 0.0
      %v376 = vadd.f32 %v374, %v375
      %v377 = vsel %vm213, %v315, 0.0
      %v378 = vadd.f32 %v376, %v377
      %v379 = vrot.slane %v378, 4
      %v380 = vadd.f32 %v378, %v379
      %v381 = vrot.slane %v380, 2
      %v382 = vadd.f32 %v380, %v381
      %v383 = vrot.slane %v382, 1
      %v384 = vadd.f32 %v382, %v383
      %v385 = vmul.f32 %v384, 0.125
      %v386 = vld [vmem:[%s169] sm:$0xff]
      %v387 = vadd.f32 %v386, %v283
      %388 = vst.msk [vmem:[%s169] sm:$0xff] %vm213, %v387
      %v389 = vld [vmem:[%s173] sm:$0xff]
      %v390 = vadd.f32 %v389, %v385
      %391 = vst.msk [vmem:[%s173] sm:$0xff] %vm213, %v390
      %p392 = scmp.lt.s32.totalorder %s18, 1
      %s393 = scalar_select %p392, %s18, 1
      %s394 = smul.addr %s393, 8
      %s395 = scalar_lea.vmem %s1, %s394
      %p396 = scmp.lt.s32.totalorder %s18, 1
      %s397 = scalar_select %p396, %s18, 1
      %s398 = smul.addr %s397, 8
      %s399 = scalar_lea.vmem %s2, %s398
      // Predicated region
      $region29: #{wide_block_forward.6} parent=23 // pred_check
        %p400 = pneg %p72
      $region30: #{wide_block_forward.6} parent=23 // pred_check_branch
        %402 = sbr.rel (%p400) target = $region32
      $region31: #{wide_block_forward.6} parent=23 // pred_region
        _
      $region32: #{wide_block_forward.6} parent=23 // pred_fallthru
        _
      // Predicated region
      $region33: #{wide_block_forward.6} parent=23 // pred_check
        %p403 = pneg %p98
      $region34: #{wide_block_forward.6} parent=23 // pred_check_branch
        %405 = sbr.rel (%p403) target = $region36
      $region35: #{wide_block_forward.6} parent=23 // pred_region
        _
      $region36: #{wide_block_forward.6} parent=23 // pred_fallthru
        _
    $region24: #{wide_block_forward.6} parent=5 // pred_fallthru
      _
    %p406 = scmp.le.s32.totalorder 2, %s9
    // Predicated region
    $region37: #{wide_block_forward.6} parent=5 // pred_check
      %p407 = pneg %p406
    $region38: #{wide_block_forward.6} parent=5 // pred_check_branch
      %409 = sbr.rel (%p407) target = $region40
    $region39: #{wide_block_forward.6} parent=5 // pred_region
      %s410 = ssub.s32 %s9, 2
      // Predicated region
      $region41: #{wide_block_forward.6} parent=39 // pred_check
        %p411 = pneg %p78
      $region42: #{wide_block_forward.6} parent=39 // pred_check_branch
        %413 = sbr.rel (%p411) target = $region44
      $region43: #{wide_block_forward.6} parent=39 // pred_region
        %p414 = scmp.lt.s32.totalorder %s20, 1
        %s415 = scalar_select %p414, %s20, 1
        %s416 = smul.addr %s415, 8
        %s417 = scalar_lea.vmem %s1, %s416
      $region44: #{wide_block_forward.6} parent=39 // pred_fallthru
        _
      // Predicated region
      $region45: #{wide_block_forward.6} parent=39 // pred_check
        %p418 = pneg %p104
      $region46: #{wide_block_forward.6} parent=39 // pred_check_branch
        %420 = sbr.rel (%p418) target = $region48
      $region47: #{wide_block_forward.6} parent=39 // pred_region
        %p421 = scmp.lt.s32.totalorder %s20, 1
        %s422 = scalar_select %p421, %s20, 1
        %s423 = smul.addr %s422, 8
        %s424 = scalar_lea.vmem %s2, %s423
      $region48: #{wide_block_forward.6} parent=39 // pred_fallthru
        _
    $region40: #{wide_block_forward.6} parent=5 // pred_fallthru
      _
  $region6: #{wide_block_forward.6} parent=0 // loop_footer
    %s13 = sadd.s32 1, %s9
  $region7: #{wide_block_forward.6} parent=0 // loop_footer_branch
    %8 = sbr.rel target = $region3
  $region8: #{wide_block_forward.6} parent=0 // loop_exit
    _

// kernel: wide_block_forward.8
$region0: #{wide_block_forward.8}
  #allocation0 [shape = 'u32[]', space=smem, size = 0x4, offset = 0x4, fixed_abs, tag = 'smem constant byte address 0x4 - core index']
  #allocation1 [shape = 'u32[144,128]{1,0:T(1,128)}', space=vmem, size = 0x12000, scoped, tag = 'internal scratch']
  #allocation2 [shape = 'f32[128,128]{1,0:T(8,128)}', space=vmem, size = 0x10000, scoped, tag = 'scratch operand']
  %s0 = inlined_call_operand.vmem [shape: bf16[128,128], index: 0, kind: input, shape index: {}]
  %s1 = inlined_call_operand.vmem [shape: bf16[128,128], index: 1, kind: input, shape index: {}]
  %s2 = inlined_call_operand.vmem [shape: f32[1,128], index: 2, kind: input, shape index: {}]
  %s3 = inlined_call_operand.vmem [shape: bf16[128,128], index: 3, kind: output, shape index: {}]
  %s4 = sld [smem:[#allocation0]]
  $region30: #{wide_block_forward.8} parent=0
    _
  %s6 = ssub.s32 1, %s4
  %s7 = scalar_select 0, %s6, %s4
  // Predicated region
  $region2: #{wide_block_forward.8} parent=0 // pred_check
    _
  $region3: #{wide_block_forward.8} parent=0 // pred_check_branch
    %9 = sbr.rel (0) target = $region5
  $region4: #{wide_block_forward.8} parent=0 // pred_region
    _
  $region5: #{wide_block_forward.8} parent=0 // pred_fallthru
    _
  // Predicated region
  $region6: #{wide_block_forward.8} parent=0 // pred_check
    _
  $region7: #{wide_block_forward.8} parent=0 // pred_check_branch
    %11 = sbr.rel (0) target = $region9
  $region8: #{wide_block_forward.8} parent=0 // pred_region
    _
  $region9: #{wide_block_forward.8} parent=0 // pred_fallthru
    _
  // Predicated region
  $region10: #{wide_block_forward.8} parent=0 // pred_check
    _
  $region11: #{wide_block_forward.8} parent=0 // pred_check_branch
    %13 = sbr.rel (0) target = $region13
  $region12: #{wide_block_forward.8} parent=0 // pred_region
    _
  $region13: #{wide_block_forward.8} parent=0 // pred_fallthru
    _
  %p15 = scmp.eq.s32.totalorder 0, 0
  // Predicated region
  $region14: #{wide_block_forward.8} parent=0 // pred_check
    %p16 = pneg %p15
  $region15: #{wide_block_forward.8} parent=0 // pred_check_branch
    %18 = sbr.rel (%p16) target = $region17
  $region16: #{wide_block_forward.8} parent=0 // pred_region
    %19 = vst [vmem:[#allocation2] sm:$0xff] 0.0
    %20 = vst [vmem:[#allocation2 + $0x8] sm:$0xff] 0.0
    %21 = vst [vmem:[#allocation2 + $0x10] sm:$0xff] 0.0
    %22 = vst [vmem:[#allocation2 + $0x18] sm:$0xff] 0.0
    %23 = vst [vmem:[#allocation2 + $0x20] sm:$0xff] 0.0
    %24 = vst [vmem:[#allocation2 + $0x28] sm:$0xff] 0.0
    %25 = vst [vmem:[#allocation2 + $0x30] sm:$0xff] 0.0
    %26 = vst [vmem:[#allocation2 + $0x38] sm:$0xff] 0.0
    %27 = vst [vmem:[#allocation2 + $0x40] sm:$0xff] 0.0
    %28 = vst [vmem:[#allocation2 + $0x48] sm:$0xff] 0.0
    %29 = vst [vmem:[#allocation2 + $0x50] sm:$0xff] 0.0
    %30 = vst [vmem:[#allocation2 + $0x58] sm:$0xff] 0.0
    %31 = vst [vmem:[#allocation2 + $0x60] sm:$0xff] 0.0
    %32 = vst [vmem:[#allocation2 + $0x68] sm:$0xff] 0.0
    %33 = vst [vmem:[#allocation2 + $0x70] sm:$0xff] 0.0
    %34 = vst [vmem:[#allocation2 + $0x78] sm:$0xff] 0.0
  $region17: #{wide_block_forward.8} parent=0 // pred_fallthru
    _
  %v35 = vld [vmem:[#allocation2] sm:$0xff]
  %v36 = vld [vmem:[#allocation2 + $0x8] sm:$0xff]
  %v37 = vld [vmem:[#allocation2 + $0x10] sm:$0xff]
  %v38 = vld [vmem:[#allocation2 + $0x18] sm:$0xff]
  %v39 = vld [vmem:[#allocation2 + $0x20] sm:$0xff]
  %v40 = vld [vmem:[#allocation2 + $0x28] sm:$0xff]
  %v41 = vld [vmem:[#allocation2 + $0x30] sm:$0xff]
  %v42 = vld [vmem:[#allocation2 + $0x38] sm:$0xff]
  %v43 = vld [vmem:[#allocation2 + $0x40] sm:$0xff]
  %v44 = vld [vmem:[#allocation2 + $0x48] sm:$0xff]
  %v45 = vld [vmem:[#allocation2 + $0x50] sm:$0xff]
  %v46 = vld [vmem:[#allocation2 + $0x58] sm:$0xff]
  %v47 = vld [vmem:[#allocation2 + $0x60] sm:$0xff]
  %v48 = vld [vmem:[#allocation2 + $0x68] sm:$0xff]
  %v49 = vld [vmem:[#allocation2 + $0x70] sm:$0xff]
  %v50 = vld [vmem:[#allocation2 + $0x78] sm:$0xff]
  %v51 = vld [vmem:[%s0] sm:$0xf]
  %v52 = vld [vmem:[%s0 + $0x4] sm:$0xf]
  %v53 = vld [vmem:[%s0 + $0x8] sm:$0xf]
  %v54 = vld [vmem:[%s0 + $0xc] sm:$0xf]
  %v55 = vld [vmem:[%s0 + $0x10] sm:$0xf]
  %v56 = vld [vmem:[%s0 + $0x14] sm:$0xf]
  %v57 = vld [vmem:[%s0 + $0x18] sm:$0xf]
  %v58 = vld [vmem:[%s0 + $0x1c] sm:$0xf]
  %v59 = vld [vmem:[%s0 + $0x20] sm:$0xf]
  %v60 = vld [vmem:[%s0 + $0x24] sm:$0xf]
  %v61 = vld [vmem:[%s0 + $0x28] sm:$0xf]
  %v62 = vld [vmem:[%s0 + $0x2c] sm:$0xf]
  %v63 = vld [vmem:[%s0 + $0x30] sm:$0xf]
  %v64 = vld [vmem:[%s0 + $0x34] sm:$0xf]
  %v65 = vld [vmem:[%s0 + $0x38] sm:$0xf]
  %v66 = vld [vmem:[%s0 + $0x3c] sm:$0xf]
  %v67 = vld [vmem:[%s1] sm:$0xf]
  %v68 = vld [vmem:[%s1 + $0x4] sm:$0xf]
  %v69 = vld [vmem:[%s1 + $0x8] sm:$0xf]
  %v70 = vld [vmem:[%s1 + $0xc] sm:$0xf]
  %v71 = vld [vmem:[%s1 + $0x10] sm:$0xf]
  %v72 = vld [vmem:[%s1 + $0x14] sm:$0xf]
  %v73 = vld [vmem:[%s1 + $0x18] sm:$0xf]
  %v74 = vld [vmem:[%s1 + $0x1c] sm:$0xf]
  %v75 = vld [vmem:[%s1 + $0x20] sm:$0xf]
  %v76 = vld [vmem:[%s1 + $0x24] sm:$0xf]
  %v77 = vld [vmem:[%s1 + $0x28] sm:$0xf]
  %v78 = vld [vmem:[%s1 + $0x2c] sm:$0xf]
  %v79 = vld [vmem:[%s1 + $0x30] sm:$0xf]
  %v80 = vld [vmem:[%s1 + $0x34] sm:$0xf]
  %v81 = vld [vmem:[%s1 + $0x38] sm:$0xf]
  %v82 = vld [vmem:[%s1 + $0x3c] sm:$0xf]
  %v99 = vunpack.c.l.b16 %v51
  %v100 = vunpack.c.l.b16 %v52
  %v101 = vunpack.c.l.b16 %v53
  %v102 = vunpack.c.l.b16 %v54
  %v103 = vunpack.c.l.b16 %v55
  %v104 = vunpack.c.l.b16 %v56
  %v105 = vunpack.c.l.b16 %v57
  %v106 = vunpack.c.l.b16 %v58
  %v107 = vunpack.c.l.b16 %v59
  %v108 = vunpack.c.l.b16 %v60
  %v109 = vunpack.c.l.b16 %v61
  %v110 = vunpack.c.l.b16 %v62
  %v111 = vunpack.c.l.b16 %v63
  %v112 = vunpack.c.l.b16 %v64
  %v113 = vunpack.c.l.b16 %v65
  %v114 = vunpack.c.l.b16 %v66
  %v115 = vpack.c.b16 %v100, %v99
  %v116 = vpack.c.b16 %v102, %v101
  %v117 = vpack.c.b16 %v104, %v103
  %v118 = vpack.c.b16 %v106, %v105
  %v119 = vpack.c.b16 %v108, %v107
  %v120 = vpack.c.b16 %v110, %v109
  %v121 = vpack.c.b16 %v112, %v111
  %v122 = vpack.c.b16 %v114, %v113
  %v147 = vunpack.c.l.b16 %v67
  %v148 = vunpack.c.l.b16 %v68
  %v149 = vunpack.c.l.b16 %v69
  %v150 = vunpack.c.l.b16 %v70
  %v151 = vunpack.c.l.b16 %v71
  %v152 = vunpack.c.l.b16 %v72
  %v153 = vunpack.c.l.b16 %v73
  %v154 = vunpack.c.l.b16 %v74
  %v155 = vunpack.c.l.b16 %v75
  %v156 = vunpack.c.l.b16 %v76
  %v157 = vunpack.c.l.b16 %v77
  %v158 = vunpack.c.l.b16 %v78
  %v159 = vunpack.c.l.b16 %v79
  %v160 = vunpack.c.l.b16 %v80
  %v161 = vunpack.c.l.b16 %v81
  %v162 = vunpack.c.l.b16 %v82
  %v163 = vpack.c.b16 %v148, %v147
  %v164 = vpack.c.b16 %v150, %v149
  %v165 = vpack.c.b16 %v152, %v151
  %v166 = vpack.c.b16 %v154, %v153
  %v167 = vpack.c.b16 %v156, %v155
  %v168 = vpack.c.b16 %v158, %v157
  %v169 = vpack.c.b16 %v160, %v159
  %v170 = vpack.c.b16 %v162, %v161
  %179 = vmatprep.subr.bf16.mxu0 0
  %180 = vmatpush1.bf16.msra.mxu0 %v163
  %181 = vmatprep.subr.bf16.mxu0 0
  %182 = vmatpush1.bf16.msra.mxu0 %v164
  %183 = vmatprep.subr.bf16.mxu0 0
  %184 = vmatpush1.bf16.msra.mxu0 %v165
  %185 = vmatprep.subr.bf16.mxu0 0
  %186 = vmatpush1.bf16.msra.mxu0 %v166
  %187 = vmatprep.subr.bf16.mxu0 0
  %188 = vmatpush1.bf16.msra.mxu0 %v167
  %189 = vmatprep.subr.bf16.mxu0 0
  %190 = vmatpush1.bf16.msra.mxu0 %v168
  %191 = vmatprep.subr.bf16.mxu0 0
  %192 = vmatpush1.bf16.msra.mxu0 %v169
  %193 = vmatprep.subr.bf16.mxu0 0
  %194 = vmatpush1.bf16.msra.mxu0 %v170
  %195 = vmatprep.subr.bf16.mxu0 0
  %196 = vmatpush1.bf16.msra.mxu0 0
  %197 = vmatprep.subr.bf16.mxu0 0
  %198 = vmatpush1.bf16.msra.mxu0 0
  %199 = vmatprep.subr.bf16.mxu0 0
  %200 = vmatpush1.bf16.msra.mxu0 0
  %201 = vmatprep.subr.bf16.mxu0 0
  %202 = vmatpush1.bf16.msra.mxu0 0
  %203 = vmatprep.subr.bf16.mxu0 0
  %204 = vmatpush1.bf16.msra.mxu0 0
  %205 = vmatprep.subr.bf16.mxu0 0
  %206 = vmatpush1.bf16.msra.mxu0 0
  %207 = vmatprep.subr.bf16.mxu0 0
  %208 = vmatpush1.bf16.msra.mxu0 0
  %209 = vmatprep.subr.bf16.mxu0 0
  %210 = vmatpush1.bf16.msra.mxu0 0
  %211 = vmatprep.mubr.bf16.mxu0 0
  %212 = vmatmul.mubr.bf16.gmra.mrb[0].mxu0 %v115
  %v213 = vpop.f32.mrb[0].mxu0
  %v214 = vadd.f32 0.0, %v213
  %v215 = vpop.f32.mrb[0].mxu0
  %v216 = vpop.f32.mrb[0].mxu0
  %v217 = vadd.f32 0.0, %v216
  %v218 = vpop.f32.mrb[0].mxu0
  %219 = vmatprep.mubr.bf16.mxu0 0
  %220 = vmatmul.mubr.bf16.gmra.mrb[0].mxu0 %v116
  %v221 = vpop.f32.mrb[0].mxu0
  %v222 = vadd.f32 0.0, %v221
  %v223 = vpop.f32.mrb[0].mxu0
  %v224 = vpop.f32.mrb[0].mxu0
  %v225 = vadd.f32 0.0, %v224
  %v226 = vpop.f32.mrb[0].mxu0
  %227 = vmatprep.mubr.bf16.mxu0 0
  %228 = vmatmul.mubr.bf16.gmra.mrb[0].mxu0 %v117
  %v229 = vpop.f32.mrb[0].mxu0
  %v230 = vadd.f32 0.0, %v229
  %v231 = vpop.f32.mrb[0].mxu0
  %v232 = vpop.f32.mrb[0].mxu0
  %v233 = vadd.f32 0.0, %v232
  %v234 = vpop.f32.mrb[0].mxu0
  %235 = vmatprep.mubr.bf16.mxu0 0
  %236 = vmatmul.mubr.bf16.gmra.mrb[0].mxu0 %v118
  %v237 = vpop.f32.mrb[0].mxu0
  %v238 = vadd.f32 0.0, %v237
  %v239 = vpop.f32.mrb[0].mxu0
  %v240 = vpop.f32.mrb[0].mxu0
  %v241 = vadd.f32 0.0, %v240
  %v242 = vpop.f32.mrb[0].mxu0
  %243 = vmatprep.mubr.bf16.mxu0 0
  %244 = vmatmul.mubr.bf16.gmra.mrb[0].mxu0 %v119
  %v245 = vpop.f32.mrb[0].mxu0
  %v246 = vadd.f32 0.0, %v245
  %v247 = vpop.f32.mrb[0].mxu0
  %v248 = vpop.f32.mrb[0].mxu0
  %v249 = vadd.f32 0.0, %v248
  %v250 = vpop.f32.mrb[0].mxu0
  %251 = vmatprep.mubr.bf16.mxu0 0
  %252 = vmatmul.mubr.bf16.gmra.mrb[0].mxu0 %v120
  %v253 = vpop.f32.mrb[0].mxu0
  %v254 = vadd.f32 0.0, %v253
  %v255 = vpop.f32.mrb[0].mxu0
  %v256 = vpop.f32.mrb[0].mxu0
  %v257 = vadd.f32 0.0, %v256
  %v258 = vpop.f32.mrb[0].mxu0
  %259 = vmatprep.mubr.bf16.mxu0 0
  %260 = vmatmul.mubr.bf16.gmra.mrb[0].mxu0 %v121
  %v261 = vpop.f32.mrb[0].mxu0
  %v262 = vadd.f32 0.0, %v261
  %v263 = vpop.f32.mrb[0].mxu0
  %v264 = vpop.f32.mrb[0].mxu0
  %v265 = vadd.f32 0.0, %v264
  %v266 = vpop.f32.mrb[0].mxu0
  %267 = vmatprep.mubr.bf16.mxu0 0
  %268 = vmatmul.mubr.bf16.gmra.mrb[0].mxu0 %v122
  %v269 = vpop.f32.mrb[0].mxu0
  %v270 = vadd.f32 0.0, %v269
  %v271 = vpop.f32.mrb[0].mxu0
  %v272 = vpop.f32.mrb[0].mxu0
  %v273 = vadd.f32 0.0, %v272
  %v274 = vpop.f32.mrb[0].mxu0
  %275 = vdwg.mxu0
  %v276 = vadd.f32 %v35, %v214
  %v277 = vadd.f32 %v36, %v217
  %v278 = vadd.f32 %v37, %v222
  %v279 = vadd.f32 %v38, %v225
  %v280 = vadd.f32 %v39, %v230
  %v281 = vadd.f32 %v40, %v233
  %v282 = vadd.f32 %v41, %v238
  %v283 = vadd.f32 %v42, %v241
  %v284 = vadd.f32 %v43, %v246
  %v285 = vadd.f32 %v44, %v249
  %v286 = vadd.f32 %v45, %v254
  %v287 = vadd.f32 %v46, %v257
  %v288 = vadd.f32 %v47, %v262
  %v289 = vadd.f32 %v48, %v265
  %v290 = vadd.f32 %v49, %v270
  %v291 = vadd.f32 %v50, %v273
  %292 = vst [vmem:[#allocation2] sm:$0xff] %v276
  %293 = vst [vmem:[#allocation2 + $0x8] sm:$0xff] %v277
  %294 = vst [vmem:[#allocation2 + $0x10] sm:$0xff] %v278
  %295 = vst [vmem:[#allocation2 + $0x18] sm:$0xff] %v279
  %296 = vst [vmem:[#allocation2 + $0x20] sm:$0xff] %v280
  %297 = vst [vmem:[#allocation2 + $0x28] sm:$0xff] %v281
  %298 = vst [vmem:[#allocation2 + $0x30] sm:$0xff] %v282
  %299 = vst [vmem:[#allocation2 + $0x38] sm:$0xff] %v283
  %300 = vst [vmem:[#allocation2 + $0x40] sm:$0xff] %v284
  %301 = vst [vmem:[#allocation2 + $0x48] sm:$0xff] %v285
  %302 = vst [vmem:[#allocation2 + $0x50] sm:$0xff] %v286
  %303 = vst [vmem:[#allocation2 + $0x58] sm:$0xff] %v287
  %304 = vst [vmem:[#allocation2 + $0x60] sm:$0xff] %v288
  %305 = vst [vmem:[#allocation2 + $0x68] sm:$0xff] %v289
  %306 = vst [vmem:[#allocation2 + $0x70] sm:$0xff] %v290
  %307 = vst [vmem:[#allocation2 + $0x78] sm:$0xff] %v291
  // Predicated region
  $region18: #{wide_block_forward.8} parent=0 // pred_check
    %p308 = pneg %p15
  $region19: #{wide_block_forward.8} parent=0 // pred_check_branch
    %310 = sbr.rel (%p308) target = $region21
  $region20: #{wide_block_forward.8} parent=0 // pred_region
    %v311 = vld [vmem:[#allocation2] sm:$0xff]
    %v312 = vld [vmem:[#allocation2 + $0x8] sm:$0xff]
    %v313 = vld [vmem:[#allocation2 + $0x10] sm:$0xff]
    %v314 = vld [vmem:[#allocation2 + $0x18] sm:$0xff]
    %v315 = vld [vmem:[#allocation2 + $0x20] sm:$0xff]
    %v316 = vld [vmem:[#allocation2 + $0x28] sm:$0xff]
    %v317 = vld [vmem:[#allocation2 + $0x30] sm:$0xff]
    %v318 = vld [vmem:[#allocation2 + $0x38] sm:$0xff]
    %v319 = vld [vmem:[#allocation2 + $0x40] sm:$0xff]
    %v320 = vld [vmem:[#allocation2 + $0x48] sm:$0xff]
    %v321 = vld [vmem:[#allocation2 + $0x50] sm:$0xff]
    %v322 = vld [vmem:[#allocation2 + $0x58] sm:$0xff]
    %v323 = vld [vmem:[#allocation2 + $0x60] sm:$0xff]
    %v324 = vld [vmem:[#allocation2 + $0x68] sm:$0xff]
    %v325 = vld [vmem:[#allocation2 + $0x70] sm:$0xff]
    %v326 = vld [vmem:[#allocation2 + $0x78] sm:$0xff]
    %v327 = vld [vmem:[%s2] sm:$0x1]
    %v329 = vlaneseq
    %v330 = vshrl.u32 %v329, 7
    %v331 = vsub.s32 0, %v330
    %v332 = vrot.slane %v327, %v331
    %v334 = vadd.f32 %v311, %v332
    %v335 = vadd.f32 %v312, %v332
    %v336 = vadd.f32 %v313, %v332
    %v337 = vadd.f32 %v314, %v332
    %v338 = vadd.f32 %v315, %v332
    %v339 = vadd.f32 %v316, %v332
    %v340 = vadd.f32 %v317, %v332
    %v341 = vadd.f32 %v318, %v332
    %v342 = vadd.f32 %v319, %v332
    %v343 = vadd.f32 %v320, %v332
    %v344 = vadd.f32 %v321, %v332
    %v345 = vadd.f32 %v322, %v332
    %v346 = vadd.f32 %v323, %v332
    %v347 = vadd.f32 %v324, %v332
    %v348 = vadd.f32 %v325, %v332
    %v349 = vadd.f32 %v326, %v332
    %v350 = vpack.c.bf16 %v335, %v334
    %v351 = vpack.c.bf16 %v337, %v336
    %v352 = vpack.c.bf16 %v339, %v338
    %v353 = vpack.c.bf16 %v341, %v340
    %v354 = vpack.c.bf16 %v343, %v342
    %v355 = vpack.c.bf16 %v345, %v344
    %v356 = vpack.c.bf16 %v347, %v346
    %v357 = vpack.c.bf16 %v349, %v348
    %v366 = vunpack.c.l.b16 %v350
    %v367 = vunpack.c.h.b16 %v350
    %v368 = vunpack.c.l.b16 %v351
    %v369 = vunpack.c.h.b16 %v351
    %v370 = vunpack.c.l.b16 %v352
    %v371 = vunpack.c.h.b16 %v352
    %v372 = vunpack.c.l.b16 %v353
    %v373 = vunpack.c.h.b16 %v353
    %v374 = vunpack.c.l.b16 %v354
    %v375 = vunpack.c.h.b16 %v354
    %v376 = vunpack.c.l.b16 %v355
    %v377 = vunpack.c.h.b16 %v355
    %v378 = vunpack.c.l.b16 %v356
    %v379 = vunpack.c.h.b16 %v356
    %v380 = vunpack.c.l.b16 %v357
    %v381 = vunpack.c.h.b16 %v357
    %v382 = vpack.c.b16 %v366, %v366
    %v383 = vpack.c.b16 %v367, %v367
    %v384 = vpack.c.b16 %v368, %v368
    %v385 = vpack.c.b16 %v369, %v369
    %v386 = vpack.c.b16 %v370, %v370
    %v387 = vpack.c.b16 %v371, %v371
    %v388 = vpack.c.b16 %v372, %v372
    %v389 = vpack.c.b16 %v373, %v373
    %v390 = vpack.c.b16 %v374, %v374
    %v391 = vpack.c.b16 %v375, %v375
    %v392 = vpack.c.b16 %v376, %v376
    %v393 = vpack.c.b16 %v377, %v377
    %v394 = vpack.c.b16 %v378, %v378
    %v395 = vpack.c.b16 %v379, %v379
    %v396 = vpack.c.b16 %v380, %v380
    %v397 = vpack.c.b16 %v381, %v381
    %414 = vst [vmem:[%s3] sm:$0xf] %v382
    %415 = vst [vmem:[%s3 + $0x4] sm:$0xf] %v383
    %416 = vst [vmem:[%s3 + $0x8] sm:$0xf] %v384
    %417 = vst [vmem:[%s3 + $0xc] sm:$0xf] %v385
    %418 = vst [vmem:[%s3 + $0x10] sm:$0xf] %v386
    %419 = vst [vmem:[%s3 + $0x14] sm:$0xf] %v387
    %420 = vst [vmem:[%s3 + $0x18] sm:$0xf] %v388
    %421 = vst [vmem:[%s3 + $0x1c] sm:$0xf] %v389
    %422 = vst [vmem:[%s3 + $0x20] sm:$0xf] %v390
    %423 = vst [vmem:[%s3 + $0x24] sm:$0xf] %v391
    %424 = vst [vmem:[%s3 + $0x28] sm:$0xf] %v392
    %425 = vst [vmem:[%s3 + $0x2c] sm:$0xf] %v393
    %426 = vst [vmem:[%s3 + $0x30] sm:$0xf] %v394
    %427 = vst [vmem:[%s3 + $0x34] sm:$0xf] %v395
    %428 = vst [vmem:[%s3 + $0x38] sm:$0xf] %v396
    %429 = vst [vmem:[%s3 + $0x3c] sm:$0xf] %v397
  $region21: #{wide_block_forward.8} parent=0 // pred_fallthru
    _
  // Predicated region
  $region22: #{wide_block_forward.8} parent=0 // pred_check
    _
  $region23: #{wide_block_forward.8} parent=0 // pred_check_branch
    %431 = sbr.rel (0) target = $region25
  $region24: #{wide_block_forward.8} parent=0 // pred_region
    _
  $region25: #{wide_block_forward.8} parent=0 // pred_fallthru
    _
  // Predicated region
  $region26: #{wide_block_forward.8} parent=0 // pred_check
    _
  $region27: #{wide_block_forward.8} parent=0 // pred_check_branch
    %433 = sbr.rel (0) target = $region29
  $region28: #{wide_block_forward.8} parent=0 // pred_region
    _
  $region29: #{wide_block_forward.8} parent=0 // pred_fallthru
    _

// kernel: wide_block_forward.7
$region0: #{wide_block_forward.7}
  #allocation0 [shape = 'u32[]', space=smem, size = 0x4, offset = 0x4, fixed_abs, tag = 'smem constant byte address 0x4 - core index']
  #allocation1 [shape = 'u32[144,128]{1,0:T(1,128)}', space=vmem, size = 0x12000, scoped, tag = 'internal scratch']
  %s0 = inlined_call_operand.vmem [shape: f32[512,4], index: 0, kind: input, shape index: {}]
  %s1 = inlined_call_operand.vmem [shape: f32[1,4], index: 1, kind: input, shape index: {}]
  %s2 = inlined_call_operand.vmem [shape: f32[1,4], index: 2, kind: input, shape index: {}]
  %s3 = inlined_call_operand.vmem [shape: bf16[512,4], index: 3, kind: output, shape index: {}]
  %s4 = sld [smem:[#allocation0]]
  $region22: #{wide_block_forward.7} parent=0
    _
  %s6 = ssub.s32 1, %s4
  %s7 = scalar_select 0, %s6, %s4
  // Predicated region
  $region2: #{wide_block_forward.7} parent=0 // pred_check
    _
  $region3: #{wide_block_forward.7} parent=0 // pred_check_branch
    %9 = sbr.rel (0) target = $region5
  $region4: #{wide_block_forward.7} parent=0 // pred_region
    _
  $region5: #{wide_block_forward.7} parent=0 // pred_fallthru
    _
  // Predicated region
  $region6: #{wide_block_forward.7} parent=0 // pred_check
    _
  $region7: #{wide_block_forward.7} parent=0 // pred_check_branch
    %11 = sbr.rel (0) target = $region9
  $region8: #{wide_block_forward.7} parent=0 // pred_region
    _
  $region9: #{wide_block_forward.7} parent=0 // pred_fallthru
    _
  // Predicated region
  $region10: #{wide_block_forward.7} parent=0 // pred_check
    _
  $region11: #{wide_block_forward.7} parent=0 // pred_check_branch
    %13 = sbr.rel (0) target = $region13
  $region12: #{wide_block_forward.7} parent=0 // pred_region
    _
  $region13: #{wide_block_forward.7} parent=0 // pred_fallthru
    _
  %v14 = vld [vmem:[%s0] sm:$0xff]
  %v15 = vld [vmem:[%s0 + $0x8] sm:$0xff]
  %v16 = vld [vmem:[%s0 + $0x10] sm:$0xff]
  %v17 = vld [vmem:[%s0 + $0x18] sm:$0xff]
  %v18 = vld [vmem:[%s0 + $0x20] sm:$0xff]
  %v19 = vld [vmem:[%s0 + $0x28] sm:$0xff]
  %v20 = vld [vmem:[%s0 + $0x30] sm:$0xff]
  %v21 = vld [vmem:[%s0 + $0x38] sm:$0xff]
  %v22 = vld [vmem:[%s0 + $0x40] sm:$0xff]
  %v23 = vld [vmem:[%s0 + $0x48] sm:$0xff]
  %v24 = vld [vmem:[%s0 + $0x50] sm:$0xff]
  %v25 = vld [vmem:[%s0 + $0x58] sm:$0xff]
  %v26 = vld [vmem:[%s0 + $0x60] sm:$0xff]
  %v27 = vld [vmem:[%s0 + $0x68] sm:$0xff]
  %v28 = vld [vmem:[%s0 + $0x70] sm:$0xff]
  %v29 = vld [vmem:[%s0 + $0x78] sm:$0xff]
  %v30 = vld [vmem:[%s0 + $0x80] sm:$0xff]
  %v31 = vld [vmem:[%s0 + $0x88] sm:$0xff]
  %v32 = vld [vmem:[%s0 + $0x90] sm:$0xff]
  %v33 = vld [vmem:[%s0 + $0x98] sm:$0xff]
  %v34 = vld [vmem:[%s0 + $0xa0] sm:$0xff]
  %v35 = vld [vmem:[%s0 + $0xa8] sm:$0xff]
  %v36 = vld [vmem:[%s0 + $0xb0] sm:$0xff]
  %v37 = vld [vmem:[%s0 + $0xb8] sm:$0xff]
  %v38 = vld [vmem:[%s0 + $0xc0] sm:$0xff]
  %v39 = vld [vmem:[%s0 + $0xc8] sm:$0xff]
  %v40 = vld [vmem:[%s0 + $0xd0] sm:$0xff]
  %v41 = vld [vmem:[%s0 + $0xd8] sm:$0xff]
  %v42 = vld [vmem:[%s0 + $0xe0] sm:$0xff]
  %v43 = vld [vmem:[%s0 + $0xe8] sm:$0xff]
  %v44 = vld [vmem:[%s0 + $0xf0] sm:$0xff]
  %v45 = vld [vmem:[%s0 + $0xf8] sm:$0xff]
  %v46 = vld [vmem:[%s0 + $0x100] sm:$0xff]
  %v47 = vld [vmem:[%s0 + $0x108] sm:$0xff]
  %v48 = vld [vmem:[%s0 + $0x110] sm:$0xff]
  %v49 = vld [vmem:[%s0 + $0x118] sm:$0xff]
  %v50 = vld [vmem:[%s0 + $0x120] sm:$0xff]
  %v51 = vld [vmem:[%s0 + $0x128] sm:$0xff]
  %v52 = vld [vmem:[%s0 + $0x130] sm:$0xff]
  %v53 = vld [vmem:[%s0 + $0x138] sm:$0xff]
  %v54 = vld [vmem:[%s0 + $0x140] sm:$0xff]
  %v55 = vld [vmem:[%s0 + $0x148] sm:$0xff]
  %v56 = vld [vmem:[%s0 + $0x150] sm:$0xff]
  %v57 = vld [vmem:[%s0 + $0x158] sm:$0xff]
  %v58 = vld [vmem:[%s0 + $0x160] sm:$0xff]
  %v59 = vld [vmem:[%s0 + $0x168] sm:$0xff]
  %v60 = vld [vmem:[%s0 + $0x170] sm:$0xff]
  %v61 = vld [vmem:[%s0 + $0x178] sm:$0xff]
  %v62 = vld [vmem:[%s0 + $0x180] sm:$0xff]
  %v63 = vld [vmem:[%s0 + $0x188] sm:$0xff]
  %v64 = vld [vmem:[%s0 + $0x190] sm:$0xff]
  %v65 = vld [vmem:[%s0 + $0x198] sm:$0xff]
  %v66 = vld [vmem:[%s0 + $0x1a0] sm:$0xff]
  %v67 = vld [vmem:[%s0 + $0x1a8] sm:$0xff]
  %v68 = vld [vmem:[%s0 + $0x1b0] sm:$0xff]
  %v69 = vld [vmem:[%s0 + $0x1b8] sm:$0xff]
  %v70 = vld [vmem:[%s0 + $0x1c0] sm:$0xff]
  %v71 = vld [vmem:[%s0 + $0x1c8] sm:$0xff]
  %v72 = vld [vmem:[%s0 + $0x1d0] sm:$0xff]
  %v73 = vld [vmem:[%s0 + $0x1d8] sm:$0xff]
  %v74 = vld [vmem:[%s0 + $0x1e0] sm:$0xff]
  %v75 = vld [vmem:[%s0 + $0x1e8] sm:$0xff]
  %v76 = vld [vmem:[%s0 + $0x1f0] sm:$0xff]
  %v77 = vld [vmem:[%s0 + $0x1f8] sm:$0xff]
  %v78 = vld [vmem:[%s1] sm:$0x1]
  %v80 = vlaneseq
  %v81 = vshrl.u32 %v80, 7
  %v82 = vsub.s32 0, %v81
  %v83 = vrot.slane %v78, %v82
  %v85 = vmul.f32 %v14, %v83
  %v86 = vmul.f32 %v15, %v83
  %v87 = vmul.f32 %v16, %v83
  %v88 = vmul.f32 %v17, %v83
  %v89 = vmul.f32 %v18, %v83
  %v90 = vmul.f32 %v19, %v83
  %v91 = vmul.f32 %v20, %v83
  %v92 = vmul.f32 %v21, %v83
  %v93 = vmul.f32 %v22, %v83
  %v94 = vmul.f32 %v23, %v83
  %v95 = vmul.f32 %v24, %v83
  %v96 = vmul.f32 %v25, %v83
  %v97 = vmul.f32 %v26, %v83
  %v98 = vmul.f32 %v27, %v83
  %v99 = vmul.f32 %v28, %v83
  %v100 = vmul.f32 %v29, %v83
  %v101 = vmul.f32 %v30, %v83
  %v102 = vmul.f32 %v31, %v83
  %v103 = vmul.f32 %v32, %v83
  %v104 = vmul.f32 %v33, %v83
  %v105 = vmul.f32 %v34, %v83
  %v106 = vmul.f32 %v35, %v83
  %v107 = vmul.f32 %v36, %v83
  %v108 = vmul.f32 %v37, %v83
  %v109 = vmul.f32 %v38, %v83
  %v110 = vmul.f32 %v39, %v83
  %v111 = vmul.f32 %v40, %v83
  %v112 = vmul.f32 %v41, %v83
  %v113 = vmul.f32 %v42, %v83
  %v114 = vmul.f32 %v43, %v83
  %v115 = vmul.f32 %v44, %v83
  %v116 = vmul.f32 %v45, %v83
  %v117 = vmul.f32 %v46, %v83
  %v118 = vmul.f32 %v47, %v83
  %v119 = vmul.f32 %v48, %v83
  %v120 = vmul.f32 %v49, %v83
  %v121 = vmul.f32 %v50, %v83
  %v122 = vmul.f32 %v51, %v83
  %v123 = vmul.f32 %v52, %v83
  %v124 = vmul.f32 %v53, %v83
  %v125 = vmul.f32 %v54, %v83
  %v126 = vmul.f32 %v55, %v83
  %v127 = vmul.f32 %v56, %v83
  %v128 = vmul.f32 %v57, %v83
  %v129 = vmul.f32 %v58, %v83
  %v130 = vmul.f32 %v59, %v83
  %v131 = vmul.f32 %v60, %v83
  %v132 = vmul.f32 %v61, %v83
  %v133 = vmul.f32 %v62, %v83
  %v134 = vmul.f32 %v63, %v83
  %v135 = vmul.f32 %v64, %v83
  %v136 = vmul.f32 %v65, %v83
  %v137 = vmul.f32 %v66, %v83
  %v138 = vmul.f32 %v67, %v83
  %v139 = vmul.f32 %v68, %v83
  %v140 = vmul.f32 %v69, %v83
  %v141 = vmul.f32 %v70, %v83
  %v142 = vmul.f32 %v71, %v83
  %v143 = vmul.f32 %v72, %v83
  %v144 = vmul.f32 %v73, %v83
  %v145 = vmul.f32 %v74, %v83
  %v146 = vmul.f32 %v75, %v83
  %v147 = vmul.f32 %v76, %v83
  %v148 = vmul.f32 %v77, %v83
  %v149 = vld [vmem:[%s2] sm:$0x1]
  %v151 = vlaneseq
  %v152 = vshrl.u32 %v151, 7
  %v153 = vsub.s32 0, %v152
  %v154 = vrot.slane %v149, %v153
  %v156 = vadd.f32 %v85, %v154
  %v157 = vadd.f32 %v86, %v154
  %v158 = vadd.f32 %v87, %v154
  %v159 = vadd.f32 %v88, %v154
  %v160 = vadd.f32 %v89, %v154
  %v161 = vadd.f32 %v90, %v154
  %v162 = vadd.f32 %v91, %v154
  %v163 = vadd.f32 %v92, %v154
  %v164 = vadd.f32 %v93, %v154
  %v165 = vadd.f32 %v94, %v154
  %v166 = vadd.f32 %v95, %v154
  %v167 = vadd.f32 %v96, %v154
  %v168 = vadd.f32 %v97, %v154
  %v169 = vadd.f32 %v98, %v154
  %v170 = vadd.f32 %v99, %v154
  %v171 = vadd.f32 %v100, %v154
  %v172 = vadd.f32 %v101, %v154
  %v173 = vadd.f32 %v102, %v154
  %v174 = vadd.f32 %v103, %v154
  %v175 = vadd.f32 %v104, %v154
  %v176 = vadd.f32 %v105, %v154
  %v177 = vadd.f32 %v106, %v154
  %v178 = vadd.f32 %v107, %v154
  %v179 = vadd.f32 %v108, %v154
  %v180 = vadd.f32 %v109, %v154
  %v181 = vadd.f32 %v110, %v154
  %v182 = vadd.f32 %v111, %v154
  %v183 = vadd.f32 %v112, %v154
  %v184 = vadd.f32 %v113, %v154
  %v185 = vadd.f32 %v114, %v154
  %v186 = vadd.f32 %v115, %v154
  %v187 = vadd.f32 %v116, %v154
  %v188 = vadd.f32 %v117, %v154
  %v189 = vadd.f32 %v118, %v154
  %v190 = vadd.f32 %v119, %v154
  %v191 = vadd.f32 %v120, %v154
  %v192 = vadd.f32 %v121, %v154
  %v193 = vadd.f32 %v122, %v154
  %v194 = vadd.f32 %v123, %v154
  %v195 = vadd.f32 %v124, %v154
  %v196 = vadd.f32 %v125, %v154
  %v197 = vadd.f32 %v126, %v154
  %v198 = vadd.f32 %v127, %v154
  %v199 = vadd.f32 %v128, %v154
  %v200 = vadd.f32 %v129, %v154
  %v201 = vadd.f32 %v130, %v154
  %v202 = vadd.f32 %v131, %v154
  %v203 = vadd.f32 %v132, %v154
  %v204 = vadd.f32 %v133, %v154
  %v205 = vadd.f32 %v134, %v154
  %v206 = vadd.f32 %v135, %v154
  %v207 = vadd.f32 %v136, %v154
  %v208 = vadd.f32 %v137, %v154
  %v209 = vadd.f32 %v138, %v154
  %v210 = vadd.f32 %v139, %v154
  %v211 = vadd.f32 %v140, %v154
  %v212 = vadd.f32 %v141, %v154
  %v213 = vadd.f32 %v142, %v154
  %v214 = vadd.f32 %v143, %v154
  %v215 = vadd.f32 %v144, %v154
  %v216 = vadd.f32 %v145, %v154
  %v217 = vadd.f32 %v146, %v154
  %v218 = vadd.f32 %v147, %v154
  %v219 = vadd.f32 %v148, %v154
  %v220 = vmax.f32 %v156, 0.0
  %v221 = vmax.f32 %v157, 0.0
  %v222 = vmax.f32 %v158, 0.0
  %v223 = vmax.f32 %v159, 0.0
  %v224 = vmax.f32 %v160, 0.0
  %v225 = vmax.f32 %v161, 0.0
  %v226 = vmax.f32 %v162, 0.0
  %v227 = vmax.f32 %v163, 0.0
  %v228 = vmax.f32 %v164, 0.0
  %v229 = vmax.f32 %v165, 0.0
  %v230 = vmax.f32 %v166, 0.0
  %v231 = vmax.f32 %v167, 0.0
  %v232 = vmax.f32 %v168, 0.0
  %v233 = vmax.f32 %v169, 0.0
  %v234 = vmax.f32 %v170, 0.0
  %v235 = vmax.f32 %v171, 0.0
  %v236 = vmax.f32 %v172, 0.0
  %v237 = vmax.f32 %v173, 0.0
  %v238 = vmax.f32 %v174, 0.0
  %v239 = vmax.f32 %v175, 0.0
  %v240 = vmax.f32 %v176, 0.0
  %v241 = vmax.f32 %v177, 0.0
  %v242 = vmax.f32 %v178, 0.0
  %v243 = vmax.f32 %v179, 0.0
  %v244 = vmax.f32 %v180, 0.0
  %v245 = vmax.f32 %v181, 0.0
  %v246 = vmax.f32 %v182, 0.0
  %v247 = vmax.f32 %v183, 0.0
  %v248 = vmax.f32 %v184, 0.0
  %v249 = vmax.f32 %v185, 0.0
  %v250 = vmax.f32 %v186, 0.0
  %v251 = vmax.f32 %v187, 0.0
  %v252 = vmax.f32 %v188, 0.0
  %v253 = vmax.f32 %v189, 0.0
  %v254 = vmax.f32 %v190, 0.0
  %v255 = vmax.f32 %v191, 0.0
  %v256 = vmax.f32 %v192, 0.0
  %v257 = vmax.f32 %v193, 0.0
  %v258 = vmax.f32 %v194, 0.0
  %v259 = vmax.f32 %v195, 0.0
  %v260 = vmax.f32 %v196, 0.0
  %v261 = vmax.f32 %v197, 0.0
  %v262 = vmax.f32 %v198, 0.0
  %v263 = vmax.f32 %v199, 0.0
  %v264 = vmax.f32 %v200, 0.0
  %v265 = vmax.f32 %v201, 0.0
  %v266 = vmax.f32 %v202, 0.0
  %v267 = vmax.f32 %v203, 0.0
  %v268 = vmax.f32 %v204, 0.0
  %v269 = vmax.f32 %v205, 0.0
  %v270 = vmax.f32 %v206, 0.0
  %v271 = vmax.f32 %v207, 0.0
  %v272 = vmax.f32 %v208, 0.0
  %v273 = vmax.f32 %v209, 0.0
  %v274 = vmax.f32 %v210, 0.0
  %v275 = vmax.f32 %v211, 0.0
  %v276 = vmax.f32 %v212, 0.0
  %v277 = vmax.f32 %v213, 0.0
  %v278 = vmax.f32 %v214, 0.0
  %v279 = vmax.f32 %v215, 0.0
  %v280 = vmax.f32 %v216, 0.0
  %v281 = vmax.f32 %v217, 0.0
  %v282 = vmax.f32 %v218, 0.0
  %v283 = vmax.f32 %v219, 0.0
  %v284 = vpack.c.bf16 %v221, %v220
  %v285 = vpack.c.bf16 %v223, %v222
  %v286 = vpack.c.bf16 %v225, %v224
  %v287 = vpack.c.bf16 %v227, %v226
  %v288 = vpack.c.bf16 %v229, %v228
  %v289 = vpack.c.bf16 %v231, %v230
  %v290 = vpack.c.bf16 %v233, %v232
  %v291 = vpack.c.bf16 %v235, %v234
  %v292 = vpack.c.bf16 %v237, %v236
  %v293 = vpack.c.bf16 %v239, %v238
  %v294 = vpack.c.bf16 %v241, %v240
  %v295 = vpack.c.bf16 %v243, %v242
  %v296 = vpack.c.bf16 %v245, %v244
  %v297 = vpack.c.bf16 %v247, %v246
  %v298 = vpack.c.bf16 %v249, %v248
  %v299 = vpack.c.bf16 %v251, %v250
  %v300 = vpack.c.bf16 %v253, %v252
  %v301 = vpack.c.bf16 %v255, %v254
  %v302 = vpack.c.bf16 %v257, %v256
  %v303 = vpack.c.bf16 %v259, %v258
  %v304 = vpack.c.bf16 %v261, %v260
  %v305 = vpack.c.bf16 %v263, %v262
  %v306 = vpack.c.bf16 %v265, %v264
  %v307 = vpack.c.bf16 %v267, %v266
  %v308 = vpack.c.bf16 %v269, %v268
  %v309 = vpack.c.bf16 %v271, %v270
  %v310 = vpack.c.bf16 %v273, %v272
  %v311 = vpack.c.bf16 %v275, %v274
  %v312 = vpack.c.bf16 %v277, %v276
  %v313 = vpack.c.bf16 %v279, %v278
  %v314 = vpack.c.bf16 %v281, %v280
  %v315 = vpack.c.bf16 %v283, %v282
  %v348 = vunpack.c.l.b16 %v284
  %v349 = vunpack.c.h.b16 %v284
  %v350 = vunpack.c.l.b16 %v285
  %v351 = vunpack.c.h.b16 %v285
  %v352 = vunpack.c.l.b16 %v286
  %v353 = vunpack.c.h.b16 %v286
  %v354 = vunpack.c.l.b16 %v287
  %v355 = vunpack.c.h.b16 %v287
  %v356 = vunpack.c.l.b16 %v288
  %v357 = vunpack.c.h.b16 %v288
  %v358 = vunpack.c.l.b16 %v289
  %v359 = vunpack.c.h.b16 %v289
  %v360 = vunpack.c.l.b16 %v290
  %v361 = vunpack.c.h.b16 %v290
  %v362 = vunpack.c.l.b16 %v291
  %v363 = vunpack.c.h.b16 %v291
  %v364 = vunpack.c.l.b16 %v292
  %v365 = vunpack.c.h.b16 %v292
  %v366 = vunpack.c.l.b16 %v293
  %v367 = vunpack.c.h.b16 %v293
  %v368 = vunpack.c.l.b16 %v294
  %v369 = vunpack.c.h.b16 %v294
  %v370 = vunpack.c.l.b16 %v295
  %v371 = vunpack.c.h.b16 %v295
  %v372 = vunpack.c.l.b16 %v296
  %v373 = vunpack.c.h.b16 %v296
  %v374 = vunpack.c.l.b16 %v297
  %v375 = vunpack.c.h.b16 %v297
  %v376 = vunpack.c.l.b16 %v298
  %v377 = vunpack.c.h.b16 %v298
  %v378 = vunpack.c.l.b16 %v299
  %v379 = vunpack.c.h.b16 %v299
  %v380 = vunpack.c.l.b16 %v300
  %v381 = vunpack.c.h.b16 %v300
  %v382 = vunpack.c.l.b16 %v301
  %v383 = vunpack.c.h.b16 %v301
  %v384 = vunpack.c.l.b16 %v302
  %v385 = vunpack.c.h.b16 %v302
  %v386 = vunpack.c.l.b16 %v303
  %v387 = vunpack.c.h.b16 %v303
  %v388 = vunpack.c.l.b16 %v304
  %v389 = vunpack.c.h.b16 %v304
  %v390 = vunpack.c.l.b16 %v305
  %v391 = vunpack.c.h.b16 %v305
  %v392 = vunpack.c.l.b16 %v306
  %v393 = vunpack.c.h.b16 %v306
  %v394 = vunpack.c.l.b16 %v307
  %v395 = vunpack.c.h.b16 %v307
  %v396 = vunpack.c.l.b16 %v308
  %v397 = vunpack.c.h.b16 %v308
  %v398 = vunpack.c.l.b16 %v309
  %v399 = vunpack.c.h.b16 %v309
  %v400 = vunpack.c.l.b16 %v310
  %v401 = vunpack.c.h.b16 %v310
  %v402 = vunpack.c.l.b16 %v311
  %v403 = vunpack.c.h.b16 %v311
  %v404 = vunpack.c.l.b16 %v312
  %v405 = vunpack.c.h.b16 %v312
  %v406 = vunpack.c.l.b16 %v313
  %v407 = vunpack.c.h.b16 %v313
  %v408 = vunpack.c.l.b16 %v314
  %v409 = vunpack.c.h.b16 %v314
  %v410 = vunpack.c.l.b16 %v315
  %v411 = vunpack.c.h.b16 %v315
  %v412 = vpack.c.b16 %v348, %v348
  %v413 = vpack.c.b16 %v349, %v349
  %v414 = vpack.c.b16 %v350, %v350
  %v415 = vpack.c.b16 %v351, %v351
  %v416 = vpack.c.b16 %v352, %v352
  %v417 = vpack.c.b16 %v353, %v353
  %v418 = vpack.c.b16 %v354, %v354
  %v419 = vpack.c.b16 %v355, %v355
  %v420 = vpack.c.b16 %v356, %v356
  %v421 = vpack.c.b16 %v357, %v357
  %v422 = vpack.c.b16 %v358, %v358
  %v423 = vpack.c.b16 %v359, %v359
  %v424 = vpack.c.b16 %v360, %v360
  %v425 = vpack.c.b16 %v361, %v361
  %v426 = vpack.c.b16 %v362, %v362
  %v427 = vpack.c.b16 %v363, %v363
  %v428 = vpack.c.b16 %v364, %v364
  %v429 = vpack.c.b16 %v365, %v365
  %v430 = vpack.c.b16 %v366, %v366
  %v431 = vpack.c.b16 %v367, %v367
  %v432 = vpack.c.b16 %v368, %v368
  %v433 = vpack.c.b16 %v369, %v369
  %v434 = vpack.c.b16 %v370, %v370
  %v435 = vpack.c.b16 %v371, %v371
  %v436 = vpack.c.b16 %v372, %v372
  %v437 = vpack.c.b16 %v373, %v373
  %v438 = vpack.c.b16 %v374, %v374
  %v439 = vpack.c.b16 %v375, %v375
  %v440 = vpack.c.b16 %v376, %v376
  %v441 = vpack.c.b16 %v377, %v377
  %v442 = vpack.c.b16 %v378, %v378
  %v443 = vpack.c.b16 %v379, %v379
  %v444 = vpack.c.b16 %v380, %v380
  %v445 = vpack.c.b16 %v381, %v381
  %v446 = vpack.c.b16 %v382, %v382
  %v447 = vpack.c.b16 %v383, %v383
  %v448 = vpack.c.b16 %v384, %v384
  %v449 = vpack.c.b16 %v385, %v385
  %v450 = vpack.c.b16 %v386, %v386
  %v451 = vpack.c.b16 %v387, %v387
  %v452 = vpack.c.b16 %v388, %v388
  %v453 = vpack.c.b16 %v389, %v389
  %v454 = vpack.c.b16 %v390, %v390
  %v455 = vpack.c.b16 %v391, %v391
  %v456 = vpack.c.b16 %v392, %v392
  %v457 = vpack.c.b16 %v393, %v393
  %v458 = vpack.c.b16 %v394, %v394
  %v459 = vpack.c.b16 %v395, %v395
  %v460 = vpack.c.b16 %v396, %v396
  %v461 = vpack.c.b16 %v397, %v397
  %v462 = vpack.c.b16 %v398, %v398
  %v463 = vpack.c.b16 %v399, %v399
  %v464 = vpack.c.b16 %v400, %v400
  %v465 = vpack.c.b16 %v401, %v401
  %v466 = vpack.c.b16 %v402, %v402
  %v467 = vpack.c.b16 %v403, %v403
  %v468 = vpack.c.b16 %v404, %v404
  %v469 = vpack.c.b16 %v405, %v405
  %v470 = vpack.c.b16 %v406, %v406
  %v471 = vpack.c.b16 %v407, %v407
  %v472 = vpack.c.b16 %v408, %v408
  %v473 = vpack.c.b16 %v409, %v409
  %v474 = vpack.c.b16 %v410, %v410
  %v475 = vpack.c.b16 %v411, %v411
  %vm540 = vcmask 27648
  %541 = vst.msk [vmem:[%s3] sm:$0xf] %vm540, %v412
  %542 = vst.msk [vmem:[%s3 + $0x4] sm:$0xf] %vm540, %v413
  %543 = vst.msk [vmem:[%s3 + $0x8] sm:$0xf] %vm540, %v414
  %544 = vst.msk [vmem:[%s3 + $0xc] sm:$0xf] %vm540, %v415
  %545 = vst.msk [vmem:[%s3 + $0x10] sm:$0xf] %vm540, %v416
  %546 = vst.msk [vmem:[%s3 + $0x14] sm:$0xf] %vm540, %v417
  %547 = vst.msk [vmem:[%s3 + $0x18] sm:$0xf] %vm540, %v418
  %548 = vst.msk [vmem:[%s3 + $0x1c] sm:$0xf] %vm540, %v419
  %549 = vst.msk [vmem:[%s3 + $0x20] sm:$0xf] %vm540, %v420
  %550 = vst.msk [vmem:[%s3 + $0x24] sm:$0xf] %vm540, %v421
  %551 = vst.msk [vmem:[%s3 + $0x28] sm:$0xf] %vm540, %v422
  %552 = vst.msk [vmem:[%s3 + $0x2c] sm:$0xf] %vm540, %v423
  %553 = vst.msk [vmem:[%s3 + $0x30] sm:$0xf] %vm540, %v424
  %554 = vst.msk [vmem:[%s3 + $0x34] sm:$0xf] %vm540, %v425
  %555 = vst.msk [vmem:[%s3 + $0x38] sm:$0xf] %vm540, %v426
  %556 = vst.msk [vmem:[%s3 + $0x3c] sm:$0xf] %vm540, %v427
  %557 = vst.msk [vmem:[%s3 + $0x40] sm:$0xf] %vm540, %v428
  %558 = vst.msk [vmem:[%s3 + $0x44] sm:$0xf] %vm540, %v429
  %559 = vst.msk [vmem:[%s3 + $0x48] sm:$0xf] %vm540, %v430
  %560 = vst.msk [vmem:[%s3 + $0x4c] sm:$0xf] %vm540, %v431
  %561 = vst.msk [vmem:[%s3 + $0x50] sm:$0xf] %vm540, %v432
  %562 = vst.msk [vmem:[%s3 + $0x54] sm:$0xf] %vm540, %v433
  %563 = vst.msk [vmem:[%s3 + $0x58] sm:$0xf] %vm540, %v434
  %564 = vst.msk [vmem:[%s3 + $0x5c] sm:$0xf] %vm540, %v435
  %565 = vst.msk [vmem:[%s3 + $0x60] sm:$0xf] %vm540, %v436
  %566 = vst.msk [vmem:[%s3 + $0x64] sm:$0xf] %vm540, %v437
  %567 = vst.msk [vmem:[%s3 + $0x68] sm:$0xf] %vm540, %v438
  %568 = vst.msk [vmem:[%s3 + $0x6c] sm:$0xf] %vm540, %v439
  %569 = vst.msk [vmem:[%s3 + $0x70] sm:$0xf] %vm540, %v440
  %570 = vst.msk [vmem:[%s3 + $0x74] sm:$0xf] %vm540, %v441
  %571 = vst.msk [vmem:[%s3 + $0x78] sm:$0xf] %vm540, %v442
  %572 = vst.msk [vmem:[%s3 + $0x7c] sm:$0xf] %vm540, %v443
  %573 = vst.msk [vmem:[%s3 + $0x80] sm:$0xf] %vm540, %v444
  %574 = vst.msk [vmem:[%s3 + $0x84] sm:$0xf] %vm540, %v445
  %575 = vst.msk [vmem:[%s3 + $0x88] sm:$0xf] %vm540, %v446
  %576 = vst.msk [vmem:[%s3 + $0x8c] sm:$0xf] %vm540, %v447
  %577 = vst.msk [vmem:[%s3 + $0x90] sm:$0xf] %vm540, %v448
  %578 = vst.msk [vmem:[%s3 + $0x94] sm:$0xf] %vm540, %v449
  %579 = vst.msk [vmem:[%s3 + $0x98] sm:$0xf] %vm540, %v450
  %580 = vst.msk [vmem:[%s3 + $0x9c] sm:$0xf] %vm540, %v451
  %581 = vst.msk [vmem:[%s3 + $0xa0] sm:$0xf] %vm540, %v452
  %582 = vst.msk [vmem:[%s3 + $0xa4] sm:$0xf] %vm540, %v453
  %583 = vst.msk [vmem:[%s3 + $0xa8] sm:$0xf] %vm540, %v454
  %584 = vst.msk [vmem:[%s3 + $0xac] sm:$0xf] %vm540, %v455
  %585 = vst.msk [vmem:[%s3 + $0xb0] sm:$0xf] %vm540, %v456
  %586 = vst.msk [vmem:[%s3 + $0xb4] sm:$0xf] %vm540, %v457
  %587 = vst.msk [vmem:[%s3 + $0xb8] sm:$0xf] %vm540, %v458
  %588 = vst.msk [vmem:[%s3 + $0xbc] sm:$0xf] %vm540, %v459
  %589 = vst.msk [vmem:[%s3 + $0xc0] sm:$0xf] %vm540, %v460
  %590 = vst.msk [vmem:[%s3 + $0xc4] sm:$0xf] %vm540, %v461
  %591 = vst.msk [vmem:[%s3 + $0xc8] sm:$0xf] %vm540, %v462
  %592 = vst.msk [vmem:[%s3 + $0xcc] sm:$0xf] %vm540, %v463
  %593 = vst.msk [vmem:[%s3 + $0xd0] sm:$0xf] %vm540, %v464
  %594 = vst.msk [vmem:[%s3 + $0xd4] sm:$0xf] %vm540, %v465
  %595 = vst.msk [vmem:[%s3 + $0xd8] sm:$0xf] %vm540, %v466
  %596 = vst.msk [vmem:[%s3 + $0xdc] sm:$0xf] %vm540, %v467
  %597 = vst.msk [vmem:[%s3 + $0xe0] sm:$0xf] %vm540, %v468
  %598 = vst.msk [vmem:[%s3 + $0xe4] sm:$0xf] %vm540, %v469
  %599 = vst.msk [vmem:[%s3 + $0xe8] sm:$0xf] %vm540, %v470
  %600 = vst.msk [vmem:[%s3 + $0xec] sm:$0xf] %vm540, %v471
  %601 = vst.msk [vmem:[%s3 + $0xf0] sm:$0xf] %vm540, %v472
  %602 = vst.msk [vmem:[%s3 + $0xf4] sm:$0xf] %vm540, %v473
  %603 = vst.msk [vmem:[%s3 + $0xf8] sm:$0xf] %vm540, %v474
  %604 = vst.msk [vmem:[%s3 + $0xfc] sm:$0xf] %vm540, %v475
  // Predicated region
  $region14: #{wide_block_forward.7} parent=0 // pred_check
    _
  $region15: #{wide_block_forward.7} parent=0 // pred_check_branch
    %606 = sbr.rel (0) target = $region17
  $region16: #{wide_block_forward.7} parent=0 // pred_region
    _
  $region17: #{wide_block_forward.7} parent=0 // pred_fallthru
    _
  // Predicated region
  $region18: #{wide_block_forward.7} parent=0 // pred_check
    _
  $region19: #{wide_block_forward.7} parent=0 // pred_check_branch
    %608 = sbr.rel (0) target = $region21
  $region20: #{wide_block_forward.7} parent=0 // pred_region
    _
  $region21: #{wide_block_forward.7} parent=0 // pred_fallthru
    _

// kernel: wide_block_forward.10
$region0: #{wide_block_forward.10}
  #allocation0 [shape = 'u32[]', space=smem, size = 0x4, offset = 0x4, fixed_abs, tag = 'smem constant byte address 0x4 - core index']
  #allocation1 [shape = 'u32[144,128]{1,0:T(1,128)}', space=vmem, size = 0x12000, scoped, tag = 'internal scratch']
  %s0 = inlined_call_operand.vmem [shape: bf16[128,128], index: 0, kind: input, shape index: {}]
  %s1 = inlined_call_operand.vmem [shape: f32[1,128], index: 1, kind: input, shape index: {}]
  %s2 = inlined_call_operand.vmem [shape: f32[1,128], index: 2, kind: input, shape index: {}]
  %s3 = inlined_call_operand.vmem [shape: bf16[128,128], index: 3, kind: output, shape index: {}]
  %s4 = sld [smem:[#allocation0]]
  $region22: #{wide_block_forward.10} parent=0
    _
  %s6 = ssub.s32 1, %s4
  %s7 = scalar_select 0, %s6, %s4
  // Predicated region
  $region2: #{wide_block_forward.10} parent=0 // pred_check
    _
  $region3: #{wide_block_forward.10} parent=0 // pred_check_branch
    %9 = sbr.rel (0) target = $region5
  $region4: #{wide_block_forward.10} parent=0 // pred_region
    _
  $region5: #{wide_block_forward.10} parent=0 // pred_fallthru
    _
  // Predicated region
  $region6: #{wide_block_forward.10} parent=0 // pred_check
    _
  $region7: #{wide_block_forward.10} parent=0 // pred_check_branch
    %11 = sbr.rel (0) target = $region9
  $region8: #{wide_block_forward.10} parent=0 // pred_region
    _
  $region9: #{wide_block_forward.10} parent=0 // pred_fallthru
    _
  // Predicated region
  $region10: #{wide_block_forward.10} parent=0 // pred_check
    _
  $region11: #{wide_block_forward.10} parent=0 // pred_check_branch
    %13 = sbr.rel (0) target = $region13
  $region12: #{wide_block_forward.10} parent=0 // pred_region
    _
  $region13: #{wide_block_forward.10} parent=0 // pred_fallthru
    _
  %v14 = vld [vmem:[%s0] sm:$0xf]
  %v15 = vld [vmem:[%s0 + $0x4] sm:$0xf]
  %v16 = vld [vmem:[%s0 + $0x8] sm:$0xf]
  %v17 = vld [vmem:[%s0 + $0xc] sm:$0xf]
  %v18 = vld [vmem:[%s0 + $0x10] sm:$0xf]
  %v19 = vld [vmem:[%s0 + $0x14] sm:$0xf]
  %v20 = vld [vmem:[%s0 + $0x18] sm:$0xf]
  %v21 = vld [vmem:[%s0 + $0x1c] sm:$0xf]
  %v22 = vld [vmem:[%s0 + $0x20] sm:$0xf]
  %v23 = vld [vmem:[%s0 + $0x24] sm:$0xf]
  %v24 = vld [vmem:[%s0 + $0x28] sm:$0xf]
  %v25 = vld [vmem:[%s0 + $0x2c] sm:$0xf]
  %v26 = vld [vmem:[%s0 + $0x30] sm:$0xf]
  %v27 = vld [vmem:[%s0 + $0x34] sm:$0xf]
  %v28 = vld [vmem:[%s0 + $0x38] sm:$0xf]
  %v29 = vld [vmem:[%s0 + $0x3c] sm:$0xf]
  %v30 = vunpack.c.l.bf16 %v14
  %v31 = vunpack.c.l.bf16 %v15
  %v32 = vunpack.c.l.bf16 %v16
  %v33 = vunpack.c.l.bf16 %v17
  %v34 = vunpack.c.l.bf16 %v18
  %v35 = vunpack.c.l.bf16 %v19
  %v36 = vunpack.c.l.bf16 %v20
  %v37 = vunpack.c.l.bf16 %v21
  %v38 = vunpack.c.l.bf16 %v22
  %v39 = vunpack.c.l.bf16 %v23
  %v40 = vunpack.c.l.bf16 %v24
  %v41 = vunpack.c.l.bf16 %v25
  %v42 = vunpack.c.l.bf16 %v26
  %v43 = vunpack.c.l.bf16 %v27
  %v44 = vunpack.c.l.bf16 %v28
  %v45 = vunpack.c.l.bf16 %v29
  %v46 = vld [vmem:[%s1] sm:$0x1]
  %v48 = vlaneseq
  %v49 = vshrl.u32 %v48, 7
  %v50 = vsub.s32 0, %v49
  %v51 = vrot.slane %v46, %v50
  %v53 = vmul.f32 %v30, %v51
  %v54 = vmul.f32 %v31, %v51
  %v55 = vmul.f32 %v32, %v51
  %v56 = vmul.f32 %v33, %v51
  %v57 = vmul.f32 %v34, %v51
  %v58 = vmul.f32 %v35, %v51
  %v59 = vmul.f32 %v36, %v51
  %v60 = vmul.f32 %v37, %v51
  %v61 = vmul.f32 %v38, %v51
  %v62 = vmul.f32 %v39, %v51
  %v63 = vmul.f32 %v40, %v51
  %v64 = vmul.f32 %v41, %v51
  %v65 = vmul.f32 %v42, %v51
  %v66 = vmul.f32 %v43, %v51
  %v67 = vmul.f32 %v44, %v51
  %v68 = vmul.f32 %v45, %v51
  %v69 = vld [vmem:[%s2] sm:$0x1]
  %v71 = vlaneseq
  %v72 = vshrl.u32 %v71, 7
  %v73 = vsub.s32 0, %v72
  %v74 = vrot.slane %v69, %v73
  %v76 = vadd.f32 %v53, %v74
  %v77 = vadd.f32 %v54, %v74
  %v78 = vadd.f32 %v55, %v74
  %v79 = vadd.f32 %v56, %v74
  %v80 = vadd.f32 %v57, %v74
  %v81 = vadd.f32 %v58, %v74
  %v82 = vadd.f32 %v59, %v74
  %v83 = vadd.f32 %v60, %v74
  %v84 = vadd.f32 %v61, %v74
  %v85 = vadd.f32 %v62, %v74
  %v86 = vadd.f32 %v63, %v74
  %v87 = vadd.f32 %v64, %v74
  %v88 = vadd.f32 %v65, %v74
  %v89 = vadd.f32 %v66, %v74
  %v90 = vadd.f32 %v67, %v74
  %v91 = vadd.f32 %v68, %v74
  %v92 = vmax.f32 %v76, 0.0
  %v93 = vmax.f32 %v77, 0.0
  %v94 = vmax.f32 %v78, 0.0
  %v95 = vmax.f32 %v79, 0.0
  %v96 = vmax.f32 %v80, 0.0
  %v97 = vmax.f32 %v81, 0.0
  %v98 = vmax.f32 %v82, 0.0
  %v99 = vmax.f32 %v83, 0.0
  %v100 = vmax.f32 %v84, 0.0
  %v101 = vmax.f32 %v85, 0.0
  %v102 = vmax.f32 %v86, 0.0
  %v103 = vmax.f32 %v87, 0.0
  %v104 = vmax.f32 %v88, 0.0
  %v105 = vmax.f32 %v89, 0.0
  %v106 = vmax.f32 %v90, 0.0
  %v107 = vmax.f32 %v91, 0.0
  %v108 = vpack.c.bf16 %v93, %v92
  %v109 = vpack.c.bf16 %v95, %v94
  %v110 = vpack.c.bf16 %v97, %v96
  %v111 = vpack.c.bf16 %v99, %v98
  %v112 = vpack.c.bf16 %v101, %v100
  %v113 = vpack.c.bf16 %v103, %v102
  %v114 = vpack.c.bf16 %v105, %v104
  %v115 = vpack.c.bf16 %v107, %v106
  %v124 = vunpack.c.l.b16 %v108
  %v125 = vunpack.c.h.b16 %v108
  %v126 = vunpack.c.l.b16 %v109
  %v127 = vunpack.c.h.b16 %v109
  %v128 = vunpack.c.l.b16 %v110
  %v129 = vunpack.c.h.b16 %v110
  %v130 = vunpack.c.l.b16 %v111
  %v131 = vunpack.c.h.b16 %v111
  %v132 = vunpack.c.l.b16 %v112
  %v133 = vunpack.c.h.b16 %v112
  %v134 = vunpack.c.l.b16 %v113
  %v135 = vunpack.c.h.b16 %v113
  %v136 = vunpack.c.l.b16 %v114
  %v137 = vunpack.c.h.b16 %v114
  %v138 = vunpack.c.l.b16 %v115
  %v139 = vunpack.c.h.b16 %v115
  %v140 = vpack.c.b16 %v124, %v124
  %v141 = vpack.c.b16 %v125, %v125
  %v142 = vpack.c.b16 %v126, %v126
  %v143 = vpack.c.b16 %v127, %v127
  %v144 = vpack.c.b16 %v128, %v128
  %v145 = vpack.c.b16 %v129, %v129
  %v146 = vpack.c.b16 %v130, %v130
  %v147 = vpack.c.b16 %v131, %v131
  %v148 = vpack.c.b16 %v132, %v132
  %v149 = vpack.c.b16 %v133, %v133
  %v150 = vpack.c.b16 %v134, %v134
  %v151 = vpack.c.b16 %v135, %v135
  %v152 = vpack.c.b16 %v136, %v136
  %v153 = vpack.c.b16 %v137, %v137
  %v154 = vpack.c.b16 %v138, %v138
  %v155 = vpack.c.b16 %v139, %v139
  %172 = vst [vmem:[%s3] sm:$0xf] %v140
  %173 = vst [vmem:[%s3 + $0x4] sm:$0xf] %v141
  %174 = vst [vmem:[%s3 + $0x8] sm:$0xf] %v142
  %175 = vst [vmem:[%s3 + $0xc] sm:$0xf] %v143
  %176 = vst [vmem:[%s3 + $0x10] sm:$0xf] %v144
  %177 = vst [vmem:[%s3 + $0x14] sm:$0xf] %v145
  %178 = vst [vmem:[%s3 + $0x18] sm:$0xf] %v146
  %179 = vst [vmem:[%s3 + $0x1c] sm:$0xf] %v147
  %180 = vst [vmem:[%s3 + $0x20] sm:$0xf] %v148
  %181 = vst [vmem:[%s3 + $0x24] sm:$0xf] %v149
  %182 = vst [vmem:[%s3 + $0x28] sm:$0xf] %v150
  %183 = vst [vmem:[%s3 + $0x2c] sm:$0xf] %v151
  %184 = vst [vmem:[%s3 + $0x30] sm:$0xf] %v152
  %185 = vst [vmem:[%s3 + $0x34] sm:$0xf] %v153
  %186 = vst [vmem:[%s3 + $0x38] sm:$0xf] %v154
  %187 = vst [vmem:[%s3 + $0x3c] sm:$0xf] %v155
  // Predicated region
  $region14: #{wide_block_forward.10} parent=0 // pred_check
    _
  $region15: #{wide_block_forward.10} parent=0 // pred_check_branch
    %189 = sbr.rel (0) target = $region17
  $region16: #{wide_block_forward.10} parent=0 // pred_region
    _
  $region17: #{wide_block_forward.10} parent=0 // pred_fallthru
    _
  // Predicated region
  $region18: #{wide_block_forward.10} parent=0 // pred_check
    _
  $region19: #{wide_block_forward.10} parent=0 // pred_check_branch
    %191 = sbr.rel (0) target = $region21
  $region20: #{wide_block_forward.10} parent=0 // pred_region
    _
  $region21: #{wide_block_forward.10} parent=0 // pred_fallthru
    _

// kernel: wide_block_forward.9
$region0: #{wide_block_forward.9}
  #allocation0 [shape = 'u32[]', space=smem, size = 0x4, offset = 0x4, fixed_abs, tag = 'smem constant byte address 0x4 - core index']
  #allocation1 [shape = 'u32[144,128]{1,0:T(1,128)}', space=vmem, size = 0x12000, scoped, tag = 'internal scratch']
  #allocation2 [shape = 'f32[128,128]{1,0:T(8,128)}', space=vmem, size = 0x10000, scoped, tag = 'scratch operand']
  %s0 = inlined_call_operand.vmem [shape: bf16[128,128], index: 0, kind: input, shape index: {}]
  %s1 = inlined_call_operand.vmem [shape: bf16[128,128], index: 1, kind: input, shape index: {}]
  %s2 = inlined_call_operand.vmem [shape: f32[1,128], index: 2, kind: input, shape index: {}]
  %s3 = inlined_call_operand.vmem [shape: bf16[128,128], index: 3, kind: output, shape index: {0}]
  %s4 = inlined_call_operand.vmem [shape: f32[8,128], index: 4, kind: output, shape index: {1}]
  %s5 = inlined_call_operand.vmem [shape: f32[8,128], index: 5, kind: output, shape index: {2}]
  %6 = xla_tuple %s3, %s4, %s5
  %s7 = sld [smem:[#allocation0]]
  $region46: #{wide_block_forward.9} parent=0
    _
  %s9 = ssub.s32 1, %s7
  %s10 = scalar_select 0, %s9, %s7
  // Predicated region
  $region2: #{wide_block_forward.9} parent=0 // pred_check
    _
  $region3: #{wide_block_forward.9} parent=0 // pred_check_branch
    %12 = sbr.rel (0) target = $region5
  $region4: #{wide_block_forward.9} parent=0 // pred_region
    _
  $region5: #{wide_block_forward.9} parent=0 // pred_fallthru
    _
  // Predicated region
  $region6: #{wide_block_forward.9} parent=0 // pred_check
    _
  $region7: #{wide_block_forward.9} parent=0 // pred_check_branch
    %14 = sbr.rel (0) target = $region9
  $region8: #{wide_block_forward.9} parent=0 // pred_region
    _
  $region9: #{wide_block_forward.9} parent=0 // pred_fallthru
    _
  // Predicated region
  $region10: #{wide_block_forward.9} parent=0 // pred_check
    _
  $region11: #{wide_block_forward.9} parent=0 // pred_check_branch
    %16 = sbr.rel (0) target = $region13
  $region12: #{wide_block_forward.9} parent=0 // pred_region
    _
  $region13: #{wide_block_forward.9} parent=0 // pred_fallthru
    _
  %p18 = scmp.eq.s32.totalorder 0, 0
  // Predicated region
  $region14: #{wide_block_forward.9} parent=0 // pred_check
    %p19 = pneg %p18
  $region15: #{wide_block_forward.9} parent=0 // pred_check_branch
    %21 = sbr.rel (%p19) target = $region17
  $region16: #{wide_block_forward.9} parent=0 // pred_region
    %22 = vst [vmem:[#allocation2] sm:$0xff] 0.0
    %23 = vst [vmem:[#allocation2 + $0x8] sm:$0xff] 0.0
    %24 = vst [vmem:[#allocation2 + $0x10] sm:$0xff] 0.0
    %25 = vst [vmem:[#allocation2 + $0x18] sm:$0xff] 0.0
    %26 = vst [vmem:[#allocation2 + $0x20] sm:$0xff] 0.0
    %27 = vst [vmem:[#allocation2 + $0x28] sm:$0xff] 0.0
    %28 = vst [vmem:[#allocation2 + $0x30] sm:$0xff] 0.0
    %29 = vst [vmem:[#allocation2 + $0x38] sm:$0xff] 0.0
    %30 = vst [vmem:[#allocation2 + $0x40] sm:$0xff] 0.0
    %31 = vst [vmem:[#allocation2 + $0x48] sm:$0xff] 0.0
    %32 = vst [vmem:[#allocation2 + $0x50] sm:$0xff] 0.0
    %33 = vst [vmem:[#allocation2 + $0x58] sm:$0xff] 0.0
    %34 = vst [vmem:[#allocation2 + $0x60] sm:$0xff] 0.0
    %35 = vst [vmem:[#allocation2 + $0x68] sm:$0xff] 0.0
    %36 = vst [vmem:[#allocation2 + $0x70] sm:$0xff] 0.0
    %37 = vst [vmem:[#allocation2 + $0x78] sm:$0xff] 0.0
  $region17: #{wide_block_forward.9} parent=0 // pred_fallthru
    _
  %v38 = vld [vmem:[#allocation2] sm:$0xff]
  %v39 = vld [vmem:[#allocation2 + $0x8] sm:$0xff]
  %v40 = vld [vmem:[#allocation2 + $0x10] sm:$0xff]
  %v41 = vld [vmem:[#allocation2 + $0x18] sm:$0xff]
  %v42 = vld [vmem:[#allocation2 + $0x20] sm:$0xff]
  %v43 = vld [vmem:[#allocation2 + $0x28] sm:$0xff]
  %v44 = vld [vmem:[#allocation2 + $0x30] sm:$0xff]
  %v45 = vld [vmem:[#allocation2 + $0x38] sm:$0xff]
  %v46 = vld [vmem:[#allocation2 + $0x40] sm:$0xff]
  %v47 = vld [vmem:[#allocation2 + $0x48] sm:$0xff]
  %v48 = vld [vmem:[#allocation2 + $0x50] sm:$0xff]
  %v49 = vld [vmem:[#allocation2 + $0x58] sm:$0xff]
  %v50 = vld [vmem:[#allocation2 + $0x60] sm:$0xff]
  %v51 = vld [vmem:[#allocation2 + $0x68] sm:$0xff]
  %v52 = vld [vmem:[#allocation2 + $0x70] sm:$0xff]
  %v53 = vld [vmem:[#allocation2 + $0x78] sm:$0xff]
  %v54 = vld [vmem:[%s0] sm:$0xf]
  %v55 = vld [vmem:[%s0 + $0x4] sm:$0xf]
  %v56 = vld [vmem:[%s0 + $0x8] sm:$0xf]
  %v57 = vld [vmem:[%s0 + $0xc] sm:$0xf]
  %v58 = vld [vmem:[%s0 + $0x10] sm:$0xf]
  %v59 = vld [vmem:[%s0 + $0x14] sm:$0xf]
  %v60 = vld [vmem:[%s0 + $0x18] sm:$0xf]
  %v61 = vld [vmem:[%s0 + $0x1c] sm:$0xf]
  %v62 = vld [vmem:[%s0 + $0x20] sm:$0xf]
  %v63 = vld [vmem:[%s0 + $0x24] sm:$0xf]
  %v64 = vld [vmem:[%s0 + $0x28] sm:$0xf]
  %v65 = vld [vmem:[%s0 + $0x2c] sm:$0xf]
  %v66 = vld [vmem:[%s0 + $0x30] sm:$0xf]
  %v67 = vld [vmem:[%s0 + $0x34] sm:$0xf]
  %v68 = vld [vmem:[%s0 + $0x38] sm:$0xf]
  %v69 = vld [vmem:[%s0 + $0x3c] sm:$0xf]
  %v70 = vld [vmem:[%s1] sm:$0xf]
  %v71 = vld [vmem:[%s1 + $0x4] sm:$0xf]
  %v72 = vld [vmem:[%s1 + $0x8] sm:$0xf]
  %v73 = vld [vmem:[%s1 + $0xc] sm:$0xf]
  %v74 = vld [vmem:[%s1 + $0x10] sm:$0xf]
  %v75 = vld [vmem:[%s1 + $0x14] sm:$0xf]
  %v76 = vld [vmem:[%s1 + $0x18] sm:$0xf]
  %v77 = vld [vmem:[%s1 + $0x1c] sm:$0xf]
  %v78 = vld [vmem:[%s1 + $0x20] sm:$0xf]
  %v79 = vld [vmem:[%s1 + $0x24] sm:$0xf]
  %v80 = vld [vmem:[%s1 + $0x28] sm:$0xf]
  %v81 = vld [vmem:[%s1 + $0x2c] sm:$0xf]
  %v82 = vld [vmem:[%s1 + $0x30] sm:$0xf]
  %v83 = vld [vmem:[%s1 + $0x34] sm:$0xf]
  %v84 = vld [vmem:[%s1 + $0x38] sm:$0xf]
  %v85 = vld [vmem:[%s1 + $0x3c] sm:$0xf]
  %v102 = vunpack.c.l.b16 %v54
  %v103 = vunpack.c.l.b16 %v55
  %v104 = vunpack.c.l.b16 %v56
  %v105 = vunpack.c.l.b16 %v57
  %v106 = vunpack.c.l.b16 %v58
  %v107 = vunpack.c.l.b16 %v59
  %v108 = vunpack.c.l.b16 %v60
  %v109 = vunpack.c.l.b16 %v61
  %v110 = vunpack.c.l.b16 %v62
  %v111 = vunpack.c.l.b16 %v63
  %v112 = vunpack.c.l.b16 %v64
  %v113 = vunpack.c.l.b16 %v65
  %v114 = vunpack.c.l.b16 %v66
  %v115 = vunpack.c.l.b16 %v67
  %v116 = vunpack.c.l.b16 %v68
  %v117 = vunpack.c.l.b16 %v69
  %v118 = vpack.c.b16 %v103, %v102
  %v119 = vpack.c.b16 %v105, %v104
  %v120 = vpack.c.b16 %v107, %v106
  %v121 = vpack.c.b16 %v109, %v108
  %v122 = vpack.c.b16 %v111, %v110
  %v123 = vpack.c.b16 %v113, %v112
  %v124 = vpack.c.b16 %v115, %v114
  %v125 = vpack.c.b16 %v117, %v116
  %v150 = vunpack.c.l.b16 %v70
  %v151 = vunpack.c.l.b16 %v71
  %v152 = vunpack.c.l.b16 %v72
  %v153 = vunpack.c.l.b16 %v73
  %v154 = vunpack.c.l.b16 %v74
  %v155 = vunpack.c.l.b16 %v75
  %v156 = vunpack.c.l.b16 %v76
  %v157 = vunpack.c.l.b16 %v77
  %v158 = vunpack.c.l.b16 %v78
  %v159 = vunpack.c.l.b16 %v79
  %v160 = vunpack.c.l.b16 %v80
  %v161 = vunpack.c.l.b16 %v81
  %v162 = vunpack.c.l.b16 %v82
  %v163 = vunpack.c.l.b16 %v83
  %v164 = vunpack.c.l.b16 %v84
  %v165 = vunpack.c.l.b16 %v85
  %v166 = vpack.c.b16 %v151, %v150
  %v167 = vpack.c.b16 %v153, %v152
  %v168 = vpack.c.b16 %v155, %v154
  %v169 = vpack.c.b16 %v157, %v156
  %v170 = vpack.c.b16 %v159, %v158
  %v171 = vpack.c.b16 %v161, %v160
  %v172 = vpack.c.b16 %v163, %v162
  %v173 = vpack.c.b16 %v165, %v164
  %182 = vmatprep.subr.bf16.mxu0 0
  %183 = vmatpush1.bf16.msra.mxu0 %v166
  %184 = vmatprep.subr.bf16.mxu0 0
  %185 = vmatpush1.bf16.msra.mxu0 %v167
  %186 = vmatprep.subr.bf16.mxu0 0
  %187 = vmatpush1.bf16.msra.mxu0 %v168
  %188 = vmatprep.subr.bf16.mxu0 0
  %189 = vmatpush1.bf16.msra.mxu0 %v169
  %190 = vmatprep.subr.bf16.mxu0 0
  %191 = vmatpush1.bf16.msra.mxu0 %v170
  %192 = vmatprep.subr.bf16.mxu0 0
  %193 = vmatpush1.bf16.msra.mxu0 %v171
  %194 = vmatprep.subr.bf16.mxu0 0
  %195 = vmatpush1.bf16.msra.mxu0 %v172
  %196 = vmatprep.subr.bf16.mxu0 0
  %197 = vmatpush1.bf16.msra.mxu0 %v173
  %198 = vmatprep.subr.bf16.mxu0 0
  %199 = vmatpush1.bf16.msra.mxu0 0
  %200 = vmatprep.subr.bf16.mxu0 0
  %201 = vmatpush1.bf16.msra.mxu0 0
  %202 = vmatprep.subr.bf16.mxu0 0
  %203 = vmatpush1.bf16.msra.mxu0 0
  %204 = vmatprep.subr.bf16.mxu0 0
  %205 = vmatpush1.bf16.msra.mxu0 0
  %206 = vmatprep.subr.bf16.mxu0 0
  %207 = vmatpush1.bf16.msra.mxu0 0
  %208 = vmatprep.subr.bf16.mxu0 0
  %209 = vmatpush1.bf16.msra.mxu0 0
  %210 = vmatprep.subr.bf16.mxu0 0
  %211 = vmatpush1.bf16.msra.mxu0 0
  %212 = vmatprep.subr.bf16.mxu0 0
  %213 = vmatpush1.bf16.msra.mxu0 0
  %214 = vmatprep.mubr.bf16.mxu0 0
  %215 = vmatmul.mubr.bf16.gmra.mrb[0].mxu0 %v118
  %v216 = vpop.f32.mrb[0].mxu0
  %v217 = vadd.f32 0.0, %v216
  %v218 = vpop.f32.mrb[0].mxu0
  %v219 = vpop.f32.mrb[0].mxu0
  %v220 = vadd.f32 0.0, %v219
  %v221 = vpop.f32.mrb[0].mxu0
  %222 = vmatprep.mubr.bf16.mxu0 0
  %223 = vmatmul.mubr.bf16.gmra.mrb[0].mxu0 %v119
  %v224 = vpop.f32.mrb[0].mxu0
  %v225 = vadd.f32 0.0, %v224
  %v226 = vpop.f32.mrb[0].mxu0
  %v227 = vpop.f32.mrb[0].mxu0
  %v228 = vadd.f32 0.0, %v227
  %v229 = vpop.f32.mrb[0].mxu0
  %230 = vmatprep.mubr.bf16.mxu0 0
  %231 = vmatmul.mubr.bf16.gmra.mrb[0].mxu0 %v120
  %v232 = vpop.f32.mrb[0].mxu0
  %v233 = vadd.f32 0.0, %v232
  %v234 = vpop.f32.mrb[0].mxu0
  %v235 = vpop.f32.mrb[0].mxu0
  %v236 = vadd.f32 0.0, %v235
  %v237 = vpop.f32.mrb[0].mxu0
  %238 = vmatprep.mubr.bf16.mxu0 0
  %239 = vmatmul.mubr.bf16.gmra.mrb[0].mxu0 %v121
  %v240 = vpop.f32.mrb[0].mxu0
  %v241 = vadd.f32 0.0, %v240
  %v242 = vpop.f32.mrb[0].mxu0
  %v243 = vpop.f32.mrb[0].mxu0
  %v244 = vadd.f32 0.0, %v243
  %v245 = vpop.f32.mrb[0].mxu0
  %246 = vmatprep.mubr.bf16.mxu0 0
  %247 = vmatmul.mubr.bf16.gmra.mrb[0].mxu0 %v122
  %v248 = vpop.f32.mrb[0].mxu0
  %v249 = vadd.f32 0.0, %v248
  %v250 = vpop.f32.mrb[0].mxu0
  %v251 = vpop.f32.mrb[0].mxu0
  %v252 = vadd.f32 0.0, %v251
  %v253 = vpop.f32.mrb[0].mxu0
  %254 = vmatprep.mubr.bf16.mxu0 0
  %255 = vmatmul.mubr.bf16.gmra.mrb[0].mxu0 %v123
  %v256 = vpop.f32.mrb[0].mxu0
  %v257 = vadd.f32 0.0, %v256
  %v258 = vpop.f32.mrb[0].mxu0
  %v259 = vpop.f32.mrb[0].mxu0
  %v260 = vadd.f32 0.0, %v259
  %v261 = vpop.f32.mrb[0].mxu0
  %262 = vmatprep.mubr.bf16.mxu0 0
  %263 = vmatmul.mubr.bf16.gmra.mrb[0].mxu0 %v124
  %v264 = vpop.f32.mrb[0].mxu0
  %v265 = vadd.f32 0.0, %v264
  %v266 = vpop.f32.mrb[0].mxu0
  %v267 = vpop.f32.mrb[0].mxu0
  %v268 = vadd.f32 0.0, %v267
  %v269 = vpop.f32.mrb[0].mxu0
  %270 = vmatprep.mubr.bf16.mxu0 0
  %271 = vmatmul.mubr.bf16.gmra.mrb[0].mxu0 %v125
  %v272 = vpop.f32.mrb[0].mxu0
  %v273 = vadd.f32 0.0, %v272
  %v274 = vpop.f32.mrb[0].mxu0
  %v275 = vpop.f32.mrb[0].mxu0
  %v276 = vadd.f32 0.0, %v275
  %v277 = vpop.f32.mrb[0].mxu0
  %278 = vdwg.mxu0
  %v279 = vadd.f32 %v38, %v217
  %v280 = vadd.f32 %v39, %v220
  %v281 = vadd.f32 %v40, %v225
  %v282 = vadd.f32 %v41, %v228
  %v283 = vadd.f32 %v42, %v233
  %v284 = vadd.f32 %v43, %v236
  %v285 = vadd.f32 %v44, %v241
  %v286 = vadd.f32 %v45, %v244
  %v287 = vadd.f32 %v46, %v249
  %v288 = vadd.f32 %v47, %v252
  %v289 = vadd.f32 %v48, %v257
  %v290 = vadd.f32 %v49, %v260
  %v291 = vadd.f32 %v50, %v265
  %v292 = vadd.f32 %v51, %v268
  %v293 = vadd.f32 %v52, %v273
  %v294 = vadd.f32 %v53, %v276
  %295 = vst [vmem:[#allocation2] sm:$0xff] %v279
  %296 = vst [vmem:[#allocation2 + $0x8] sm:$0xff] %v280
  %297 = vst [vmem:[#allocation2 + $0x10] sm:$0xff] %v281
  %298 = vst [vmem:[#allocation2 + $0x18] sm:$0xff] %v282
  %299 = vst [vmem:[#allocation2 + $0x20] sm:$0xff] %v283
  %300 = vst [vmem:[#allocation2 + $0x28] sm:$0xff] %v284
  %301 = vst [vmem:[#allocation2 + $0x30] sm:$0xff] %v285
  %302 = vst [vmem:[#allocation2 + $0x38] sm:$0xff] %v286
  %303 = vst [vmem:[#allocation2 + $0x40] sm:$0xff] %v287
  %304 = vst [vmem:[#allocation2 + $0x48] sm:$0xff] %v288
  %305 = vst [vmem:[#allocation2 + $0x50] sm:$0xff] %v289
  %306 = vst [vmem:[#allocation2 + $0x58] sm:$0xff] %v290
  %307 = vst [vmem:[#allocation2 + $0x60] sm:$0xff] %v291
  %308 = vst [vmem:[#allocation2 + $0x68] sm:$0xff] %v292
  %309 = vst [vmem:[#allocation2 + $0x70] sm:$0xff] %v293
  %310 = vst [vmem:[#allocation2 + $0x78] sm:$0xff] %v294
  // Predicated region
  $region18: #{wide_block_forward.9} parent=0 // pred_check
    %p311 = pneg %p18
  $region19: #{wide_block_forward.9} parent=0 // pred_check_branch
    %313 = sbr.rel (%p311) target = $region21
  $region20: #{wide_block_forward.9} parent=0 // pred_region
    %v314 = vld [vmem:[#allocation2] sm:$0xff]
    %v315 = vld [vmem:[#allocation2 + $0x8] sm:$0xff]
    %v316 = vld [vmem:[#allocation2 + $0x10] sm:$0xff]
    %v317 = vld [vmem:[#allocation2 + $0x18] sm:$0xff]
    %v318 = vld [vmem:[#allocation2 + $0x20] sm:$0xff]
    %v319 = vld [vmem:[#allocation2 + $0x28] sm:$0xff]
    %v320 = vld [vmem:[#allocation2 + $0x30] sm:$0xff]
    %v321 = vld [vmem:[#allocation2 + $0x38] sm:$0xff]
    %v322 = vld [vmem:[#allocation2 + $0x40] sm:$0xff]
    %v323 = vld [vmem:[#allocation2 + $0x48] sm:$0xff]
    %v324 = vld [vmem:[#allocation2 + $0x50] sm:$0xff]
    %v325 = vld [vmem:[#allocation2 + $0x58] sm:$0xff]
    %v326 = vld [vmem:[#allocation2 + $0x60] sm:$0xff]
    %v327 = vld [vmem:[#allocation2 + $0x68] sm:$0xff]
    %v328 = vld [vmem:[#allocation2 + $0x70] sm:$0xff]
    %v329 = vld [vmem:[#allocation2 + $0x78] sm:$0xff]
    %v330 = vadd.f32 %v314, %v315
    %v331 = vadd.f32 %v330, %v316
    %v332 = vadd.f32 %v331, %v317
    %v333 = vadd.f32 %v332, %v318
    %v334 = vadd.f32 %v333, %v319
    %v335 = vadd.f32 %v334, %v320
    %v336 = vadd.f32 %v335, %v321
    %v337 = vadd.f32 %v336, %v322
    %v338 = vadd.f32 %v337, %v323
    %v339 = vadd.f32 %v338, %v324
    %v340 = vadd.f32 %v339, %v325
    %v341 = vadd.f32 %v340, %v326
    %v342 = vadd.f32 %v341, %v327
    %v343 = vadd.f32 %v342, %v328
    %v344 = vadd.f32 %v343, %v329
    %v345 = vrot.slane %v344, 4
    %v346 = vadd.f32 %v344, %v345
    %v347 = vrot.slane %v346, 2
    %v348 = vadd.f32 %v346, %v347
    %v349 = vrot.slane %v348, 1
    %v350 = vadd.f32 %v348, %v349
    %v351 = vmul.f32 %v350, 0.125
    %v352 = vmul.f32 %v314, %v314
    %v353 = vmul.f32 %v315, %v315
    %v354 = vmul.f32 %v316, %v316
    %v355 = vmul.f32 %v317, %v317
    %v356 = vmul.f32 %v318, %v318
    %v357 = vmul.f32 %v319, %v319
    %v358 = vmul.f32 %v320, %v320
    %v359 = vmul.f32 %v321, %v321
    %v360 = vmul.f32 %v322, %v322
    %v361 = vmul.f32 %v323, %v323
    %v362 = vmul.f32 %v324, %v324
    %v363 = vmul.f32 %v325, %v325
    %v364 = vmul.f32 %v326, %v326
    %v365 = vmul.f32 %v327, %v327
    %v366 = vmul.f32 %v328, %v328
    %v367 = vmul.f32 %v329, %v329
    %v368 = vadd.f32 %v352, %v353
    %v369 = vadd.f32 %v368, %v354
    %v370 = vadd.f32 %v369, %v355
    %v371 = vadd.f32 %v370, %v356
    %v372 = vadd.f32 %v371, %v357
    %v373 = vadd.f32 %v372, %v358
    %v374 = vadd.f32 %v373, %v359
    %v375 = vadd.f32 %v374, %v360
    %v376 = vadd.f32 %v375, %v361
    %v377 = vadd.f32 %v376, %v362
    %v378 = vadd.f32 %v377, %v363
    %v379 = vadd.f32 %v378, %v364
    %v380 = vadd.f32 %v379, %v365
    %v381 = vadd.f32 %v380, %v366
    %v382 = vadd.f32 %v381, %v367
    %v383 = vrot.slane %v382, 4
    %v384 = vadd.f32 %v382, %v383
    %v385 = vrot.slane %v384, 2
    %v386 = vadd.f32 %v384, %v385
    %v387 = vrot.slane %v386, 1
    %v388 = vadd.f32 %v386, %v387
    %v389 = vmul.f32 %v388, 0.125
    %390 = vst [vmem:[%s4] sm:$0xff] %v351
    %391 = vst [vmem:[%s5] sm:$0xff] %v389
    %v392 = vld [vmem:[%s2] sm:$0x1]
    %v394 = vlaneseq
    %v395 = vshrl.u32 %v394, 7
    %v396 = vsub.s32 0, %v395
    %v397 = vrot.slane %v392, %v396
    %v399 = vadd.f32 %v314, %v397
    %v400 = vadd.f32 %v315, %v397
    %v401 = vadd.f32 %v316, %v397
    %v402 = vadd.f32 %v317, %v397
    %v403 = vadd.f32 %v318, %v397
    %v404 = vadd.f32 %v319, %v397
    %v405 = vadd.f32 %v320, %v397
    %v406 = vadd.f32 %v321, %v397
    %v407 = vadd.f32 %v322, %v397
    %v408 = vadd.f32 %v323, %v397
    %v409 = vadd.f32 %v324, %v397
    %v410 = vadd.f32 %v325, %v397
    %v411 = vadd.f32 %v326, %v397
    %v412 = vadd.f32 %v327, %v397
    %v413 = vadd.f32 %v328, %v397
    %v414 = vadd.f32 %v329, %v397
    %v415 = vpack.c.bf16 %v400, %v399
    %v416 = vpack.c.bf16 %v402, %v401
    %v417 = vpack.c.bf16 %v404, %v403
    %v418 = vpack.c.bf16 %v406, %v405
    %v419 = vpack.c.bf16 %v408, %v407
    %v420 = vpack.c.bf16 %v410, %v409
    %v421 = vpack.c.bf16 %v412, %v411
    %v422 = vpack.c.bf16 %v414, %v413
    %v431 = vunpack.c.l.b16 %v415
    %v432 = vunpack.c.h.b16 %v415
    %v433 = vunpack.c.l.b16 %v416
    %v434 = vunpack.c.h.b16 %v416
    %v435 = vunpack.c.l.b16 %v417
    %v436 = vunpack.c.h.b16 %v417
    %v437 = vunpack.c.l.b16 %v418
    %v438 = vunpack.c.h.b16 %v418
    %v439 = vunpack.c.l.b16 %v419
    %v440 = vunpack.c.h.b16 %v419
    %v441 = vunpack.c.l.b16 %v420
    %v442 = vunpack.c.h.b16 %v420
    %v443 = vunpack.c.l.b16 %v421
    %v444 = vunpack.c.h.b16 %v421
    %v445 = vunpack.c.l.b16 %v422
    %v446 = vunpack.c.h.b16 %v422
    %v447 = vpack.c.b16 %v431, %v431
    %v448 = vpack.c.b16 %v432, %v432
    %v449 = vpack.c.b16 %v433, %v433
    %v450 = vpack.c.b16 %v434, %v434
    %v451 = vpack.c.b16 %v435, %v435
    %v452 = vpack.c.b16 %v436, %v436
    %v453 = vpack.c.b16 %v437, %v437
    %v454 = vpack.c.b16 %v438, %v438
    %v455 = vpack.c.b16 %v439, %v439
    %v456 = vpack.c.b16 %v440, %v440
    %v457 = vpack.c.b16 %v441, %v441
    %v458 = vpack.c.b16 %v442, %v442
    %v459 = vpack.c.b16 %v443, %v443
    %v460 = vpack.c.b16 %v444, %v444
    %v461 = vpack.c.b16 %v445, %v445
    %v462 = vpack.c.b16 %v446, %v446
    %479 = vst [vmem:[%s3] sm:$0xf] %v447
    %480 = vst [vmem:[%s3 + $0x4] sm:$0xf] %v448
    %481 = vst [vmem:[%s3 + $0x8] sm:$0xf] %v449
    %482 = vst [vmem:[%s3 + $0xc] sm:$0xf] %v450
    %483 = vst [vmem:[%s3 + $0x10] sm:$0xf] %v451
    %484 = vst [vmem:[%s3 + $0x14] sm:$0xf] %v452
    %485 = vst [vmem:[%s3 + $0x18] sm:$0xf] %v453
    %486 = vst [vmem:[%s3 + $0x1c] sm:$0xf] %v454
    %487 = vst [vmem:[%s3 + $0x20] sm:$0xf] %v455
    %488 = vst [vmem:[%s3 + $0x24] sm:$0xf] %v456
    %489 = vst [vmem:[%s3 + $0x28] sm:$0xf] %v457
    %490 = vst [vmem:[%s3 + $0x2c] sm:$0xf] %v458
    %491 = vst [vmem:[%s3 + $0x30] sm:$0xf] %v459
    %492 = vst [vmem:[%s3 + $0x34] sm:$0xf] %v460
    %493 = vst [vmem:[%s3 + $0x38] sm:$0xf] %v461
    %494 = vst [vmem:[%s3 + $0x3c] sm:$0xf] %v462
  $region21: #{wide_block_forward.9} parent=0 // pred_fallthru
    _
  // Predicated region
  $region22: #{wide_block_forward.9} parent=0 // pred_check
    _
  $region23: #{wide_block_forward.9} parent=0 // pred_check_branch
    %496 = sbr.rel (0) target = $region25
  $region24: #{wide_block_forward.9} parent=0 // pred_region
    _
  $region25: #{wide_block_forward.9} parent=0 // pred_fallthru
    _
  // Predicated region
  $region26: #{wide_block_forward.9} parent=0 // pred_check
    _
  $region27: #{wide_block_forward.9} parent=0 // pred_check_branch
    %498 = sbr.rel (0) target = $region29
  $region28: #{wide_block_forward.9} parent=0 // pred_region
    _
  $region29: #{wide_block_forward.9} parent=0 // pred_fallthru
    _
  // Predicated region
  $region30: #{wide_block_forward.9} parent=0 // pred_check
    _
  $region31: #{wide_block_forward.9} parent=0 // pred_check_branch
    %500 = sbr.rel (0) target = $region33
  $region32: #{wide_block_forward.9} parent=0 // pred_region
    _
  $region33: #{wide_block_forward.9} parent=0 // pred_fallthru
    _
  // Predicated region
  $region34: #{wide_block_forward.9} parent=0 // pred_check
    _
  $region35: #{wide_block_forward.9} parent=0 // pred_check_branch
    %502 = sbr.rel (0) target = $region37
  $region36: #{wide_block_forward.9} parent=0 // pred_region
    _
  $region37: #{wide_block_forward.9} parent=0 // pred_fallthru
    _
  // Predicated region
  $region38: #{wide_block_forward.9} parent=0 // pred_check
    _
  $region39: #{wide_block_forward.9} parent=0 // pred_check_branch
    %504 = sbr.rel (0) target = $region41
  $region40: #{wide_block_forward.9} parent=0 // pred_region
    _
  $region41: #{wide_block_forward.9} parent=0 // pred_fallthru
    _
  // Predicated region
  $region42: #{wide_block_forward.9} parent=0 // pred_check
    _
  $region43: #{wide_block_forward.9} parent=0 // pred_check_branch
    %506 = sbr.rel (0) target = $region45
  $region44: #{wide_block_forward.9} parent=0 // pred_region
    _
  $region45: #{wide_block_forward.9} parent=0 // pred_fallthru
    _

// kernel: wide_block_forward.11
$region0: #{wide_block_forward.11}
  #allocation0 [shape = 'u32[]', space=smem, size = 0x4, offset = 0x4, fixed_abs, tag = 'smem constant byte address 0x4 - core index']
  #allocation1 [shape = 'u32[144,128]{1,0:T(1,128)}', space=vmem, size = 0x12000, scoped, tag = 'internal scratch']
  #allocation2 [shape = 'f32[128,128]{1,0:T(8,128)}', space=vmem, size = 0x10000, scoped, tag = 'scratch operand']
  %s0 = inlined_call_operand.vmem [shape: bf16[128,128], index: 0, kind: input, shape index: {}]
  %s1 = inlined_call_operand.vmem [shape: bf16[128,128], index: 1, kind: input, shape index: {}]
  %s2 = inlined_call_operand.vmem [shape: f32[1,128], index: 2, kind: input, shape index: {}]
  %s3 = inlined_call_operand.vmem [shape: bf16[128,128], index: 3, kind: input, shape index: {}]
  %s4 = inlined_call_operand.hbm [shape: f32[128,128], index: 4, kind: output, shape index: {}]
  %s5 = sld [smem:[#allocation0]]
  $region34: #{wide_block_forward.11} parent=0
    _
  %s7 = ssub.s32 1, %s5
  %s8 = scalar_select 0, %s7, %s5
  $region1: #{wide_block_forward.11} parent=0
    #allocation3 [shape = 'u8[65536]{0}', space=vmem, size = 0x10000, scoped, tag = 'output window, operand 0, single buffered']
    #allocation4 [shape = 's32[1]{0}', space=sflag, size = 0x4, scoped, tag = 'scoped memory for wide_block_forward.11']
    %9 = vsyncpa [#allocation4], 0
    // Predicated region
    $region2: #{wide_block_forward.11} parent=1 // pred_check
      _
    $region3: #{wide_block_forward.11} parent=1 // pred_check_branch
      %11 = sbr.rel (0) target = $region5
    $region4: #{wide_block_forward.11} parent=1 // pred_region
      _
    $region5: #{wide_block_forward.11} parent=1 // pred_fallthru
      _
    // Predicated region
    $region6: #{wide_block_forward.11} parent=1 // pred_check
      _
    $region7: #{wide_block_forward.11} parent=1 // pred_check_branch
      %13 = sbr.rel (0) target = $region9
    $region8: #{wide_block_forward.11} parent=1 // pred_region
      _
    $region9: #{wide_block_forward.11} parent=1 // pred_fallthru
      _
    // Predicated region
    $region10: #{wide_block_forward.11} parent=1 // pred_check
      _
    $region11: #{wide_block_forward.11} parent=1 // pred_check_branch
      %15 = sbr.rel (0) target = $region13
    $region12: #{wide_block_forward.11} parent=1 // pred_region
      _
    $region13: #{wide_block_forward.11} parent=1 // pred_fallthru
      _
    // Predicated region
    $region14: #{wide_block_forward.11} parent=1 // pred_check
      _
    $region15: #{wide_block_forward.11} parent=1 // pred_check_branch
      %17 = sbr.rel (0) target = $region17
    $region16: #{wide_block_forward.11} parent=1 // pred_region
      _
    $region17: #{wide_block_forward.11} parent=1 // pred_fallthru
      _
    %p19 = scmp.eq.s32.totalorder 0, 0
    // Predicated region
    $region18: #{wide_block_forward.11} parent=1 // pred_check
      %p20 = pneg %p19
    $region19: #{wide_block_forward.11} parent=1 // pred_check_branch
      %22 = sbr.rel (%p20) target = $region21
    $region20: #{wide_block_forward.11} parent=1 // pred_region
      %23 = vst [vmem:[#allocation2] sm:$0xff] 0.0
      %24 = vst [vmem:[#allocation2 + $0x8] sm:$0xff] 0.0
      %25 = vst [vmem:[#allocation2 + $0x10] sm:$0xff] 0.0
      %26 = vst [vmem:[#allocation2 + $0x18] sm:$0xff] 0.0
      %27 = vst [vmem:[#allocation2 + $0x20] sm:$0xff] 0.0
      %28 = vst [vmem:[#allocation2 + $0x28] sm:$0xff] 0.0
      %29 = vst [vmem:[#allocation2 + $0x30] sm:$0xff] 0.0
      %30 = vst [vmem:[#allocation2 + $0x38] sm:$0xff] 0.0
      %31 = vst [vmem:[#allocation2 + $0x40] sm:$0xff] 0.0
      %32 = vst [vmem:[#allocation2 + $0x48] sm:$0xff] 0.0
      %33 = vst [vmem:[#allocation2 + $0x50] sm:$0xff] 0.0
      %34 = vst [vmem:[#allocation2 + $0x58] sm:$0xff] 0.0
      %35 = vst [vmem:[#allocation2 + $0x60] sm:$0xff] 0.0
      %36 = vst [vmem:[#allocation2 + $0x68] sm:$0xff] 0.0
      %37 = vst [vmem:[#allocation2 + $0x70] sm:$0xff] 0.0
      %38 = vst [vmem:[#allocation2 + $0x78] sm:$0xff] 0.0
    $region21: #{wide_block_forward.11} parent=1 // pred_fallthru
      _
    %v39 = vld [vmem:[#allocation2] sm:$0xff]
    %v40 = vld [vmem:[#allocation2 + $0x8] sm:$0xff]
    %v41 = vld [vmem:[#allocation2 + $0x10] sm:$0xff]
    %v42 = vld [vmem:[#allocation2 + $0x18] sm:$0xff]
    %v43 = vld [vmem:[#allocation2 + $0x20] sm:$0xff]
    %v44 = vld [vmem:[#allocation2 + $0x28] sm:$0xff]
    %v45 = vld [vmem:[#allocation2 + $0x30] sm:$0xff]
    %v46 = vld [vmem:[#allocation2 + $0x38] sm:$0xff]
    %v47 = vld [vmem:[#allocation2 + $0x40] sm:$0xff]
    %v48 = vld [vmem:[#allocation2 + $0x48] sm:$0xff]
    %v49 = vld [vmem:[#allocation2 + $0x50] sm:$0xff]
    %v50 = vld [vmem:[#allocation2 + $0x58] sm:$0xff]
    %v51 = vld [vmem:[#allocation2 + $0x60] sm:$0xff]
    %v52 = vld [vmem:[#allocation2 + $0x68] sm:$0xff]
    %v53 = vld [vmem:[#allocation2 + $0x70] sm:$0xff]
    %v54 = vld [vmem:[#allocation2 + $0x78] sm:$0xff]
    %v55 = vld [vmem:[%s0] sm:$0xf]
    %v56 = vld [vmem:[%s0 + $0x4] sm:$0xf]
    %v57 = vld [vmem:[%s0 + $0x8] sm:$0xf]
    %v58 = vld [vmem:[%s0 + $0xc] sm:$0xf]
    %v59 = vld [vmem:[%s0 + $0x10] sm:$0xf]
    %v60 = vld [vmem:[%s0 + $0x14] sm:$0xf]
    %v61 = vld [vmem:[%s0 + $0x18] sm:$0xf]
    %v62 = vld [vmem:[%s0 + $0x1c] sm:$0xf]
    %v63 = vld [vmem:[%s0 + $0x20] sm:$0xf]
    %v64 = vld [vmem:[%s0 + $0x24] sm:$0xf]
    %v65 = vld [vmem:[%s0 + $0x28] sm:$0xf]
    %v66 = vld [vmem:[%s0 + $0x2c] sm:$0xf]
    %v67 = vld [vmem:[%s0 + $0x30] sm:$0xf]
    %v68 = vld [vmem:[%s0 + $0x34] sm:$0xf]
    %v69 = vld [vmem:[%s0 + $0x38] sm:$0xf]
    %v70 = vld [vmem:[%s0 + $0x3c] sm:$0xf]
    %v71 = vld [vmem:[%s1] sm:$0xf]
    %v72 = vld [vmem:[%s1 + $0x4] sm:$0xf]
    %v73 = vld [vmem:[%s1 + $0x8] sm:$0xf]
    %v74 = vld [vmem:[%s1 + $0xc] sm:$0xf]
    %v75 = vld [vmem:[%s1 + $0x10] sm:$0xf]
    %v76 = vld [vmem:[%s1 + $0x14] sm:$0xf]
    %v77 = vld [vmem:[%s1 + $0x18] sm:$0xf]
    %v78 = vld [vmem:[%s1 + $0x1c] sm:$0xf]
    %v79 = vld [vmem:[%s1 + $0x20] sm:$0xf]
    %v80 = vld [vmem:[%s1 + $0x24] sm:$0xf]
    %v81 = vld [vmem:[%s1 + $0x28] sm:$0xf]
    %v82 = vld [vmem:[%s1 + $0x2c] sm:$0xf]
    %v83 = vld [vmem:[%s1 + $0x30] sm:$0xf]
    %v84 = vld [vmem:[%s1 + $0x34] sm:$0xf]
    %v85 = vld [vmem:[%s1 + $0x38] sm:$0xf]
    %v86 = vld [vmem:[%s1 + $0x3c] sm:$0xf]
    %v103 = vunpack.c.l.b16 %v55
    %v104 = vunpack.c.l.b16 %v56
    %v105 = vunpack.c.l.b16 %v57
    %v106 = vunpack.c.l.b16 %v58
    %v107 = vunpack.c.l.b16 %v59
    %v108 = vunpack.c.l.b16 %v60
    %v109 = vunpack.c.l.b16 %v61
    %v110 = vunpack.c.l.b16 %v62
    %v111 = vunpack.c.l.b16 %v63
    %v112 = vunpack.c.l.b16 %v64
    %v113 = vunpack.c.l.b16 %v65
    %v114 = vunpack.c.l.b16 %v66
    %v115 = vunpack.c.l.b16 %v67
    %v116 = vunpack.c.l.b16 %v68
    %v117 = vunpack.c.l.b16 %v69
    %v118 = vunpack.c.l.b16 %v70
    %v119 = vpack.c.b16 %v104, %v103
    %v120 = vpack.c.b16 %v106, %v105
    %v121 = vpack.c.b16 %v108, %v107
    %v122 = vpack.c.b16 %v110, %v109
    %v123 = vpack.c.b16 %v112, %v111
    %v124 = vpack.c.b16 %v114, %v113
    %v125 = vpack.c.b16 %v116, %v115
    %v126 = vpack.c.b16 %v118, %v117
    %v151 = vunpack.c.l.b16 %v71
    %v152 = vunpack.c.l.b16 %v72
    %v153 = vunpack.c.l.b16 %v73
    %v154 = vunpack.c.l.b16 %v74
    %v155 = vunpack.c.l.b16 %v75
    %v156 = vunpack.c.l.b16 %v76
    %v157 = vunpack.c.l.b16 %v77
    %v158 = vunpack.c.l.b16 %v78
    %v159 = vunpack.c.l.b16 %v79
    %v160 = vunpack.c.l.b16 %v80
    %v161 = vunpack.c.l.b16 %v81
    %v162 = vunpack.c.l.b16 %v82
    %v163 = vunpack.c.l.b16 %v83
    %v164 = vunpack.c.l.b16 %v84
    %v165 = vunpack.c.l.b16 %v85
    %v166 = vunpack.c.l.b16 %v86
    %v167 = vpack.c.b16 %v152, %v151
    %v168 = vpack.c.b16 %v154, %v153
    %v169 = vpack.c.b16 %v156, %v155
    %v170 = vpack.c.b16 %v158, %v157
    %v171 = vpack.c.b16 %v160, %v159
    %v172 = vpack.c.b16 %v162, %v161
    %v173 = vpack.c.b16 %v164, %v163
    %v174 = vpack.c.b16 %v166, %v165
    %183 = vmatprep.subr.bf16.mxu0 0
    %184 = vmatpush1.bf16.msra.mxu0 %v167
    %185 = vmatprep.subr.bf16.mxu0 0
    %186 = vmatpush1.bf16.msra.mxu0 %v168
    %187 = vmatprep.subr.bf16.mxu0 0
    %188 = vmatpush1.bf16.msra.mxu0 %v169
    %189 = vmatprep.subr.bf16.mxu0 0
    %190 = vmatpush1.bf16.msra.mxu0 %v170
    %191 = vmatprep.subr.bf16.mxu0 0
    %192 = vmatpush1.bf16.msra.mxu0 %v171
    %193 = vmatprep.subr.bf16.mxu0 0
    %194 = vmatpush1.bf16.msra.mxu0 %v172
    %195 = vmatprep.subr.bf16.mxu0 0
    %196 = vmatpush1.bf16.msra.mxu0 %v173
    %197 = vmatprep.subr.bf16.mxu0 0
    %198 = vmatpush1.bf16.msra.mxu0 %v174
    %199 = vmatprep.subr.bf16.mxu0 0
    %200 = vmatpush1.bf16.msra.mxu0 0
    %201 = vmatprep.subr.bf16.mxu0 0
    %202 = vmatpush1.bf16.msra.mxu0 0
    %203 = vmatprep.subr.bf16.mxu0 0
    %204 = vmatpush1.bf16.msra.mxu0 0
    %205 = vmatprep.subr.bf16.mxu0 0
    %206 = vmatpush1.bf16.msra.mxu0 0
    %207 = vmatprep.subr.bf16.mxu0 0
    %208 = vmatpush1.bf16.msra.mxu0 0
    %209 = vmatprep.subr.bf16.mxu0 0
    %210 = vmatpush1.bf16.msra.mxu0 0
    %211 = vmatprep.subr.bf16.mxu0 0
    %212 = vmatpush1.bf16.msra.mxu0 0
    %213 = vmatprep.subr.bf16.mxu0 0
    %214 = vmatpush1.bf16.msra.mxu0 0
    %215 = vmatprep.mubr.bf16.mxu0 0
    %216 = vmatmul.mubr.bf16.gmra.mrb[0].mxu0 %v119
    %v217 = vpop.f32.mrb[0].mxu0
    %v218 = vadd.f32 0.0, %v217
    %v219 = vpop.f32.mrb[0].mxu0
    %v220 = vpop.f32.mrb[0].mxu0
    %v221 = vadd.f32 0.0, %v220
    %v222 = vpop.f32.mrb[0].mxu0
    %223 = vmatprep.mubr.bf16.mxu0 0
    %224 = vmatmul.mubr.bf16.gmra.mrb[0].mxu0 %v120
    %v225 = vpop.f32.mrb[0].mxu0
    %v226 = vadd.f32 0.0, %v225
    %v227 = vpop.f32.mrb[0].mxu0
    %v228 = vpop.f32.mrb[0].mxu0
    %v229 = vadd.f32 0.0, %v228
    %v230 = vpop.f32.mrb[0].mxu0
    %231 = vmatprep.mubr.bf16.mxu0 0
    %232 = vmatmul.mubr.bf16.gmra.mrb[0].mxu0 %v121
    %v233 = vpop.f32.mrb[0].mxu0
    %v234 = vadd.f32 0.0, %v233
    %v235 = vpop.f32.mrb[0].mxu0
    %v236 = vpop.f32.mrb[0].mxu0
    %v237 = vadd.f32 0.0, %v236
    %v238 = vpop.f32.mrb[0].mxu0
    %239 = vmatprep.mubr.bf16.mxu0 0
    %240 = vmatmul.mubr.bf16.gmra.mrb[0].mxu0 %v122
    %v241 = vpop.f32.mrb[0].mxu0
    %v242 = vadd.f32 0.0, %v241
    %v243 = vpop.f32.mrb[0].mxu0
    %v244 = vpop.f32.mrb[0].mxu0
    %v245 = vadd.f32 0.0, %v244
    %v246 = vpop.f32.mrb[0].mxu0
    %247 = vmatprep.mubr.bf16.mxu0 0
    %248 = vmatmul.mubr.bf16.gmra.mrb[0].mxu0 %v123
    %v249 = vpop.f32.mrb[0].mxu0
    %v250 = vadd.f32 0.0, %v249
    %v251 = vpop.f32.mrb[0].mxu0
    %v252 = vpop.f32.mrb[0].mxu0
    %v253 = vadd.f32 0.0, %v252
    %v254 = vpop.f32.mrb[0].mxu0
    %255 = vmatprep.mubr.bf16.mxu0 0
    %256 = vmatmul.mubr.bf16.gmra.mrb[0].mxu0 %v124
    %v257 = vpop.f32.mrb[0].mxu0
    %v258 = vadd.f32 0.0, %v257
    %v259 = vpop.f32.mrb[0].mxu0
    %v260 = vpop.f32.mrb[0].mxu0
    %v261 = vadd.f32 0.0, %v260
    %v262 = vpop.f32.mrb[0].mxu0
    %263 = vmatprep.mubr.bf16.mxu0 0
    %264 = vmatmul.mubr.bf16.gmra.mrb[0].mxu0 %v125
    %v265 = vpop.f32.mrb[0].mxu0
    %v266 = vadd.f32 0.0, %v265
    %v267 = vpop.f32.mrb[0].mxu0
    %v268 = vpop.f32.mrb[0].mxu0
    %v269 = vadd.f32 0.0, %v268
    %v270 = vpop.f32.mrb[0].mxu0
    %271 = vmatprep.mubr.bf16.mxu0 0
    %272 = vmatmul.mubr.bf16.gmra.mrb[0].mxu0 %v126
    %v273 = vpop.f32.mrb[0].mxu0
    %v274 = vadd.f32 0.0, %v273
    %v275 = vpop.f32.mrb[0].mxu0
    %v276 = vpop.f32.mrb[0].mxu0
    %v277 = vadd.f32 0.0, %v276
    %v278 = vpop.f32.mrb[0].mxu0
    %279 = vdwg.mxu0
    %v280 = vadd.f32 %v39, %v218
    %v281 = vadd.f32 %v40, %v221
    %v282 = vadd.f32 %v41, %v226
    %v283 = vadd.f32 %v42, %v229
    %v284 = vadd.f32 %v43, %v234
    %v285 = vadd.f32 %v44, %v237
    %v286 = vadd.f32 %v45, %v242
    %v287 = vadd.f32 %v46, %v245
    %v288 = vadd.f32 %v47, %v250
    %v289 = vadd.f32 %v48, %v253
    %v290 = vadd.f32 %v49, %v258
    %v291 = vadd.f32 %v50, %v261
    %v292 = vadd.f32 %v51, %v266
    %v293 = vadd.f32 %v52, %v269
    %v294 = vadd.f32 %v53, %v274
    %v295 = vadd.f32 %v54, %v277
    %296 = vst [vmem:[#allocation2] sm:$0xff] %v280
    %297 = vst [vmem:[#allocation2 + $0x8] sm:$0xff] %v281
    %298 = vst [vmem:[#allocation2 + $0x10] sm:$0xff] %v282
    %299 = vst [vmem:[#allocation2 + $0x18] sm:$0xff] %v283
    %300 = vst [vmem:[#allocation2 + $0x20] sm:$0xff] %v284
    %301 = vst [vmem:[#allocation2 + $0x28] sm:$0xff] %v285
    %302 = vst [vmem:[#allocation2 + $0x30] sm:$0xff] %v286
    %303 = vst [vmem:[#allocation2 + $0x38] sm:$0xff] %v287
    %304 = vst [vmem:[#allocation2 + $0x40] sm:$0xff] %v288
    %305 = vst [vmem:[#allocation2 + $0x48] sm:$0xff] %v289
    %306 = vst [vmem:[#allocation2 + $0x50] sm:$0xff] %v290
    %307 = vst [vmem:[#allocation2 + $0x58] sm:$0xff] %v291
    %308 = vst [vmem:[#allocation2 + $0x60] sm:$0xff] %v292
    %309 = vst [vmem:[#allocation2 + $0x68] sm:$0xff] %v293
    %310 = vst [vmem:[#allocation2 + $0x70] sm:$0xff] %v294
    %311 = vst [vmem:[#allocation2 + $0x78] sm:$0xff] %v295
    // Predicated region
    $region22: #{wide_block_forward.11} parent=1 // pred_check
      %p312 = pneg %p19
    $region23: #{wide_block_forward.11} parent=1 // pred_check_branch
      %314 = sbr.rel (%p312) target = $region25
    $region24: #{wide_block_forward.11} parent=1 // pred_region
      %v315 = vld [vmem:[#allocation2] sm:$0xff]
      %v316 = vld [vmem:[#allocation2 + $0x8] sm:$0xff]
      %v317 = vld [vmem:[#allocation2 + $0x10] sm:$0xff]
      %v318 = vld [vmem:[#allocation2 + $0x18] sm:$0xff]
      %v319 = vld [vmem:[#allocation2 + $0x20] sm:$0xff]
      %v320 = vld [vmem:[#allocation2 + $0x28] sm:$0xff]
      %v321 = vld [vmem:[#allocation2 + $0x30] sm:$0xff]
      %v322 = vld [vmem:[#allocation2 + $0x38] sm:$0xff]
      %v323 = vld [vmem:[#allocation2 + $0x40] sm:$0xff]
      %v324 = vld [vmem:[#allocation2 + $0x48] sm:$0xff]
      %v325 = vld [vmem:[#allocation2 + $0x50] sm:$0xff]
      %v326 = vld [vmem:[#allocation2 + $0x58] sm:$0xff]
      %v327 = vld [vmem:[#allocation2 + $0x60] sm:$0xff]
      %v328 = vld [vmem:[#allocation2 + $0x68] sm:$0xff]
      %v329 = vld [vmem:[#allocation2 + $0x70] sm:$0xff]
      %v330 = vld [vmem:[#allocation2 + $0x78] sm:$0xff]
      %v331 = vld [vmem:[%s2] sm:$0x1]
      %v333 = vlaneseq
      %v334 = vshrl.u32 %v333, 7
      %v335 = vsub.s32 0, %v334
      %v336 = vrot.slane %v331, %v335
      %v338 = vadd.f32 %v315, %v336
      %v339 = vadd.f32 %v316, %v336
      %v340 = vadd.f32 %v317, %v336
      %v341 = vadd.f32 %v318, %v336
      %v342 = vadd.f32 %v319, %v336
      %v343 = vadd.f32 %v320, %v336
      %v344 = vadd.f32 %v321, %v336
      %v345 = vadd.f32 %v322, %v336
      %v346 = vadd.f32 %v323, %v336
      %v347 = vadd.f32 %v324, %v336
      %v348 = vadd.f32 %v325, %v336
      %v349 = vadd.f32 %v326, %v336
      %v350 = vadd.f32 %v327, %v336
      %v351 = vadd.f32 %v328, %v336
      %v352 = vadd.f32 %v329, %v336
      %v353 = vadd.f32 %v330, %v336
      %v354 = vld [vmem:[%s3] sm:$0xf]
      %v355 = vld [vmem:[%s3 + $0x4] sm:$0xf]
      %v356 = vld [vmem:[%s3 + $0x8] sm:$0xf]
      %v357 = vld [vmem:[%s3 + $0xc] sm:$0xf]
      %v358 = vld [vmem:[%s3 + $0x10] sm:$0xf]
      %v359 = vld [vmem:[%s3 + $0x14] sm:$0xf]
      %v360 = vld [vmem:[%s3 + $0x18] sm:$0xf]
      %v361 = vld [vmem:[%s3 + $0x1c] sm:$0xf]
      %v362 = vld [vmem:[%s3 + $0x20] sm:$0xf]
      %v363 = vld [vmem:[%s3 + $0x24] sm:$0xf]
      %v364 = vld [vmem:[%s3 + $0x28] sm:$0xf]
      %v365 = vld [vmem:[%s3 + $0x2c] sm:$0xf]
      %v366 = vld [vmem:[%s3 + $0x30] sm:$0xf]
      %v367 = vld [vmem:[%s3 + $0x34] sm:$0xf]
      %v368 = vld [vmem:[%s3 + $0x38] sm:$0xf]
      %v369 = vld [vmem:[%s3 + $0x3c] sm:$0xf]
      %v370 = vunpack.c.l.bf16 %v354
      %v371 = vunpack.c.l.bf16 %v355
      %v372 = vunpack.c.l.bf16 %v356
      %v373 = vunpack.c.l.bf16 %v357
      %v374 = vunpack.c.l.bf16 %v358
      %v375 = vunpack.c.l.bf16 %v359
      %v376 = vunpack.c.l.bf16 %v360
      %v377 = vunpack.c.l.bf16 %v361
      %v378 = vunpack.c.l.bf16 %v362
      %v379 = vunpack.c.l.bf16 %v363
      %v380 = vunpack.c.l.bf16 %v364
      %v381 = vunpack.c.l.bf16 %v365
      %v382 = vunpack.c.l.bf16 %v366
      %v383 = vunpack.c.l.bf16 %v367
      %v384 = vunpack.c.l.bf16 %v368
      %v385 = vunpack.c.l.bf16 %v369
      %v386 = vadd.f32 %v338, %v370
      %v387 = vadd.f32 %v339, %v371
      %v388 = vadd.f32 %v340, %v372
      %v389 = vadd.f32 %v341, %v373
      %v390 = vadd.f32 %v342, %v374
      %v391 = vadd.f32 %v343, %v375
      %v392 = vadd.f32 %v344, %v376
      %v393 = vadd.f32 %v345, %v377
      %v394 = vadd.f32 %v346, %v378
      %v395 = vadd.f32 %v347, %v379
      %v396 = vadd.f32 %v348, %v380
      %v397 = vadd.f32 %v349, %v381
      %v398 = vadd.f32 %v350, %v382
      %v399 = vadd.f32 %v351, %v383
      %v400 = vadd.f32 %v352, %v384
      %v401 = vadd.f32 %v353, %v385
      %402 = vst [vmem:[#allocation3] sm:$0xff] %v386
      %403 = vst [vmem:[#allocation3 + $0x8] sm:$0xff] %v387
      %404 = vst [vmem:[#allocation3 + $0x10] sm:$0xff] %v388
      %405 = vst [vmem:[#allocation3 + $0x18] sm:$0xff] %v389
      %406 = vst [vmem:[#allocation3 + $0x20] sm:$0xff] %v390
      %407 = vst [vmem:[#allocation3 + $0x28] sm:$0xff] %v391
      %408 = vst [vmem:[#allocation3 + $0x30] sm:$0xff] %v392
      %409 = vst [vmem:[#allocation3 + $0x38] sm:$0xff] %v393
      %410 = vst [vmem:[#allocation3 + $0x40] sm:$0xff] %v394
      %411 = vst [vmem:[#allocation3 + $0x48] sm:$0xff] %v395
      %412 = vst [vmem:[#allocation3 + $0x50] sm:$0xff] %v396
      %413 = vst [vmem:[#allocation3 + $0x58] sm:$0xff] %v397
      %414 = vst [vmem:[#allocation3 + $0x60] sm:$0xff] %v398
      %415 = vst [vmem:[#allocation3 + $0x68] sm:$0xff] %v399
      %416 = vst [vmem:[#allocation3 + $0x70] sm:$0xff] %v400
      %417 = vst [vmem:[#allocation3 + $0x78] sm:$0xff] %v401
    $region25: #{wide_block_forward.11} parent=1 // pred_fallthru
      _
    // Predicated region
    $region26: #{wide_block_forward.11} parent=1 // pred_check
      _
    $region27: #{wide_block_forward.11} parent=1 // pred_check_branch
      %419 = sbr.rel (0) target = $region29
    $region28: #{wide_block_forward.11} parent=1 // pred_region
      %s421 = ssub.s32 2048, 2048
      %422 = vsyncadd [#allocation4], %s421
      %s423 = sshll.u32 [#allocation3], 4
      %s424 = int_to_ptr.vmem [resolvable:$true] %s423
      %429 = dma.vmem_to_hbm [thread:$0]  %s424, 2048, %s4, [#allocation4], 128, 128, 8
    $region29: #{wide_block_forward.11} parent=1 // pred_fallthru
      _
    // Predicated region
    $region30: #{wide_block_forward.11} parent=1 // pred_check
      _
    $region31: #{wide_block_forward.11} parent=1 // pred_check_branch
      %431 = sbr.rel (0) target = $region33
    $region32: #{wide_block_forward.11} parent=1 // pred_region
      %432 = dma.done [#allocation4], 2048
    $region33: #{wide_block_forward.11} parent=1 // pred_fallthru
      _
    %433 = vsyncpa [#allocation4], 1

</llo_original>
